<compile_context>
chip_gen: v7x
topology: tpu7x:2x2x1
jax: 0.10.0
libtpu: 0.0.40
codegen_flags: <defaults>
</compile_context>

<pallas_src>
from functools import partial

import jax
import jax.numpy as jnp
from jax.experimental import pallas as pl
from jax.experimental.pallas import tpu as pltpu

BN_EPS = 1e-5
# Explicit scoped-VMEM budget: no-op on v6e/v7x defaults, a bump over v5e's
# 16 MiB default so larger K tiles do not trip the limit.
VMEM_LIMIT_BYTES = 32 * 1024 * 1024


def _bn_prelu(y, gamma, beta, alpha):
    """BatchNorm1d (training mode: batch stats, biased var) followed by PReLU."""
    mean = jnp.mean(y, axis=0, keepdims=True)
    var = jnp.mean((y - mean) ** 2, axis=0, keepdims=True)
    yb = (y - mean) * jax.lax.rsqrt(var + BN_EPS) * gamma + beta
    return jnp.where(yb >= 0, yb, alpha * yb)


def _spec(block_shape, index_map, buffer_count=None):
    """BlockSpec helper; optionally requests deeper input pipelining."""
    if buffer_count is None:
        return pl.BlockSpec(block_shape, index_map)
    return pl.BlockSpec(block_shape, index_map,
                        pipeline_mode=pl.Buffered(buffer_count))


# -----------------------------------------------------------------------------
# Kernel A: fused Linear -> BatchNorm1d -> PReLU (instance_fc).
# Grid = (N-tiles, K-tiles); K is the reduction (innermost, "arbitrary"), the
# N-tile axis is "parallel" (BN stats are per-feature over the batch, so
# splitting the feature dim is exact).  The f32 output block is the
# accumulator; a bf16 copy of inst is emitted for the GDN kernel.
# -----------------------------------------------------------------------------
def _fc_bn_prelu_kernel(x_ref, w_ref, b_ref, gamma_ref, beta_ref, alpha_ref,
                        o_ref, o_bf16_ref):
    k = pl.program_id(1)

    @pl.when(k == 0)
    def _():
        o_ref[...] = jnp.zeros_like(o_ref)

    o_ref[...] += jnp.dot(x_ref[...], w_ref[...],
                          preferred_element_type=jnp.float32)

    @pl.when(k == pl.num_programs(1) - 1)
    def _():
        y = _bn_prelu(o_ref[...] + b_ref[...],
                      gamma_ref[...], beta_ref[...], alpha_ref[0])
        o_ref[...] = y
        o_bf16_ref[...] = y.astype(jnp.bfloat16)


def fc_bn_prelu(x_bf16, p, *, tn=128, tk=2048):
    B, K = x_bf16.shape
    N = p["w"].shape[1]
    tk = min(tk, K)
    tn = min(tn, N)
    assert K % tk == 0 and N % tn == 0, (K, tk, N, tn)
    kt = K // tk
    deep = 3 if kt >= 3 else None
    cost = pl.CostEstimate(
        flops=2 * B * K * N,
        transcendentals=0,
        bytes_accessed=B * K * 2 + K * N * 2 + B * N * 6)
    return pl.pallas_call(
        _fc_bn_prelu_kernel,
        out_shape=(jax.ShapeDtypeStruct((B, N), jnp.float32),
                   jax.ShapeDtypeStruct((B, N), jnp.bfloat16)),
        grid_spec=pltpu.PrefetchScalarGridSpec(
            num_scalar_prefetch=0,
            grid=(N // tn, kt),
            in_specs=[
                _spec((B, tk), lambda n, k: (0, k), deep),            # x (bf16)
                _spec((tk, tn), lambda n, k: (k, n), deep),           # W (bf16)
                pl.BlockSpec((1, tn), lambda n, k: (0, n)),           # bias
                pl.BlockSpec((1, tn), lambda n, k: (0, n)),           # BN gamma
                pl.BlockSpec((1, tn), lambda n, k: (0, n)),           # BN beta
                pl.BlockSpec(memory_space=pltpu.MemorySpace.SMEM),    # PReLU slope
            ],
            out_specs=[pl.BlockSpec((B, tn), lambda n, k: (0, n)),
                       pl.BlockSpec((B, tn), lambda n, k: (0, n))],
        ),
        compiler_params=pltpu.CompilerParams(
            dimension_semantics=("parallel", "arbitrary"),
            vmem_limit_bytes=VMEM_LIMIT_BYTES),
        cost_estimate=cost,
    )(x_bf16, p["w"], p["b"], p["gamma"], p["beta"], p["alpha"])


# -----------------------------------------------------------------------------
# Kernel B: fused GDN = FC1 (tiled matmul + BN + PReLU) -> FC2 -> BN -> PReLU
#           -> softmax, in a single pallas_call.  Takes `inst` already in bf16
#           (no per-step cast inside the K loop).
# -----------------------------------------------------------------------------
def _gdn_kernel(inst_ref, w1_ref, b1_ref, g1_ref, be1_ref,
                w2_ref, b2_ref, g2_ref, be2_ref, a1_ref, a2_ref,
                inter_ref, prob_ref):
    k = pl.program_id(0)

    @pl.when(k == 0)
    def _():
        inter_ref[...] = jnp.zeros_like(inter_ref)

    inter_ref[...] += jnp.dot(inst_ref[...], w1_ref[...],
                              preferred_element_type=jnp.float32)

    @pl.when(k == pl.num_programs(0) - 1)
    def _():
        inter = _bn_prelu(inter_ref[...] + b1_ref[...],
                          g1_ref[...], be1_ref[...], a1_ref[0])
        inter_ref[...] = inter
        # fc2 -> BN -> PReLU -> softmax epilogue (tiny, N = groups)
        z = jnp.dot(inter.astype(jnp.bfloat16), w2_ref[...],
                    preferred_element_type=jnp.float32) + b2_ref[...]
        logits = _bn_prelu(z, g2_ref[...], be2_ref[...], a2_ref[0])
        m = jnp.max(logits, axis=1, keepdims=True)
        e = jnp.exp(logits - m)
        prob_ref[...] = e / jnp.sum(e, axis=1, keepdims=True)


def gdn_fused(inst_bf16, p1, p2, *, tk=512):
    B, K = inst_bf16.shape
    inter_dim = p1["w"].shape[1]
    G = p2["w"].shape[1]
    tk = min(tk, K)
    assert K % tk == 0, (K, tk)
    cost = pl.CostEstimate(
        flops=2 * B * K * inter_dim + 2 * B * inter_dim * G,
        transcendentals=B * G,
        bytes_accessed=(B * K * 2 + K * inter_dim * 2 + inter_dim * G * 2
                        + B * inter_dim * 4 + B * G * 4))
    return pl.pallas_call(
        _gdn_kernel,
        out_shape=(jax.ShapeDtypeStruct((B, inter_dim), jnp.float32),
                   jax.ShapeDtypeStruct((B, G), jnp.float32)),
        grid_spec=pltpu.PrefetchScalarGridSpec(
            num_scalar_prefetch=0,
            grid=(K // tk,),
            in_specs=[
                pl.BlockSpec((B, tk), lambda k: (0, k)),               # inst (bf16)
                pl.BlockSpec((tk, inter_dim), lambda k: (k, 0)),       # W1 (bf16)
                pl.BlockSpec((1, inter_dim), lambda k: (0, 0)),        # b1
                pl.BlockSpec((1, inter_dim), lambda k: (0, 0)),        # gamma1
                pl.BlockSpec((1, inter_dim), lambda k: (0, 0)),        # beta1
                pl.BlockSpec((inter_dim, G), lambda k: (0, 0)),        # W2 (bf16)
                pl.BlockSpec((1, G), lambda k: (0, 0)),                # b2
                pl.BlockSpec((1, G), lambda k: (0, 0)),                # gamma2
                pl.BlockSpec((1, G), lambda k: (0, 0)),                # beta2
                pl.BlockSpec(memory_space=pltpu.MemorySpace.SMEM),     # alpha1
                pl.BlockSpec(memory_space=pltpu.MemorySpace.SMEM),     # alpha2
            ],
            out_specs=[pl.BlockSpec((B, inter_dim), lambda k: (0, 0)),
                       pl.BlockSpec((B, G), lambda k: (0, 0))],
        ),
        compiler_params=pltpu.CompilerParams(
            dimension_semantics=("arbitrary",),
            vmem_limit_bytes=VMEM_LIMIT_BYTES),
        cost_estimate=cost,
    )(inst_bf16, p1["w"], p1["b"], p1["gamma"], p1["beta"],
      p2["w"], p2["b"], p2["gamma"], p2["beta"], p1["alpha"], p2["alpha"])


# -----------------------------------------------------------------------------
# Kernel C: group projections only (prob-independent):
#   v_all[g] = PReLU(BN(x @ W_g + b_g))     for all groups
# Weights are laid out contiguously as (G, K, D) so every DMA tile is one
# contiguous slab.  Grid = (G, D-tiles, K-tiles); K (reduction) is innermost
# "arbitrary", the G and D-tile axes are "parallel" (distinct output blocks).
# The output block is the accumulator, so x/weights are streamed exactly once.
# -----------------------------------------------------------------------------
def _group_project_kernel(x_ref, w_ref, b_ref, gamma_ref, beta_ref, alpha_ref,
                          v_ref):
    g = pl.program_id(0)
    k = pl.program_id(2)

    @pl.when(k == 0)
    def _():
        v_ref[...] = jnp.zeros_like(v_ref)

    v_ref[...] += jnp.dot(x_ref[...], w_ref[...],
                          preferred_element_type=jnp.float32)

    @pl.when(k == pl.num_programs(2) - 1)
    def _():
        v_ref[...] = _bn_prelu(v_ref[...] + b_ref[...],
                               gamma_ref[...], beta_ref[...], alpha_ref[g])


def group_project(x_bf16, w_all, b_all, gamma_all, beta_all, alpha_all, *,
                  td=128, tk=2048):
    B, K = x_bf16.shape
    G, _, D = w_all.shape
    tk = min(tk, K)
    td = min(td, D)
    assert K % tk == 0 and D % td == 0, (K, tk, D, td)
    kt = K // tk
    deep = 3 if kt >= 3 else None
    cost = pl.CostEstimate(
        flops=2 * B * K * D * G,
        transcendentals=0,
        bytes_accessed=G * K * D * 2 + B * K * 2 + G * B * D * 4)
    return pl.pallas_call(
        _group_project_kernel,
        out_shape=jax.ShapeDtypeStruct((G, B, D), jnp.float32),
        grid_spec=pltpu.PrefetchScalarGridSpec(
            num_scalar_prefetch=0,
            grid=(G, D // td, kt),
            in_specs=[
                _spec((B, tk), lambda g, d, k: (0, k), deep),            # x (bf16)
                _spec((None, tk, td), lambda g, d, k: (g, k, d), deep),  # W (G,K,D) bf16
                pl.BlockSpec((None, 1, td), lambda g, d, k: (g, 0, d)),  # bias
                pl.BlockSpec((None, 1, td), lambda g, d, k: (g, 0, d)),  # gamma
                pl.BlockSpec((None, 1, td), lambda g, d, k: (g, 0, d)),  # beta
                pl.BlockSpec(memory_space=pltpu.MemorySpace.SMEM),       # alphas (G,)
            ],
            out_specs=pl.BlockSpec((None, B, td), lambda g, d, k: (g, 0, d)),
        ),
        compiler_params=pltpu.CompilerParams(
            dimension_semantics=("parallel", "parallel", "arbitrary"),
            vmem_limit_bytes=VMEM_LIMIT_BYTES),
        cost_estimate=cost,
    )(x_bf16, w_all, b_all, gamma_all, beta_all, alpha_all)


# -----------------------------------------------------------------------------
# Kernel D (tiny): probability-weighted ensemble + residual
#   final = inst + sum_g prob[:, g] * v_all[g]
# -----------------------------------------------------------------------------
def _combine_kernel(prob_ref, inst_ref, v_ref, final_ref):
    acc = inst_ref[...]
    for g in range(v_ref.shape[0]):        # groups is small & static
        acc = acc + prob_ref[:, g:g + 1] * v_ref[g]
    final_ref[...] = acc


def combine_groups(prob, inst, v_all):
    G, B, D = v_all.shape
    cost = pl.CostEstimate(
        flops=2 * G * B * D,
        transcendentals=0,
        bytes_accessed=G * B * D * 4 + B * D * 8 + B * G * 4)
    return pl.pallas_call(
        _combine_kernel,
        out_shape=jax.ShapeDtypeStruct((B, D), jnp.float32),
        grid_spec=pltpu.PrefetchScalarGridSpec(
            num_scalar_prefetch=0,
            grid=(1,),
            in_specs=[
                pl.BlockSpec((B, G), lambda i: (0, 0)),         # prob
                pl.BlockSpec((B, D), lambda i: (0, 0)),         # inst (residual)
                pl.BlockSpec((G, B, D), lambda i: (0, 0, 0)),   # v_all
            ],
            out_specs=pl.BlockSpec((B, D), lambda i: (0, 0)),
        ),
        compiler_params=pltpu.CompilerParams(
            vmem_limit_bytes=VMEM_LIMIT_BYTES),
        cost_estimate=cost,
    )(prob, inst, v_all)


# -----------------------------------------------------------------------------
# Parameter construction (matches the module's init_weight):
#   Linear: xavier_normal weight (stored (in, out), bf16), zero bias
#   BatchNorm1d: gamma=1, beta=0;  PReLU: single slope = 0.25
# -----------------------------------------------------------------------------
def make_fc_params(key, in_f, out_f):
    std = (2.0 / (in_f + out_f)) ** 0.5
    w = (jax.random.normal(key, (in_f, out_f), jnp.float32) * std
         ).astype(jnp.bfloat16)
    return {
        "w": w,
        "b": jnp.zeros((1, out_f), jnp.float32),
        "gamma": jnp.ones((1, out_f), jnp.float32),
        "beta": jnp.zeros((1, out_f), jnp.float32),
        "alpha": jnp.full((1,), 0.25, jnp.float32),
    }


def make_groupface_params(key, in_dim, feature_dim, intermediate_dim, groups):
    keys = jax.random.split(key, 3 + groups)
    gps = [make_fc_params(keys[3 + g], in_dim, feature_dim)
           for g in range(groups)]
    return {
        "instance_fc": make_fc_params(keys[0], in_dim, feature_dim),
        "gdn_fc1": make_fc_params(keys[1], feature_dim, intermediate_dim),
        "gdn_fc2": make_fc_params(keys[2], intermediate_dim, groups),
        # group_fc weights stacked contiguously as (G, K, D) for the fused kernel.
        "group_w_all": jnp.stack([p["w"] for p in gps], axis=0),
        "group_b_all": jnp.stack([p["b"] for p in gps], axis=0),
        "group_gamma_all": jnp.stack([p["gamma"] for p in gps], axis=0),
        "group_beta_all": jnp.stack([p["beta"] for p in gps], axis=0),
        "group_alpha_all": jnp.concatenate([p["alpha"] for p in gps], axis=0),
    }


# -----------------------------------------------------------------------------
# Full forward (mode='S').  The group projection (heaviest weight stream) has
# no data dependency on the instance_fc/GDN chain, so it is issued first; only
# the tiny combine kernel waits on prob/inst.
# -----------------------------------------------------------------------------
@partial(jax.jit, static_argnames=("groups",))
def groupface_forward(x_bf16, params, *, groups):
    v_all = group_project(x_bf16, params["group_w_all"], params["group_b_all"],
                          params["group_gamma_all"], params["group_beta_all"],
                          params["group_alpha_all"])
    inst, inst_bf16 = fc_bn_prelu(x_bf16, params["instance_fc"])
    inter, prob = gdn_fused(inst_bf16, params["gdn_fc1"], params["gdn_fc2"])
    final = combine_groups(prob, inst, v_all)
    # group label selection (tiny glue, plain JAX)
    E = jnp.mean(prob, axis=0)
    u = (prob - E[None, :]) / groups + 1.0 / groups
    label = jnp.argmax(u, axis=1).astype(jnp.int32)
    return inter, final, prob, label


# -----------------------------------------------------------------------------
# Pure-JAX reference (same bf16 matmul inputs, f32 accumulation)
# -----------------------------------------------------------------------------
def _fc_ref(x, w_bf16, b, gamma, beta, alpha):
    y = jnp.dot(x.astype(jnp.bfloat16), w_bf16,
                preferred_element_type=jnp.float32) + b
    return _bn_prelu(y, gamma, beta, alpha[0])


def _forward_ref(x_bf16, params, groups):
    p_i, p_1, p_2 = params["instance_fc"], params["gdn_fc1"], params["gdn_fc2"]
    inst = _fc_ref(x_bf16, p_i["w"], p_i["b"], p_i["gamma"], p_i["beta"], p_i["alpha"])
    inter = _fc_ref(inst, p_1["w"], p_1["b"], p_1["gamma"], p_1["beta"], p_1["alpha"])
    logits = _fc_ref(inter, p_2["w"], p_2["b"], p_2["gamma"], p_2["beta"], p_2["alpha"])
    prob = jax.nn.softmax(logits, axis=1)
    final = inst
    for g in range(groups):
        v = _fc_ref(x_bf16, params["group_w_all"][g], params["group_b_all"][g],
                    params["group_gamma_all"][g], params["group_beta_all"][g],
                    params["group_alpha_all"][g:g + 1])
        final = final + prob[:, g:g + 1] * v
    E = jnp.mean(prob, axis=0)
    u = (prob - E[None, :]) / groups + 1.0 / groups
    label = jnp.argmax(u, axis=1).astype(jnp.int32)
    return inter, final, prob, label


if __name__ == "__main__":
    # Small shapes (scaled-down analogues of 4096 -> 512 / inter 256 / 4 groups)
    B, IN_DIM, FEATURE_DIM, INTER_DIM, GROUPS = 8, 1024, 256, 128, 4

    key = jax.random.PRNGKey(0)
    kx, kp = jax.random.split(key)
    x = jax.random.normal(kx, (B, IN_DIM), jnp.float32)   # post-backbone features
    x_bf16 = x.astype(jnp.bfloat16)                       # bf16 MXU operands
    params = make_groupface_params(kp, IN_DIM, FEATURE_DIM, INTER_DIM, GROUPS)

    inter, final, prob, label = jax.block_until_ready(
        groupface_forward(x_bf16, params, groups=GROUPS))

    # correctness check against plain-JAX reference
    inter_r, final_r, prob_r, label_r = _forward_ref(x_bf16, params, GROUPS)
    assert inter.shape == (B, INTER_DIM)
    assert final.shape == (B, FEATURE_DIM)
    assert prob.shape == (B, GROUPS)
    assert label.shape == (B,)
    assert jnp.allclose(inter, inter_r, atol=2e-3, rtol=2e-3)
    assert jnp.allclose(final, final_r, atol=2e-3, rtol=2e-3)
    assert jnp.allclose(prob, prob_r, atol=2e-3, rtol=2e-3)
    assert jnp.array_equal(label, label_r)

    print("KERNEL_OK")
</pallas_src>

<mosaic_0001>
module attributes {stable_mosaic.version = 11 : i64} {
  func.func @_group_project_kernel(%arg0: i32, %arg1: i32, %arg2: i32, %arg3: memref<8x1024xbf16, #tpu.memory_space<vmem>>, %arg4: memref<1x1024x128xbf16, #tpu.memory_space<vmem>>, %arg5: memref<1x1x128xf32, #tpu.memory_space<vmem>>, %arg6: memref<1x1x128xf32, #tpu.memory_space<vmem>>, %arg7: memref<1x1x128xf32, #tpu.memory_space<vmem>>, %arg8: memref<4xf32, #tpu.memory_space<smem>>, %arg9: memref<1x8x128xf32, #tpu.memory_space<vmem>>) attributes {dimension_semantics = [#tpu.dimension_semantics<parallel>, #tpu.dimension_semantics<parallel>, #tpu.dimension_semantics<arbitrary>], iteration_bounds = array<i64: 4, 2, 1>, scalar_prefetch = 0 : i64, scratch_operands = 0 : i64, tpu.core_type = #tpu.core_type<tc>, window_params = [{transform_indices = @transform_0, window_bounds = array<i64: 8, 1024>}, {transform_indices = @transform_1, window_bounds = array<i64: 1, 1024, 128>}, {transform_indices = @transform_2, window_bounds = array<i64: 1, 1, 128>}, {transform_indices = @transform_3, window_bounds = array<i64: 1, 1, 128>}, {transform_indices = @transform_4, window_bounds = array<i64: 1, 1, 128>}, {transform_indices = @transform_5, window_bounds = array<i64: 4>}, {transform_indices = @transform_6, window_bounds = array<i64: 1, 8, 128>}]} {
    %c0_i32 = arith.constant 0 : i32
    %0 = arith.cmpi eq, %arg2, %c0_i32 : i32
    %1 = arith.extui %0 : i1 to i32
    %c0_i32_0 = arith.constant 0 : i32
    %2 = arith.cmpi ne, %1, %c0_i32_0 : i32
    scf.if %2 {
      %cst_13 = arith.constant 0.000000e+00 : f32
      %16 = vector.broadcast %cst_13 : f32 to vector<8x128xf32>
      %c0_14 = arith.constant 0 : index
      %c0_15 = arith.constant 0 : index
      %c0_16 = arith.constant 0 : index
      %17 = vector.load %arg9[%c0_14, %c0_15, %c0_16] : memref<1x8x128xf32, #tpu.memory_space<vmem>>, vector<1x8x128xf32>
      %18 = vector.shape_cast %17 : vector<1x8x128xf32> to vector<8x128xf32>
      %19 = vector.shape_cast %16 : vector<8x128xf32> to vector<1x8x128xf32>
      tpu.vector_store %arg9[%c0_14, %c0_15, %c0_16], %19 {strides = array<i32>} : memref<1x8x128xf32, #tpu.memory_space<vmem>>, vector<1x8x128xf32>,
    } else {
    }
    %c0 = arith.constant 0 : index
    %c0_1 = arith.constant 0 : index
    %c0_2 = arith.constant 0 : index
    %3 = vector.load %arg9[%c0, %c0_1, %c0_2] : memref<1x8x128xf32, #tpu.memory_space<vmem>>, vector<1x8x128xf32>
    %4 = vector.shape_cast %3 : vector<1x8x128xf32> to vector<8x128xf32>
    %c0_3 = arith.constant 0 : index
    %c0_4 = arith.constant 0 : index
    %5 = vector.load %arg3[%c0_3, %c0_4] : memref<8x1024xbf16, #tpu.memory_space<vmem>>, vector<8x1024xbf16>
    %c0_5 = arith.constant 0 : index
    %c0_6 = arith.constant 0 : index
    %c0_7 = arith.constant 0 : index
    %6 = vector.load %arg4[%c0_5, %c0_6, %c0_7] : memref<1x1024x128xbf16, #tpu.memory_space<vmem>>, vector<1x1024x128xbf16>
    %7 = vector.shape_cast %6 : vector<1x1024x128xbf16> to vector<1024x128xbf16>
    %cst = arith.constant dense<0.000000e+00> : vector<8x128xf32>
    %8 = tpu.matmul %5, %7, %cst {dimension_numbers = #tpu.dot_dimension_numbers<[1], [0], [0], [1], [0, 0, 1, 1], [], []>} : vector<8x1024xbf16>, vector<1024x128xbf16>, vector<8x128xf32> -> vector<8x128xf32>
    %9 = arith.addf %4, %8 : vector<8x128xf32>
    %c0_8 = arith.constant 0 : index
    %c0_9 = arith.constant 0 : index
    %c0_10 = arith.constant 0 : index
    %10 = vector.load %arg9[%c0_8, %c0_9, %c0_10] : memref<1x8x128xf32, #tpu.memory_space<vmem>>, vector<1x8x128xf32>
    %11 = vector.shape_cast %10 : vector<1x8x128xf32> to vector<8x128xf32>
    %12 = vector.shape_cast %9 : vector<8x128xf32> to vector<1x8x128xf32>
    tpu.vector_store %arg9[%c0_8, %c0_9, %c0_10], %12 {strides = array<i32>} : memref<1x8x128xf32, #tpu.memory_space<vmem>>, vector<1x8x128xf32>,
    %c0_i32_11 = arith.constant 0 : i32
    %13 = arith.cmpi eq, %arg2, %c0_i32_11 : i32
    %14 = arith.extui %13 : i1 to i32
    %c0_i32_12 = arith.constant 0 : i32
    %15 = arith.cmpi ne, %14, %c0_i32_12 : i32
    scf.if %15 {
      %c0_13 = arith.constant 0 : index
      %c0_14 = arith.constant 0 : index
      %c0_15 = arith.constant 0 : index
      %16 = vector.load %arg9[%c0_13, %c0_14, %c0_15] : memref<1x8x128xf32, #tpu.memory_space<vmem>>, vector<1x8x128xf32>
      %17 = vector.shape_cast %16 : vector<1x8x128xf32> to vector<8x128xf32>
      %c0_16 = arith.constant 0 : index
      %c0_17 = arith.constant 0 : index
      %c0_18 = arith.constant 0 : index
      %18 = vector.load %arg5[%c0_16, %c0_17, %c0_18] : memref<1x1x128xf32, #tpu.memory_space<vmem>>, vector<1x1x128xf32>
      %19 = vector.shape_cast %18 : vector<1x1x128xf32> to vector<1x128xf32>
      %20 = vector.broadcast %19 : vector<1x128xf32> to vector<8x128xf32>
      %21 = arith.addf %17, %20 : vector<8x128xf32>
      %c0_19 = arith.constant 0 : index
      %c0_20 = arith.constant 0 : index
      %c0_21 = arith.constant 0 : index
      %22 = vector.load %arg6[%c0_19, %c0_20, %c0_21] : memref<1x1x128xf32, #tpu.memory_space<vmem>>, vector<1x1x128xf32>
      %23 = vector.shape_cast %22 : vector<1x1x128xf32> to vector<1x128xf32>
      %c0_22 = arith.constant 0 : index
      %c0_23 = arith.constant 0 : index
      %c0_24 = arith.constant 0 : index
      %24 = vector.load %arg7[%c0_22, %c0_23, %c0_24] : memref<1x1x128xf32, #tpu.memory_space<vmem>>, vector<1x1x128xf32>
      %25 = vector.shape_cast %24 : vector<1x1x128xf32> to vector<1x128xf32>
      %26 = arith.index_cast %arg0 : i32 to index
      %27 = memref.load %arg8[%26] : memref<4xf32, #tpu.memory_space<smem>>
      %cst_25 = arith.constant dense<0.000000e+00> : vector<128xf32>
      %28 = vector.multi_reduction <add>, %21, %cst_25 [0] : vector<8x128xf32> to vector<128xf32>
      %29 = vector.shape_cast %28 : vector<128xf32> to vector<1x128xf32>
      %cst_26 = arith.constant 8.000000e+00 : f32
      %30 = vector.broadcast %cst_26 : f32 to vector<1x128xf32>
      %31 = arith.divf %29, %30 : vector<1x128xf32>
      %32 = vector.broadcast %31 : vector<1x128xf32> to vector<8x128xf32>
      %33 = arith.subf %21, %32 : vector<8x128xf32>
      %34 = arith.mulf %33, %33 : vector<8x128xf32>
      %cst_27 = arith.constant dense<0.000000e+00> : vector<128xf32>
      %35 = vector.multi_reduction <add>, %34, %cst_27 [0] : vector<8x128xf32> to vector<128xf32>
      %36 = vector.shape_cast %35 : vector<128xf32> to vector<1x128xf32>
      %cst_28 = arith.constant 8.000000e+00 : f32
      %37 = vector.broadcast %cst_28 : f32 to vector<1x128xf32>
      %38 = arith.divf %36, %37 : vector<1x128xf32>
      %39 = vector.broadcast %31 : vector<1x128xf32> to vector<8x128xf32>
      %40 = arith.subf %21, %39 : vector<8x128xf32>
      %cst_29 = arith.constant 9.99999974E-6 : f32
      %41 = vector.broadcast %cst_29 : f32 to vector<1x128xf32>
      %42 = arith.addf %38, %41 : vector<1x128xf32>
      %43 = math.rsqrt %42 : vector<1x128xf32>
      %44 = vector.broadcast %43 : vector<1x128xf32> to vector<8x128xf32>
      %45 = arith.mulf %40, %44 : vector<8x128xf32>
      %46 = vector.broadcast %23 : vector<1x128xf32> to vector<8x128xf32>
      %47 = arith.mulf %45, %46 : vector<8x128xf32>
      %48 = vector.broadcast %25 : vector<1x128xf32> to vector<8x128xf32>
      %49 = arith.addf %47, %48 : vector<8x128xf32>
      %cst_30 = arith.constant 0.000000e+00 : f32
      %50 = vector.broadcast %cst_30 : f32 to vector<8x128xf32>
      %51 = arith.cmpf oge, %49, %50 : vector<8x128xf32>
      %52 = vector.broadcast %27 : f32 to vector<8x128xf32>
      %53 = arith.mulf %52, %49 : vector<8x128xf32>
      %54 = arith.select %51, %49, %53 : vector<8x128xi1>, vector<8x128xf32>
      %c0_31 = arith.constant 0 : index
      %c0_32 = arith.constant 0 : index
      %c0_33 = arith.constant 0 : index
      %55 = vector.load %arg9[%c0_31, %c0_32, %c0_33] : memref<1x8x128xf32, #tpu.memory_space<vmem>>, vector<1x8x128xf32>
      %56 = vector.shape_cast %55 : vector<1x8x128xf32> to vector<8x128xf32>
      %57 = vector.shape_cast %54 : vector<8x128xf32> to vector<1x8x128xf32>
      tpu.vector_store %arg9[%c0_31, %c0_32, %c0_33], %57 {strides = array<i32>} : memref<1x8x128xf32, #tpu.memory_space<vmem>>, vector<1x8x128xf32>,
    } else {
    }
    return
  }
  func.func @transform_0(%arg0: i32, %arg1: i32, %arg2: i32) -> (i32, i32) {
    %c0_i32 = arith.constant 0 : i32
    %c0_i32_0 = arith.constant 0 : i32
    return %c0_i32, %arg2 : i32, i32
  }
  func.func @transform_1(%arg0: i32, %arg1: i32, %arg2: i32) -> (i32, i32, i32) {
    %c0_i32 = arith.constant 0 : i32
    return %arg0, %arg2, %arg1 : i32, i32, i32
  }
  func.func @transform_2(%arg0: i32, %arg1: i32, %arg2: i32) -> (i32, i32, i32) {
    %c0_i32 = arith.constant 0 : i32
    %c0_i32_0 = arith.constant 0 : i32
    return %arg0, %c0_i32, %arg1 : i32, i32, i32
  }
  func.func @transform_3(%arg0: i32, %arg1: i32, %arg2: i32) -> (i32, i32, i32) {
    %c0_i32 = arith.constant 0 : i32
    %c0_i32_0 = arith.constant 0 : i32
    return %arg0, %c0_i32, %arg1 : i32, i32, i32
  }
  func.func @transform_4(%arg0: i32, %arg1: i32, %arg2: i32) -> (i32, i32, i32) {
    %c0_i32 = arith.constant 0 : i32
    %c0_i32_0 = arith.constant 0 : i32
    return %arg0, %c0_i32, %arg1 : i32, i32, i32
  }
  func.func @transform_5(%arg0: i32, %arg1: i32, %arg2: i32) -> i32 {
    %c0_i32 = arith.constant 0 : i32
    %c0_i32_0 = arith.constant 0 : i32
    return %c0_i32 : i32
  }
  func.func @transform_6(%arg0: i32, %arg1: i32, %arg2: i32) -> (i32, i32, i32) {
    %c0_i32 = arith.constant 0 : i32
    %c0_i32_0 = arith.constant 0 : i32
    return %arg0, %c0_i32, %arg1 : i32, i32, i32
  }
}

module attributes {stable_mosaic.version = 11 : i64} {
  func.func @_fc_bn_prelu_kernel(%arg0: i32, %arg1: i32, %arg2: memref<8x1024xbf16, #tpu.memory_space<vmem>>, %arg3: memref<1024x128xbf16, #tpu.memory_space<vmem>>, %arg4: memref<1x128xf32, #tpu.memory_space<vmem>>, %arg5: memref<1x128xf32, #tpu.memory_space<vmem>>, %arg6: memref<1x128xf32, #tpu.memory_space<vmem>>, %arg7: memref<1xf32, #tpu.memory_space<smem>>, %arg8: memref<8x128xf32, #tpu.memory_space<vmem>>, %arg9: memref<8x128xbf16, #tpu.memory_space<vmem>>) attributes {dimension_semantics = [#tpu.dimension_semantics<parallel>, #tpu.dimension_semantics<arbitrary>], iteration_bounds = array<i64: 2, 1>, scalar_prefetch = 0 : i64, scratch_operands = 0 : i64, tpu.core_type = #tpu.core_type<tc>, window_params = [{transform_indices = @transform_0, window_bounds = array<i64: 8, 1024>}, {transform_indices = @transform_1, window_bounds = array<i64: 1024, 128>}, {transform_indices = @transform_2, window_bounds = array<i64: 1, 128>}, {transform_indices = @transform_3, window_bounds = array<i64: 1, 128>}, {transform_indices = @transform_4, window_bounds = array<i64: 1, 128>}, {transform_indices = @transform_5, window_bounds = array<i64: 1>}, {transform_indices = @transform_6, window_bounds = array<i64: 8, 128>}, {transform_indices = @transform_7, window_bounds = array<i64: 8, 128>}]} {
    %c0_i32 = arith.constant 0 : i32
    %0 = arith.cmpi eq, %arg1, %c0_i32 : i32
    %1 = arith.extui %0 : i1 to i32
    %c0_i32_0 = arith.constant 0 : i32
    %2 = arith.cmpi ne, %1, %c0_i32_0 : i32
    scf.if %2 {
      %cst_10 = arith.constant 0.000000e+00 : f32
      %12 = vector.broadcast %cst_10 : f32 to vector<8x128xf32>
      %c0_11 = arith.constant 0 : index
      %c0_12 = arith.constant 0 : index
      %13 = vector.load %arg8[%c0_11, %c0_12] : memref<8x128xf32, #tpu.memory_space<vmem>>, vector<8x128xf32>
      tpu.vector_store %arg8[%c0_11, %c0_12], %12 {strides = array<i32>} : memref<8x128xf32, #tpu.memory_space<vmem>>, vector<8x128xf32>,
    } else {
    }
    %c0 = arith.constant 0 : index
    %c0_1 = arith.constant 0 : index
    %3 = vector.load %arg8[%c0, %c0_1] : memref<8x128xf32, #tpu.memory_space<vmem>>, vector<8x128xf32>
    %c0_2 = arith.constant 0 : index
    %c0_3 = arith.constant 0 : index
    %4 = vector.load %arg2[%c0_2, %c0_3] : memref<8x1024xbf16, #tpu.memory_space<vmem>>, vector<8x1024xbf16>
    %c0_4 = arith.constant 0 : index
    %c0_5 = arith.constant 0 : index
    %5 = vector.load %arg3[%c0_4, %c0_5] : memref<1024x128xbf16, #tpu.memory_space<vmem>>, vector<1024x128xbf16>
    %cst = arith.constant dense<0.000000e+00> : vector<8x128xf32>
    %6 = tpu.matmul %4, %5, %cst {dimension_numbers = #tpu.dot_dimension_numbers<[1], [0], [0], [1], [0, 0, 1, 1], [], []>} : vector<8x1024xbf16>, vector<1024x128xbf16>, vector<8x128xf32> -> vector<8x128xf32>
    %7 = arith.addf %3, %6 : vector<8x128xf32>
    %c0_6 = arith.constant 0 : index
    %c0_7 = arith.constant 0 : index
    %8 = vector.load %arg8[%c0_6, %c0_7] : memref<8x128xf32, #tpu.memory_space<vmem>>, vector<8x128xf32>
    tpu.vector_store %arg8[%c0_6, %c0_7], %7 {strides = array<i32>} : memref<8x128xf32, #tpu.memory_space<vmem>>, vector<8x128xf32>,
    %c0_i32_8 = arith.constant 0 : i32
    %9 = arith.cmpi eq, %arg1, %c0_i32_8 : i32
    %10 = arith.extui %9 : i1 to i32
    %c0_i32_9 = arith.constant 0 : i32
    %11 = arith.cmpi ne, %10, %c0_i32_9 : i32
    scf.if %11 {
      %c0_10 = arith.constant 0 : index
      %c0_11 = arith.constant 0 : index
      %12 = vector.load %arg8[%c0_10, %c0_11] : memref<8x128xf32, #tpu.memory_space<vmem>>, vector<8x128xf32>
      %c0_12 = arith.constant 0 : index
      %c0_13 = arith.constant 0 : index
      %13 = vector.load %arg4[%c0_12, %c0_13] : memref<1x128xf32, #tpu.memory_space<vmem>>, vector<1x128xf32>
      %14 = vector.broadcast %13 : vector<1x128xf32> to vector<8x128xf32>
      %15 = arith.addf %12, %14 : vector<8x128xf32>
      %c0_14 = arith.constant 0 : index
      %c0_15 = arith.constant 0 : index
      %16 = vector.load %arg5[%c0_14, %c0_15] : memref<1x128xf32, #tpu.memory_space<vmem>>, vector<1x128xf32>
      %c0_16 = arith.constant 0 : index
      %c0_17 = arith.constant 0 : index
      %17 = vector.load %arg6[%c0_16, %c0_17] : memref<1x128xf32, #tpu.memory_space<vmem>>, vector<1x128xf32>
      %c0_18 = arith.constant 0 : index
      %18 = memref.load %arg7[%c0_18] : memref<1xf32, #tpu.memory_space<smem>>
      %cst_19 = arith.constant dense<0.000000e+00> : vector<128xf32>
      %19 = vector.multi_reduction <add>, %15, %cst_19 [0] : vector<8x128xf32> to vector<128xf32>
      %20 = vector.shape_cast %19 : vector<128xf32> to vector<1x128xf32>
      %cst_20 = arith.constant 8.000000e+00 : f32
      %21 = vector.broadcast %cst_20 : f32 to vector<1x128xf32>
      %22 = arith.divf %20, %21 : vector<1x128xf32>
      %23 = vector.broadcast %22 : vector<1x128xf32> to vector<8x128xf32>
      %24 = arith.subf %15, %23 : vector<8x128xf32>
      %25 = arith.mulf %24, %24 : vector<8x128xf32>
      %cst_21 = arith.constant dense<0.000000e+00> : vector<128xf32>
      %26 = vector.multi_reduction <add>, %25, %cst_21 [0] : vector<8x128xf32> to vector<128xf32>
      %27 = vector.shape_cast %26 : vector<128xf32> to vector<1x128xf32>
      %cst_22 = arith.constant 8.000000e+00 : f32
      %28 = vector.broadcast %cst_22 : f32 to vector<1x128xf32>
      %29 = arith.divf %27, %28 : vector<1x128xf32>
      %30 = vector.broadcast %22 : vector<1x128xf32> to vector<8x128xf32>
      %31 = arith.subf %15, %30 : vector<8x128xf32>
      %cst_23 = arith.constant 9.99999974E-6 : f32
      %32 = vector.broadcast %cst_23 : f32 to vector<1x128xf32>
      %33 = arith.addf %29, %32 : vector<1x128xf32>
      %34 = math.rsqrt %33 : vector<1x128xf32>
      %35 = vector.broadcast %34 : vector<1x128xf32> to vector<8x128xf32>
      %36 = arith.mulf %31, %35 : vector<8x128xf32>
      %37 = vector.broadcast %16 : vector<1x128xf32> to vector<8x128xf32>
      %38 = arith.mulf %36, %37 : vector<8x128xf32>
      %39 = vector.broadcast %17 : vector<1x128xf32> to vector<8x128xf32>
      %40 = arith.addf %38, %39 : vector<8x128xf32>
      %cst_24 = arith.constant 0.000000e+00 : f32
      %41 = vector.broadcast %cst_24 : f32 to vector<8x128xf32>
      %42 = arith.cmpf oge, %40, %41 : vector<8x128xf32>
      %43 = vector.broadcast %18 : f32 to vector<8x128xf32>
      %44 = arith.mulf %43, %40 : vector<8x128xf32>
      %45 = arith.select %42, %40, %44 : vector<8x128xi1>, vector<8x128xf32>
      %c0_25 = arith.constant 0 : index
      %c0_26 = arith.constant 0 : index
      %46 = vector.load %arg8[%c0_25, %c0_26] : memref<8x128xf32, #tpu.memory_space<vmem>>, vector<8x128xf32>
      tpu.vector_store %arg8[%c0_25, %c0_26], %45 {strides = array<i32>} : memref<8x128xf32, #tpu.memory_space<vmem>>, vector<8x128xf32>,
      %47 = arith.truncf %45 : vector<8x128xf32> to vector<8x128xbf16>
      %c0_27 = arith.constant 0 : index
      %c0_28 = arith.constant 0 : index
      %48 = vector.load %arg9[%c0_27, %c0_28] : memref<8x128xbf16, #tpu.memory_space<vmem>>, vector<8x128xbf16>
      tpu.vector_store %arg9[%c0_27, %c0_28], %47 {strides = array<i32>} : memref<8x128xbf16, #tpu.memory_space<vmem>>, vector<8x128xbf16>,
    } else {
    }
    return
  }
  func.func @transform_0(%arg0: i32, %arg1: i32) -> (i32, i32) {
    %c0_i32 = arith.constant 0 : i32
    %c0_i32_0 = arith.constant 0 : i32
    return %c0_i32, %arg1 : i32, i32
  }
  func.func @transform_1(%arg0: i32, %arg1: i32) -> (i32, i32) {
    %c0_i32 = arith.constant 0 : i32
    return %arg1, %arg0 : i32, i32
  }
  func.func @transform_2(%arg0: i32, %arg1: i32) -> (i32, i32) {
    %c0_i32 = arith.constant 0 : i32
    %c0_i32_0 = arith.constant 0 : i32
    return %c0_i32, %arg0 : i32, i32
  }
  func.func @transform_3(%arg0: i32, %arg1: i32) -> (i32, i32) {
    %c0_i32 = arith.constant 0 : i32
    %c0_i32_0 = arith.constant 0 : i32
    return %c0_i32, %arg0 : i32, i32
  }
  func.func @transform_4(%arg0: i32, %arg1: i32) -> (i32, i32) {
    %c0_i32 = arith.constant 0 : i32
    %c0_i32_0 = arith.constant 0 : i32
    return %c0_i32, %arg0 : i32, i32
  }
  func.func @transform_5(%arg0: i32, %arg1: i32) -> i32 {
    %c0_i32 = arith.constant 0 : i32
    %c0_i32_0 = arith.constant 0 : i32
    return %c0_i32 : i32
  }
  func.func @transform_6(%arg0: i32, %arg1: i32) -> (i32, i32) {
    %c0_i32 = arith.constant 0 : i32
    %c0_i32_0 = arith.constant 0 : i32
    return %c0_i32, %arg0 : i32, i32
  }
  func.func @transform_7(%arg0: i32, %arg1: i32) -> (i32, i32) {
    %c0_i32 = arith.constant 0 : i32
    %c0_i32_0 = arith.constant 0 : i32
    return %c0_i32, %arg0 : i32, i32
  }
}

module attributes {stable_mosaic.version = 11 : i64} {
  func.func @_gdn_kernel(%arg0: i32, %arg1: memref<8x256xbf16, #tpu.memory_space<vmem>>, %arg2: memref<256x128xbf16, #tpu.memory_space<vmem>>, %arg3: memref<1x128xf32, #tpu.memory_space<vmem>>, %arg4: memref<1x128xf32, #tpu.memory_space<vmem>>, %arg5: memref<1x128xf32, #tpu.memory_space<vmem>>, %arg6: memref<128x4xbf16, #tpu.memory_space<vmem>>, %arg7: memref<1x4xf32, #tpu.memory_space<vmem>>, %arg8: memref<1x4xf32, #tpu.memory_space<vmem>>, %arg9: memref<1x4xf32, #tpu.memory_space<vmem>>, %arg10: memref<1xf32, #tpu.memory_space<smem>>, %arg11: memref<1xf32, #tpu.memory_space<smem>>, %arg12: memref<8x128xf32, #tpu.memory_space<vmem>>, %arg13: memref<8x4xf32, #tpu.memory_space<vmem>>) attributes {dimension_semantics = [#tpu.dimension_semantics<arbitrary>], iteration_bounds = array<i64: 1>, scalar_prefetch = 0 : i64, scratch_operands = 0 : i64, tpu.core_type = #tpu.core_type<tc>, window_params = [{transform_indices = @transform_0, window_bounds = array<i64: 8, 256>}, {transform_indices = @transform_1, window_bounds = array<i64: 256, 128>}, {pipeline_mode = #tpu.pipeline_mode<synchronous>, transform_indices = @transform_2, window_bounds = array<i64: 1, 128>}, {pipeline_mode = #tpu.pipeline_mode<synchronous>, transform_indices = @transform_3, window_bounds = array<i64: 1, 128>}, {pipeline_mode = #tpu.pipeline_mode<synchronous>, transform_indices = @transform_4, window_bounds = array<i64: 1, 128>}, {pipeline_mode = #tpu.pipeline_mode<synchronous>, transform_indices = @transform_5, window_bounds = array<i64: 128, 4>}, {pipeline_mode = #tpu.pipeline_mode<synchronous>, transform_indices = @transform_6, window_bounds = array<i64: 1, 4>}, {pipeline_mode = #tpu.pipeline_mode<synchronous>, transform_indices = @transform_7, window_bounds = array<i64: 1, 4>}, {pipeline_mode = #tpu.pipeline_mode<synchronous>, transform_indices = @transform_8, window_bounds = array<i64: 1, 4>}, {transform_indices = @transform_9, window_bounds = array<i64: 1>}, {transform_indices = @transform_10, window_bounds = array<i64: 1>}, {pipeline_mode = #tpu.pipeline_mode<synchronous>, transform_indices = @transform_11, window_bounds = array<i64: 8, 128>}, {pipeline_mode = #tpu.pipeline_mode<synchronous>, transform_indices = @transform_12, window_bounds = array<i64: 8, 4>}]} {
    %c0_i32 = arith.constant 0 : i32
    %0 = arith.cmpi eq, %arg0, %c0_i32 : i32
    %1 = arith.extui %0 : i1 to i32
    %c0_i32_0 = arith.constant 0 : i32
    %2 = arith.cmpi ne, %1, %c0_i32_0 : i32
    scf.if %2 {
      %cst_10 = arith.constant 0.000000e+00 : f32
      %12 = vector.broadcast %cst_10 : f32 to vector<8x128xf32>
      %c0_11 = arith.constant 0 : index
      %c0_12 = arith.constant 0 : index
      %13 = vector.load %arg12[%c0_11, %c0_12] : memref<8x128xf32, #tpu.memory_space<vmem>>, vector<8x128xf32>
      tpu.vector_store %arg12[%c0_11, %c0_12], %12 {strides = array<i32>} : memref<8x128xf32, #tpu.memory_space<vmem>>, vector<8x128xf32>,
    } else {
    }
    %c0 = arith.constant 0 : index
    %c0_1 = arith.constant 0 : index
    %3 = vector.load %arg12[%c0, %c0_1] : memref<8x128xf32, #tpu.memory_space<vmem>>, vector<8x128xf32>
    %c0_2 = arith.constant 0 : index
    %c0_3 = arith.constant 0 : index
    %4 = vector.load %arg1[%c0_2, %c0_3] : memref<8x256xbf16, #tpu.memory_space<vmem>>, vector<8x256xbf16>
    %c0_4 = arith.constant 0 : index
    %c0_5 = arith.constant 0 : index
    %5 = vector.load %arg2[%c0_4, %c0_5] : memref<256x128xbf16, #tpu.memory_space<vmem>>, vector<256x128xbf16>
    %cst = arith.constant dense<0.000000e+00> : vector<8x128xf32>
    %6 = tpu.matmul %4, %5, %cst {dimension_numbers = #tpu.dot_dimension_numbers<[1], [0], [0], [1], [0, 0, 1, 1], [], []>} : vector<8x256xbf16>, vector<256x128xbf16>, vector<8x128xf32> -> vector<8x128xf32>
    %7 = arith.addf %3, %6 : vector<8x128xf32>
    %c0_6 = arith.constant 0 : index
    %c0_7 = arith.constant 0 : index
    %8 = vector.load %arg12[%c0_6, %c0_7] : memref<8x128xf32, #tpu.memory_space<vmem>>, vector<8x128xf32>
    tpu.vector_store %arg12[%c0_6, %c0_7], %7 {strides = array<i32>} : memref<8x128xf32, #tpu.memory_space<vmem>>, vector<8x128xf32>,
    %c0_i32_8 = arith.constant 0 : i32
    %9 = arith.cmpi eq, %arg0, %c0_i32_8 : i32
    %10 = arith.extui %9 : i1 to i32
    %c0_i32_9 = arith.constant 0 : i32
    %11 = arith.cmpi ne, %10, %c0_i32_9 : i32
    scf.if %11 {
      %c0_10 = arith.constant 0 : index
      %c0_11 = arith.constant 0 : index
      %12 = vector.load %arg12[%c0_10, %c0_11] : memref<8x128xf32, #tpu.memory_space<vmem>>, vector<8x128xf32>
      %c0_12 = arith.constant 0 : index
      %c0_13 = arith.constant 0 : index
      %13 = vector.load %arg3[%c0_12, %c0_13] : memref<1x128xf32, #tpu.memory_space<vmem>>, vector<1x128xf32>
      %14 = vector.broadcast %13 : vector<1x128xf32> to vector<8x128xf32>
      %15 = arith.addf %12, %14 : vector<8x128xf32>
      %c0_14 = arith.constant 0 : index
      %c0_15 = arith.constant 0 : index
      %16 = vector.load %arg4[%c0_14, %c0_15] : memref<1x128xf32, #tpu.memory_space<vmem>>, vector<1x128xf32>
      %c0_16 = arith.constant 0 : index
      %c0_17 = arith.constant 0 : index
      %17 = vector.load %arg5[%c0_16, %c0_17] : memref<1x128xf32, #tpu.memory_space<vmem>>, vector<1x128xf32>
      %c0_18 = arith.constant 0 : index
      %18 = memref.load %arg10[%c0_18] : memref<1xf32, #tpu.memory_space<smem>>
      %cst_19 = arith.constant dense<0.000000e+00> : vector<128xf32>
      %19 = vector.multi_reduction <add>, %15, %cst_19 [0] : vector<8x128xf32> to vector<128xf32>
      %20 = vector.shape_cast %19 : vector<128xf32> to vector<1x128xf32>
      %cst_20 = arith.constant 8.000000e+00 : f32
      %21 = vector.broadcast %cst_20 : f32 to vector<1x128xf32>
      %22 = arith.divf %20, %21 : vector<1x128xf32>
      %23 = vector.broadcast %22 : vector<1x128xf32> to vector<8x128xf32>
      %24 = arith.subf %15, %23 : vector<8x128xf32>
      %25 = arith.mulf %24, %24 : vector<8x128xf32>
      %cst_21 = arith.constant dense<0.000000e+00> : vector<128xf32>
      %26 = vector.multi_reduction <add>, %25, %cst_21 [0] : vector<8x128xf32> to vector<128xf32>
      %27 = vector.shape_cast %26 : vector<128xf32> to vector<1x128xf32>
      %cst_22 = arith.constant 8.000000e+00 : f32
      %28 = vector.broadcast %cst_22 : f32 to vector<1x128xf32>
      %29 = arith.divf %27, %28 : vector<1x128xf32>
      %30 = vector.broadcast %22 : vector<1x128xf32> to vector<8x128xf32>
      %31 = arith.subf %15, %30 : vector<8x128xf32>
      %cst_23 = arith.constant 9.99999974E-6 : f32
      %32 = vector.broadcast %cst_23 : f32 to vector<1x128xf32>
      %33 = arith.addf %29, %32 : vector<1x128xf32>
      %34 = math.rsqrt %33 : vector<1x128xf32>
      %35 = vector.broadcast %34 : vector<1x128xf32> to vector<8x128xf32>
      %36 = arith.mulf %31, %35 : vector<8x128xf32>
      %37 = vector.broadcast %16 : vector<1x128xf32> to vector<8x128xf32>
      %38 = arith.mulf %36, %37 : vector<8x128xf32>
      %39 = vector.broadcast %17 : vector<1x128xf32> to vector<8x128xf32>
      %40 = arith.addf %38, %39 : vector<8x128xf32>
      %cst_24 = arith.constant 0.000000e+00 : f32
      %41 = vector.broadcast %cst_24 : f32 to vector<8x128xf32>
      %42 = arith.cmpf oge, %40, %41 : vector<8x128xf32>
      %43 = vector.broadcast %18 : f32 to vector<8x128xf32>
      %44 = arith.mulf %43, %40 : vector<8x128xf32>
      %45 = arith.select %42, %40, %44 : vector<8x128xi1>, vector<8x128xf32>
      %c0_25 = arith.constant 0 : index
      %c0_26 = arith.constant 0 : index
      %46 = vector.load %arg12[%c0_25, %c0_26] : memref<8x128xf32, #tpu.memory_space<vmem>>, vector<8x128xf32>
      tpu.vector_store %arg12[%c0_25, %c0_26], %45 {strides = array<i32>} : memref<8x128xf32, #tpu.memory_space<vmem>>, vector<8x128xf32>,
      %47 = arith.truncf %45 : vector<8x128xf32> to vector<8x128xbf16>
      %c0_27 = arith.constant 0 : index
      %c0_28 = arith.constant 0 : index
      %48 = vector.load %arg6[%c0_27, %c0_28] : memref<128x4xbf16, #tpu.memory_space<vmem>>, vector<128x4xbf16>
      %cst_29 = arith.constant dense<0.000000e+00> : vector<8x4xf32>
      %49 = tpu.matmul %47, %48, %cst_29 {dimension_numbers = #tpu.dot_dimension_numbers<[1], [0], [0], [1], [0, 0, 1, 1], [], []>} : vector<8x128xbf16>, vector<128x4xbf16>, vector<8x4xf32> -> vector<8x4xf32>
      %c0_30 = arith.constant 0 : index
      %c0_31 = arith.constant 0 : index
      %50 = vector.load %arg7[%c0_30, %c0_31] : memref<1x4xf32, #tpu.memory_space<vmem>>, vector<1x4xf32>
      %51 = vector.broadcast %50 : vector<1x4xf32> to vector<8x4xf32>
      %52 = arith.addf %49, %51 : vector<8x4xf32>
      %c0_32 = arith.constant 0 : index
      %c0_33 = arith.constant 0 : index
      %53 = vector.load %arg8[%c0_32, %c0_33] : memref<1x4xf32, #tpu.memory_space<vmem>>, vector<1x4xf32>
      %c0_34 = arith.constant 0 : index
      %c0_35 = arith.constant 0 : index
      %54 = vector.load %arg9[%c0_34, %c0_35] : memref<1x4xf32, #tpu.memory_space<vmem>>, vector<1x4xf32>
      %c0_36 = arith.constant 0 : index
      %55 = memref.load %arg11[%c0_36] : memref<1xf32, #tpu.memory_space<smem>>
      %cst_37 = arith.constant dense<0.000000e+00> : vector<4xf32>
      %56 = vector.multi_reduction <add>, %52, %cst_37 [0] : vector<8x4xf32> to vector<4xf32>
      %57 = vector.shape_cast %56 : vector<4xf32> to vector<1x4xf32>
      %cst_38 = arith.constant 8.000000e+00 : f32
      %58 = vector.broadcast %cst_38 : f32 to vector<1x4xf32>
      %59 = arith.divf %57, %58 : vector<1x4xf32>
      %60 = vector.broadcast %59 : vector<1x4xf32> to vector<8x4xf32>
      %61 = arith.subf %52, %60 : vector<8x4xf32>
      %62 = arith.mulf %61, %61 : vector<8x4xf32>
      %cst_39 = arith.constant dense<0.000000e+00> : vector<4xf32>
      %63 = vector.multi_reduction <add>, %62, %cst_39 [0] : vector<8x4xf32> to vector<4xf32>
      %64 = vector.shape_cast %63 : vector<4xf32> to vector<1x4xf32>
      %cst_40 = arith.constant 8.000000e+00 : f32
      %65 = vector.broadcast %cst_40 : f32 to vector<1x4xf32>
      %66 = arith.divf %64, %65 : vector<1x4xf32>
      %67 = vector.broadcast %59 : vector<1x4xf32> to vector<8x4xf32>
      %68 = arith.subf %52, %67 : vector<8x4xf32>
      %cst_41 = arith.constant 9.99999974E-6 : f32
      %69 = vector.broadcast %cst_41 : f32 to vector<1x4xf32>
      %70 = arith.addf %66, %69 : vector<1x4xf32>
      %71 = math.rsqrt %70 : vector<1x4xf32>
      %72 = vector.broadcast %71 : vector<1x4xf32> to vector<8x4xf32>
      %73 = arith.mulf %68, %72 : vector<8x4xf32>
      %74 = vector.broadcast %53 : vector<1x4xf32> to vector<8x4xf32>
      %75 = arith.mulf %73, %74 : vector<8x4xf32>
      %76 = vector.broadcast %54 : vector<1x4xf32> to vector<8x4xf32>
      %77 = arith.addf %75, %76 : vector<8x4xf32>
      %cst_42 = arith.constant 0.000000e+00 : f32
      %78 = vector.broadcast %cst_42 : f32 to vector<8x4xf32>
      %79 = arith.cmpf oge, %77, %78 : vector<8x4xf32>
      %80 = vector.broadcast %55 : f32 to vector<8x4xf32>
      %81 = arith.mulf %80, %77 : vector<8x4xf32>
      %82 = arith.select %79, %77, %81 : vector<8x4xi1>, vector<8x4xf32>
      %cst_43 = arith.constant dense<0xFF800000> : vector<8xf32>
      %83 = vector.multi_reduction <maximumf>, %82, %cst_43 [1] : vector<8x4xf32> to vector<8xf32>
      %84 = vector.shape_cast %83 : vector<8xf32> to vector<8x1xf32>
      %85 = vector.broadcast %84 : vector<8x1xf32> to vector<8x4xf32>
      %86 = arith.subf %82, %85 : vector<8x4xf32>
      %87 = math.exp %86 : vector<8x4xf32>
      %cst_44 = arith.constant dense<0.000000e+00> : vector<8xf32>
      %88 = vector.multi_reduction <add>, %87, %cst_44 [1] : vector<8x4xf32> to vector<8xf32>
      %89 = vector.shape_cast %88 : vector<8xf32> to vector<8x1xf32>
      %90 = vector.broadcast %89 : vector<8x1xf32> to vector<8x4xf32>
      %91 = arith.divf %87, %90 : vector<8x4xf32>
      %c0_45 = arith.constant 0 : index
      %c0_46 = arith.constant 0 : index
      %92 = vector.load %arg13[%c0_45, %c0_46] : memref<8x4xf32, #tpu.memory_space<vmem>>, vector<8x4xf32>
      tpu.vector_store %arg13[%c0_45, %c0_46], %91 {strides = array<i32>} : memref<8x4xf32, #tpu.memory_space<vmem>>, vector<8x4xf32>,
    } else {
    }
    return
  }
  func.func @transform_0(%arg0: i32) -> (i32, i32) {
    %c0_i32 = arith.constant 0 : i32
    %c0_i32_0 = arith.constant 0 : i32
    return %c0_i32, %arg0 : i32, i32
  }
  func.func @transform_1(%arg0: i32) -> (i32, i32) {
    %c0_i32 = arith.constant 0 : i32
    %c0_i32_0 = arith.constant 0 : i32
    return %arg0, %c0_i32 : i32, i32
  }
  func.func @transform_2(%arg0: i32) -> (i32, i32) {
    %c0_i32 = arith.constant 0 : i32
    %c0_i32_0 = arith.constant 0 : i32
    %c0_i32_1 = arith.constant 0 : i32
    return %c0_i32, %c0_i32_0 : i32, i32
  }
  func.func @transform_3(%arg0: i32) -> (i32, i32) {
    %c0_i32 = arith.constant 0 : i32
    %c0_i32_0 = arith.constant 0 : i32
    %c0_i32_1 = arith.constant 0 : i32
    return %c0_i32, %c0_i32_0 : i32, i32
  }
  func.func @transform_4(%arg0: i32) -> (i32, i32) {
    %c0_i32 = arith.constant 0 : i32
    %c0_i32_0 = arith.constant 0 : i32
    %c0_i32_1 = arith.constant 0 : i32
    return %c0_i32, %c0_i32_0 : i32, i32
  }
  func.func @transform_5(%arg0: i32) -> (i32, i32) {
    %c0_i32 = arith.constant 0 : i32
    %c0_i32_0 = arith.constant 0 : i32
    %c0_i32_1 = arith.constant 0 : i32
    return %c0_i32, %c0_i32_0 : i32, i32
  }
  func.func @transform_6(%arg0: i32) -> (i32, i32) {
    %c0_i32 = arith.constant 0 : i32
    %c0_i32_0 = arith.constant 0 : i32
    %c0_i32_1 = arith.constant 0 : i32
    return %c0_i32, %c0_i32_0 : i32, i32
  }
  func.func @transform_7(%arg0: i32) -> (i32, i32) {
    %c0_i32 = arith.constant 0 : i32
    %c0_i32_0 = arith.constant 0 : i32
    %c0_i32_1 = arith.constant 0 : i32
    return %c0_i32, %c0_i32_0 : i32, i32
  }
  func.func @transform_8(%arg0: i32) -> (i32, i32) {
    %c0_i32 = arith.constant 0 : i32
    %c0_i32_0 = arith.constant 0 : i32
    %c0_i32_1 = arith.constant 0 : i32
    return %c0_i32, %c0_i32_0 : i32, i32
  }
  func.func @transform_9(%arg0: i32) -> i32 {
    %c0_i32 = arith.constant 0 : i32
    %c0_i32_0 = arith.constant 0 : i32
    return %c0_i32 : i32
  }
  func.func @transform_10(%arg0: i32) -> i32 {
    %c0_i32 = arith.constant 0 : i32
    %c0_i32_0 = arith.constant 0 : i32
    return %c0_i32 : i32
  }
  func.func @transform_11(%arg0: i32) -> (i32, i32) {
    %c0_i32 = arith.constant 0 : i32
    %c0_i32_0 = arith.constant 0 : i32
    %c0_i32_1 = arith.constant 0 : i32
    return %c0_i32, %c0_i32_0 : i32, i32
  }
  func.func @transform_12(%arg0: i32) -> (i32, i32) {
    %c0_i32 = arith.constant 0 : i32
    %c0_i32_0 = arith.constant 0 : i32
    %c0_i32_1 = arith.constant 0 : i32
    return %c0_i32, %c0_i32_0 : i32, i32
  }
}

module attributes {stable_mosaic.version = 11 : i64} {
  func.func @_combine_kernel(%arg0: i32, %arg1: memref<8x4xf32, #tpu.memory_space<vmem>>, %arg2: memref<8x256xf32, #tpu.memory_space<vmem>>, %arg3: memref<4x8x256xf32, #tpu.memory_space<vmem>>, %arg4: memref<8x256xf32, #tpu.memory_space<vmem>>) attributes {dimension_semantics = [#tpu.dimension_semantics<arbitrary>], iteration_bounds = array<i64: 1>, scalar_prefetch = 0 : i64, scratch_operands = 0 : i64, tpu.core_type = #tpu.core_type<tc>, window_params = [{pipeline_mode = #tpu.pipeline_mode<synchronous>, transform_indices = @transform_0, window_bounds = array<i64: 8, 4>}, {pipeline_mode = #tpu.pipeline_mode<synchronous>, transform_indices = @transform_1, window_bounds = array<i64: 8, 256>}, {pipeline_mode = #tpu.pipeline_mode<synchronous>, transform_indices = @transform_2, window_bounds = array<i64: 4, 8, 256>}, {pipeline_mode = #tpu.pipeline_mode<synchronous>, transform_indices = @transform_3, window_bounds = array<i64: 8, 256>}]} {
    %c0 = arith.constant 0 : index
    %c0_0 = arith.constant 0 : index
    %0 = vector.load %arg2[%c0, %c0_0] : memref<8x256xf32, #tpu.memory_space<vmem>>, vector<8x256xf32>
    %c0_1 = arith.constant 0 : index
    %c0_2 = arith.constant 0 : index
    %1 = vector.load %arg1[%c0_1, %c0_2] : memref<8x4xf32, #tpu.memory_space<vmem>>, vector<8x1xf32>
    %c0_3 = arith.constant 0 : index
    %c0_4 = arith.constant 0 : index
    %c0_5 = arith.constant 0 : index
    %2 = vector.load %arg3[%c0_3, %c0_4, %c0_5] : memref<4x8x256xf32, #tpu.memory_space<vmem>>, vector<1x8x256xf32>
    %3 = vector.shape_cast %2 : vector<1x8x256xf32> to vector<8x256xf32>
    %4 = vector.broadcast %1 : vector<8x1xf32> to vector<8x256xf32>
    %5 = arith.mulf %4, %3 : vector<8x256xf32>
    %6 = arith.addf %0, %5 : vector<8x256xf32>
    %c0_6 = arith.constant 0 : index
    %c1 = arith.constant 1 : index
    %7 = vector.load %arg1[%c0_6, %c1] : memref<8x4xf32, #tpu.memory_space<vmem>>, vector<8x1xf32>
    %c1_7 = arith.constant 1 : index
    %c0_8 = arith.constant 0 : index
    %c0_9 = arith.constant 0 : index
    %8 = vector.load %arg3[%c1_7, %c0_8, %c0_9] : memref<4x8x256xf32, #tpu.memory_space<vmem>>, vector<1x8x256xf32>
    %9 = vector.shape_cast %8 : vector<1x8x256xf32> to vector<8x256xf32>
    %10 = vector.broadcast %7 : vector<8x1xf32> to vector<8x256xf32>
    %11 = arith.mulf %10, %9 : vector<8x256xf32>
    %12 = arith.addf %6, %11 : vector<8x256xf32>
    %c0_10 = arith.constant 0 : index
    %c2 = arith.constant 2 : index
    %13 = vector.load %arg1[%c0_10, %c2] : memref<8x4xf32, #tpu.memory_space<vmem>>, vector<8x1xf32>
    %c2_11 = arith.constant 2 : index
    %c0_12 = arith.constant 0 : index
    %c0_13 = arith.constant 0 : index
    %14 = vector.load %arg3[%c2_11, %c0_12, %c0_13] : memref<4x8x256xf32, #tpu.memory_space<vmem>>, vector<1x8x256xf32>
    %15 = vector.shape_cast %14 : vector<1x8x256xf32> to vector<8x256xf32>
    %16 = vector.broadcast %13 : vector<8x1xf32> to vector<8x256xf32>
    %17 = arith.mulf %16, %15 : vector<8x256xf32>
    %18 = arith.addf %12, %17 : vector<8x256xf32>
    %c0_14 = arith.constant 0 : index
    %c3 = arith.constant 3 : index
    %19 = vector.load %arg1[%c0_14, %c3] : memref<8x4xf32, #tpu.memory_space<vmem>>, vector<8x1xf32>
    %c3_15 = arith.constant 3 : index
    %c0_16 = arith.constant 0 : index
    %c0_17 = arith.constant 0 : index
    %20 = vector.load %arg3[%c3_15, %c0_16, %c0_17] : memref<4x8x256xf32, #tpu.memory_space<vmem>>, vector<1x8x256xf32>
    %21 = vector.shape_cast %20 : vector<1x8x256xf32> to vector<8x256xf32>
    %22 = vector.broadcast %19 : vector<8x1xf32> to vector<8x256xf32>
    %23 = arith.mulf %22, %21 : vector<8x256xf32>
    %24 = arith.addf %18, %23 : vector<8x256xf32>
    %c0_18 = arith.constant 0 : index
    %c0_19 = arith.constant 0 : index
    %25 = vector.load %arg4[%c0_18, %c0_19] : memref<8x256xf32, #tpu.memory_space<vmem>>, vector<8x256xf32>
    tpu.vector_store %arg4[%c0_18, %c0_19], %24 {strides = array<i32>} : memref<8x256xf32, #tpu.memory_space<vmem>>, vector<8x256xf32>,
    return
  }
  func.func @transform_0(%arg0: i32) -> (i32, i32) {
    %c0_i32 = arith.constant 0 : i32
    %c0_i32_0 = arith.constant 0 : i32
    %c0_i32_1 = arith.constant 0 : i32
    return %c0_i32, %c0_i32_0 : i32, i32
  }
  func.func @transform_1(%arg0: i32) -> (i32, i32) {
    %c0_i32 = arith.constant 0 : i32
    %c0_i32_0 = arith.constant 0 : i32
    %c0_i32_1 = arith.constant 0 : i32
    return %c0_i32, %c0_i32_0 : i32, i32
  }
  func.func @transform_2(%arg0: i32) -> (i32, i32, i32) {
    %c0_i32 = arith.constant 0 : i32
    %c0_i32_0 = arith.constant 0 : i32
    %c0_i32_1 = arith.constant 0 : i32
    %c0_i32_2 = arith.constant 0 : i32
    return %c0_i32, %c0_i32_0, %c0_i32_1 : i32, i32, i32
  }
  func.func @transform_3(%arg0: i32) -> (i32, i32) {
    %c0_i32 = arith.constant 0 : i32
    %c0_i32_0 = arith.constant 0 : i32
    %c0_i32_1 = arith.constant 0 : i32
    return %c0_i32, %c0_i32_0 : i32, i32
  }
}

</mosaic_0001>

<llo_original>
// kernel: groupface_forward.7
$region0: #{groupface_forward.7}
  #allocation0 [shape = 'u32[]', space=smem, size = 0x4, offset = 0x4, fixed_abs, tag = 'smem constant byte address 0x4 - core index']
  #allocation1 [shape = 'u32[144,128]{1,0:T(1,128)}', space=vmem, size = 0x12000, scoped, tag = 'internal scratch']
  %s0 = inlined_call_operand.vmem [shape: f32[8,4], index: 0, kind: input, shape index: {}]
  %s1 = inlined_call_operand.vmem [shape: f32[8,256], index: 1, kind: input, shape index: {}]
  %s2 = inlined_call_operand.vmem [shape: f32[4,8,256], index: 2, kind: input, shape index: {}]
  %s3 = inlined_call_operand.hbm [shape: f32[8,256], index: 3, kind: output, shape index: {}]
  %s4 = sld [smem:[#allocation0]]
  $region22: #{groupface_forward.7} parent=0
    _
  %s6 = ssub.s32 1, %s4
  %s7 = scalar_select 0, %s6, %s4
  $region1: #{groupface_forward.7} parent=0
    #allocation2 [shape = 'u8[8192]{0}', space=vmem, size = 0x2000, scoped, tag = 'output window, operand 0, single buffered']
    #allocation3 [shape = 's32[1]{0}', space=sflag, size = 0x4, scoped, tag = 'scoped memory for groupface_forward.7']
    %8 = vsyncpa [#allocation3], 0
    // Predicated region
    $region2: #{groupface_forward.7} parent=1 // pred_check
      _
    $region3: #{groupface_forward.7} parent=1 // pred_check_branch
      %10 = sbr.rel (0) target = $region5
    $region4: #{groupface_forward.7} parent=1 // pred_region
      _
    $region5: #{groupface_forward.7} parent=1 // pred_fallthru
      _
    // Predicated region
    $region6: #{groupface_forward.7} parent=1 // pred_check
      _
    $region7: #{groupface_forward.7} parent=1 // pred_check_branch
      %12 = sbr.rel (0) target = $region9
    $region8: #{groupface_forward.7} parent=1 // pred_region
      _
    $region9: #{groupface_forward.7} parent=1 // pred_fallthru
      _
    // Predicated region
    $region10: #{groupface_forward.7} parent=1 // pred_check
      _
    $region11: #{groupface_forward.7} parent=1 // pred_check_branch
      %14 = sbr.rel (0) target = $region13
    $region12: #{groupface_forward.7} parent=1 // pred_region
      _
    $region13: #{groupface_forward.7} parent=1 // pred_fallthru
      _
    %v15 = vld [vmem:[%s1] sm:$0xff]
    %v16 = vld [vmem:[%s1 + $0x8] sm:$0xff]
    %v17 = vld [vmem:[%s0] sm:$0xff]
    %v18 = vld [vmem:[%s2] sm:$0xff]
    %v19 = vld [vmem:[%s2 + $0x8] sm:$0xff]
    %21 = vset.pattern.permute.xlu0 0
    %22 = vperm.xlu0 %21, %v17
    %v23 = vpop.permute.xlu0 %22
    %v25 = vmul.f32 %v23, %v18
    %v26 = vmul.f32 %v23, %v19
    %v27 = vadd.f32 %v15, %v25
    %v28 = vadd.f32 %v16, %v26
    %s29 = scalar_lea.vmem %s2, 16
    %v30 = vld [vmem:[%s29] sm:$0xff]
    %v31 = vld [vmem:[%s29 + $0x8] sm:$0xff]
    %32 = vset.pattern.permute.xlu0 1
    %33 = vperm.xlu0 %32, %v17
    %v34 = vpop.permute.xlu0 %33
    %v36 = vmul.f32 %v34, %v30
    %v37 = vmul.f32 %v34, %v31
    %v38 = vadd.f32 %v27, %v36
    %v39 = vadd.f32 %v28, %v37
    %s40 = scalar_lea.vmem %s2, 32
    %v41 = vld [vmem:[%s40] sm:$0xff]
    %v42 = vld [vmem:[%s40 + $0x8] sm:$0xff]
    %43 = vset.pattern.permute.xlu0 2
    %44 = vperm.xlu0 %43, %v17
    %v45 = vpop.permute.xlu0 %44
    %v47 = vmul.f32 %v45, %v41
    %v48 = vmul.f32 %v45, %v42
    %v49 = vadd.f32 %v38, %v47
    %v50 = vadd.f32 %v39, %v48
    %s51 = scalar_lea.vmem %s2, 48
    %v52 = vld [vmem:[%s51] sm:$0xff]
    %v53 = vld [vmem:[%s51 + $0x8] sm:$0xff]
    %54 = vset.pattern.permute.xlu0 3
    %55 = vperm.xlu0 %54, %v17
    %v56 = vpop.permute.xlu0 %55
    %v58 = vmul.f32 %v56, %v52
    %v59 = vmul.f32 %v56, %v53
    %v60 = vadd.f32 %v49, %v58
    %v61 = vadd.f32 %v50, %v59
    %62 = vst [vmem:[#allocation2] sm:$0xff] %v60
    %63 = vst [vmem:[#allocation2 + $0x8] sm:$0xff] %v61
    // Predicated region
    $region14: #{groupface_forward.7} parent=1 // pred_check
      _
    $region15: #{groupface_forward.7} parent=1 // pred_check_branch
      %65 = sbr.rel (0) target = $region17
    $region16: #{groupface_forward.7} parent=1 // pred_region
      %s67 = ssub.s32 256, 256
      %68 = vsyncadd [#allocation3], %s67
      %s70 = sshll.u32 [#allocation2], 4
      %s71 = int_to_ptr.vmem [resolvable:$true] %s70
      %73 = dma.vmem_to_hbm [thread:$0]  %s71, 256, %s3, [#allocation3]
    $region17: #{groupface_forward.7} parent=1 // pred_fallthru
      _
    // Predicated region
    $region18: #{groupface_forward.7} parent=1 // pred_check
      _
    $region19: #{groupface_forward.7} parent=1 // pred_check_branch
      %75 = sbr.rel (0) target = $region21
    $region20: #{groupface_forward.7} parent=1 // pred_region
      %76 = dma.done [#allocation3], 256
    $region21: #{groupface_forward.7} parent=1 // pred_fallthru
      _
    %77 = vsyncpa [#allocation3], 1

// kernel: groupface_forward.6
$region0: #{groupface_forward.6}
  #allocation0 [shape = 'u32[]', space=smem, size = 0x4, offset = 0x4, fixed_abs, tag = 'smem constant byte address 0x4 - core index']
  #allocation1 [shape = 'u32[144,128]{1,0:T(1,128)}', space=vmem, size = 0x12000, scoped, tag = 'internal scratch']
  #allocation2 [shape = 'f32[1]{0:T(128)S(6)}', space=smem, size = 0x200, scoped, tag = 'scoped memory for groupface_forward.6']
  #allocation3 [shape = 'f32[1]{0:T(128)S(6)}', space=smem, size = 0x200, scoped, tag = 'scoped memory for groupface_forward.6']
  %s0 = inlined_call_operand.vmem [shape: bf16[8,256], index: 0, kind: input, shape index: {}]
  %s1 = inlined_call_operand.hbm [shape: bf16[256,128], index: 1, kind: input, shape index: {}]
  %s2 = inlined_call_operand.hbm [shape: f32[1,128], index: 2, kind: input, shape index: {}]
  %s3 = inlined_call_operand.hbm [shape: f32[1,128], index: 3, kind: input, shape index: {}]
  %s4 = inlined_call_operand.hbm [shape: f32[1,128], index: 4, kind: input, shape index: {}]
  %s5 = inlined_call_operand.vmem [shape: bf16[128,4], index: 5, kind: input, shape index: {}]
  %s6 = inlined_call_operand.hbm [shape: f32[1,4], index: 6, kind: input, shape index: {}]
  %s7 = inlined_call_operand.hbm [shape: f32[1,4], index: 7, kind: input, shape index: {}]
  %s8 = inlined_call_operand.hbm [shape: f32[1,4], index: 8, kind: input, shape index: {}]
  %s9 = inlined_call_operand.<no memory space> [shape: f32[1], index: 9, kind: input, shape index: {}]
  %s10 = inlined_call_operand.<no memory space> [shape: f32[1], index: 10, kind: input, shape index: {}]
  %s11 = inlined_call_operand.hbm [shape: f32[8,128], index: 11, kind: output, shape index: {0}]
  %s12 = inlined_call_operand.vmem [shape: f32[8,4], index: 12, kind: output, shape index: {1}]
  %13 = xla_tuple %s11, %s12
  %s14 = sld [smem:[#allocation0]]
  $region98: #{groupface_forward.6} parent=0
    _
  %s16 = ssub.s32 1, %s14
  %s17 = scalar_select 0, %s16, %s14
  %18 = sst [smem:[#allocation2]] %s9
  %19 = sst [smem:[#allocation3]] %s10
  $region1: #{groupface_forward.6} parent=0
    #allocation4 [shape = 'u8[65536]{0}', space=vmem, size = 0x10000, scoped, tag = 'input window, operand 1, single buffered']
    #allocation5 [shape = 's32[1]{0}', space=sflag, size = 0x4, scoped, tag = 'scoped memory for groupface_forward.6']
    #allocation6 [shape = 's32[1]{0}', space=sflag, size = 0x4, scoped, tag = 'scoped memory for groupface_forward.6']
    #allocation7 [shape = 'u8[512]{0}', space=vmem, size = 0x400, scoped, tag = 'input window, operand 2, single buffered']
    #allocation8 [shape = 's32[1]{0}', space=sflag, size = 0x4, scoped, tag = 'scoped memory for groupface_forward.6']
    #allocation9 [shape = 'u8[512]{0}', space=vmem, size = 0x400, scoped, tag = 'input window, operand 3, single buffered']
    #allocation10 [shape = 'u8[512]{0}', space=vmem, size = 0x400, scoped, tag = 'input window, operand 4, single buffered']
    #allocation11 [shape = 's32[1]{0}', space=sflag, size = 0x4, scoped, tag = 'scoped memory for groupface_forward.6']
    #allocation12 [shape = 'u8[512]{0}', space=vmem, size = 0x400, scoped, tag = 'input window, operand 6, single buffered']
    #allocation13 [shape = 'u8[512]{0}', space=vmem, size = 0x400, scoped, tag = 'input window, operand 7, single buffered']
    #allocation14 [shape = 's32[1]{0}', space=sflag, size = 0x4, scoped, tag = 'scoped memory for groupface_forward.6']
    #allocation15 [shape = 'u8[512]{0}', space=vmem, size = 0x400, scoped, tag = 'input window, operand 8, single buffered']
    #allocation16 [shape = 'u8[4096]{0}', space=vmem, size = 0x1000, scoped, tag = 'output window, operand 0, single buffered']
    %20 = vsyncpa [#allocation5], 0
    %21 = vsyncpa [#allocation8], 0
    %22 = vsyncpa [#allocation11], 0
    %23 = vsyncpa [#allocation14], 0
    %24 = vsyncpa [#allocation6], 0
    // Predicated region
    $region2: #{groupface_forward.6} parent=1 // pred_check
      _
    $region3: #{groupface_forward.6} parent=1 // pred_check_branch
      %26 = sbr.rel (0) target = $region5
    $region4: #{groupface_forward.6} parent=1 // pred_region
      _
    $region5: #{groupface_forward.6} parent=1 // pred_fallthru
      _
    // Predicated region
    $region6: #{groupface_forward.6} parent=1 // pred_check
      _
    $region7: #{groupface_forward.6} parent=1 // pred_check_branch
      %28 = sbr.rel (0) target = $region9
    $region8: #{groupface_forward.6} parent=1 // pred_region
      %s30 = ssub.s32 2048, 2048
      %31 = vsyncadd [#allocation5], %s30
      %s32 = sshll.u32 [#allocation4], 4
      %s33 = int_to_ptr.vmem [resolvable:$true] %s32
      %38 = dma.hbm_to_vmem [thread:$0]  %s1, 2048, %s33, [#allocation5], 64, 64, 4
    $region9: #{groupface_forward.6} parent=1 // pred_fallthru
      _
    // Predicated region
    $region10: #{groupface_forward.6} parent=1 // pred_check
      _
    $region11: #{groupface_forward.6} parent=1 // pred_check_branch
      %40 = sbr.rel (0) target = $region13
    $region12: #{groupface_forward.6} parent=1 // pred_region
      %s42 = ssub.s32 16, 16
      %43 = vsyncadd [#allocation8], %s42
      %s45 = sshll.u32 [#allocation7], 4
      %s46 = int_to_ptr.vmem [resolvable:$true] %s45
      %48 = dma.hbm_to_vmem [thread:$0]  %s2, 16, %s46, [#allocation8]
    $region13: #{groupface_forward.6} parent=1 // pred_fallthru
      _
    // Predicated region
    $region14: #{groupface_forward.6} parent=1 // pred_check
      _
    $region15: #{groupface_forward.6} parent=1 // pred_check_branch
      %50 = sbr.rel (0) target = $region17
    $region16: #{groupface_forward.6} parent=1 // pred_region
      %s52 = ssub.s32 16, 16
      %53 = vsyncadd [#allocation8], %s52
      %s55 = sshll.u32 [#allocation9], 4
      %s56 = int_to_ptr.vmem [resolvable:$true] %s55
      %58 = dma.hbm_to_vmem [thread:$0]  %s3, 16, %s56, [#allocation8]
    $region17: #{groupface_forward.6} parent=1 // pred_fallthru
      _
    // Predicated region
    $region18: #{groupface_forward.6} parent=1 // pred_check
      _
    $region19: #{groupface_forward.6} parent=1 // pred_check_branch
      %60 = sbr.rel (0) target = $region21
    $region20: #{groupface_forward.6} parent=1 // pred_region
      %s62 = ssub.s32 16, 16
      %63 = vsyncadd [#allocation11], %s62
      %s65 = sshll.u32 [#allocation10], 4
      %s66 = int_to_ptr.vmem [resolvable:$true] %s65
      %68 = dma.hbm_to_vmem [thread:$0]  %s4, 16, %s66, [#allocation11]
    $region21: #{groupface_forward.6} parent=1 // pred_fallthru
      _
    // Predicated region
    $region22: #{groupface_forward.6} parent=1 // pred_check
      _
    $region23: #{groupface_forward.6} parent=1 // pred_check_branch
      %70 = sbr.rel (0) target = $region25
    $region24: #{groupface_forward.6} parent=1 // pred_region
      _
    $region25: #{groupface_forward.6} parent=1 // pred_fallthru
      _
    // Predicated region
    $region26: #{groupface_forward.6} parent=1 // pred_check
      _
    $region27: #{groupface_forward.6} parent=1 // pred_check_branch
      %72 = sbr.rel (0) target = $region29
    $region28: #{groupface_forward.6} parent=1 // pred_region
      %s74 = ssub.s32 16, 16
      %75 = vsyncadd [#allocation11], %s74
      %s77 = sshll.u32 [#allocation12], 4
      %s78 = int_to_ptr.vmem [resolvable:$true] %s77
      %80 = dma.hbm_to_vmem [thread:$0]  %s6, 16, %s78, [#allocation11]
    $region29: #{groupface_forward.6} parent=1 // pred_fallthru
      _
    // Predicated region
    $region30: #{groupface_forward.6} parent=1 // pred_check
      _
    $region31: #{groupface_forward.6} parent=1 // pred_check_branch
      %82 = sbr.rel (0) target = $region33
    $region32: #{groupface_forward.6} parent=1 // pred_region
      %s84 = ssub.s32 16, 16
      %85 = vsyncadd [#allocation14], %s84
      %s87 = sshll.u32 [#allocation13], 4
      %s88 = int_to_ptr.vmem [resolvable:$true] %s87
      %90 = dma.hbm_to_vmem [thread:$0]  %s7, 16, %s88, [#allocation14]
    $region33: #{groupface_forward.6} parent=1 // pred_fallthru
      _
    // Predicated region
    $region34: #{groupface_forward.6} parent=1 // pred_check
      _
    $region35: #{groupface_forward.6} parent=1 // pred_check_branch
      %92 = sbr.rel (0) target = $region37
    $region36: #{groupface_forward.6} parent=1 // pred_region
      %s94 = ssub.s32 16, 16
      %95 = vsyncadd [#allocation14], %s94
      %s97 = sshll.u32 [#allocation15], 4
      %s98 = int_to_ptr.vmem [resolvable:$true] %s97
      %100 = dma.hbm_to_vmem [thread:$0]  %s8, 16, %s98, [#allocation14]
    $region37: #{groupface_forward.6} parent=1 // pred_fallthru
      _
    // Predicated region
    $region38: #{groupface_forward.6} parent=1 // pred_check
      _
    $region39: #{groupface_forward.6} parent=1 // pred_check_branch
      %102 = sbr.rel (0) target = $region41
    $region40: #{groupface_forward.6} parent=1 // pred_region
      _
    $region41: #{groupface_forward.6} parent=1 // pred_fallthru
      _
    // Predicated region
    $region42: #{groupface_forward.6} parent=1 // pred_check
      _
    $region43: #{groupface_forward.6} parent=1 // pred_check_branch
      %104 = sbr.rel (0) target = $region45
    $region44: #{groupface_forward.6} parent=1 // pred_region
      _
    $region45: #{groupface_forward.6} parent=1 // pred_fallthru
      _
    // Predicated region
    $region46: #{groupface_forward.6} parent=1 // pred_check
      _
    $region47: #{groupface_forward.6} parent=1 // pred_check_branch
      %106 = sbr.rel (0) target = $region49
    $region48: #{groupface_forward.6} parent=1 // pred_region
      %107 = dma.done [#allocation5], 2048
    $region49: #{groupface_forward.6} parent=1 // pred_fallthru
      _
    // Predicated region
    $region50: #{groupface_forward.6} parent=1 // pred_check
      _
    $region51: #{groupface_forward.6} parent=1 // pred_check_branch
      %109 = sbr.rel (0) target = $region53
    $region52: #{groupface_forward.6} parent=1 // pred_region
      %110 = dma.done [#allocation8], 16
    $region53: #{groupface_forward.6} parent=1 // pred_fallthru
      _
    // Predicated region
    $region54: #{groupface_forward.6} parent=1 // pred_check
      _
    $region55: #{groupface_forward.6} parent=1 // pred_check_branch
      %112 = sbr.rel (0) target = $region57
    $region56: #{groupface_forward.6} parent=1 // pred_region
      %113 = dma.done [#allocation8], 16
    $region57: #{groupface_forward.6} parent=1 // pred_fallthru
      _
    // Predicated region
    $region58: #{groupface_forward.6} parent=1 // pred_check
      _
    $region59: #{groupface_forward.6} parent=1 // pred_check_branch
      %115 = sbr.rel (0) target = $region61
    $region60: #{groupface_forward.6} parent=1 // pred_region
      %116 = dma.done [#allocation11], 16
    $region61: #{groupface_forward.6} parent=1 // pred_fallthru
      _
    // Predicated region
    $region62: #{groupface_forward.6} parent=1 // pred_check
      _
    $region63: #{groupface_forward.6} parent=1 // pred_check_branch
      %118 = sbr.rel (0) target = $region65
    $region64: #{groupface_forward.6} parent=1 // pred_region
      %119 = dma.done [#allocation11], 16
    $region65: #{groupface_forward.6} parent=1 // pred_fallthru
      _
    // Predicated region
    $region66: #{groupface_forward.6} parent=1 // pred_check
      _
    $region67: #{groupface_forward.6} parent=1 // pred_check_branch
      %121 = sbr.rel (0) target = $region69
    $region68: #{groupface_forward.6} parent=1 // pred_region
      %122 = dma.done [#allocation14], 16
    $region69: #{groupface_forward.6} parent=1 // pred_fallthru
      _
    // Predicated region
    $region70: #{groupface_forward.6} parent=1 // pred_check
      _
    $region71: #{groupface_forward.6} parent=1 // pred_check_branch
      %124 = sbr.rel (0) target = $region73
    $region72: #{groupface_forward.6} parent=1 // pred_region
      %125 = dma.done [#allocation14], 16
    $region73: #{groupface_forward.6} parent=1 // pred_fallthru
      _
    %p127 = scmp.eq.s32.totalorder 0, 0
    // Predicated region
    $region74: #{groupface_forward.6} parent=1 // pred_check
      %p128 = pneg %p127
    $region75: #{groupface_forward.6} parent=1 // pred_check_branch
      %130 = sbr.rel (%p128) target = $region77
    $region76: #{groupface_forward.6} parent=1 // pred_region
      %131 = vst [vmem:[#allocation16] sm:$0xff] 0.0
    $region77: #{groupface_forward.6} parent=1 // pred_fallthru
      _
    %v132 = vld [vmem:[#allocation16] sm:$0xff]
    %v133 = vld [vmem:[%s0] sm:$0xff]
    %v134 = vld [vmem:[#allocation4] sm:$0xf]
    %v135 = vld [vmem:[#allocation4 + $0x4] sm:$0xf]
    %v136 = vld [vmem:[#allocation4 + $0x8] sm:$0xf]
    %v137 = vld [vmem:[#allocation4 + $0xc] sm:$0xf]
    %v138 = vld [vmem:[#allocation4 + $0x10] sm:$0xf]
    %v139 = vld [vmem:[#allocation4 + $0x14] sm:$0xf]
    %v140 = vld [vmem:[#allocation4 + $0x18] sm:$0xf]
    %v141 = vld [vmem:[#allocation4 + $0x1c] sm:$0xf]
    %v142 = vld [vmem:[#allocation4 + $0x20] sm:$0xf]
    %v143 = vld [vmem:[#allocation4 + $0x24] sm:$0xf]
    %v144 = vld [vmem:[#allocation4 + $0x28] sm:$0xf]
    %v145 = vld [vmem:[#allocation4 + $0x2c] sm:$0xf]
    %v146 = vld [vmem:[#allocation4 + $0x30] sm:$0xf]
    %v147 = vld [vmem:[#allocation4 + $0x34] sm:$0xf]
    %v148 = vld [vmem:[#allocation4 + $0x38] sm:$0xf]
    %v149 = vld [vmem:[#allocation4 + $0x3c] sm:$0xf]
    %v150 = vld [vmem:[#allocation4 + $0x40] sm:$0xf]
    %v151 = vld [vmem:[#allocation4 + $0x44] sm:$0xf]
    %v152 = vld [vmem:[#allocation4 + $0x48] sm:$0xf]
    %v153 = vld [vmem:[#allocation4 + $0x4c] sm:$0xf]
    %v154 = vld [vmem:[#allocation4 + $0x50] sm:$0xf]
    %v155 = vld [vmem:[#allocation4 + $0x54] sm:$0xf]
    %v156 = vld [vmem:[#allocation4 + $0x58] sm:$0xf]
    %v157 = vld [vmem:[#allocation4 + $0x5c] sm:$0xf]
    %v158 = vld [vmem:[#allocation4 + $0x60] sm:$0xf]
    %v159 = vld [vmem:[#allocation4 + $0x64] sm:$0xf]
    %v160 = vld [vmem:[#allocation4 + $0x68] sm:$0xf]
    %v161 = vld [vmem:[#allocation4 + $0x6c] sm:$0xf]
    %v162 = vld [vmem:[#allocation4 + $0x70] sm:$0xf]
    %v163 = vld [vmem:[#allocation4 + $0x74] sm:$0xf]
    %v164 = vld [vmem:[#allocation4 + $0x78] sm:$0xf]
    %v165 = vld [vmem:[#allocation4 + $0x7c] sm:$0xf]
    %v167 = vunpack.c.l.b16 %v133
    %v168 = vunpack.c.h.b16 %v133
    %v169 = vpack.c.b16 %v167, %v167
    %v170 = vpack.c.b16 %v168, %v168
    %v205 = vunpack.c.l.b16 %v134
    %v206 = vunpack.c.l.b16 %v135
    %v207 = vunpack.c.l.b16 %v136
    %v208 = vunpack.c.l.b16 %v137
    %v209 = vunpack.c.l.b16 %v138
    %v210 = vunpack.c.l.b16 %v139
    %v211 = vunpack.c.l.b16 %v140
    %v212 = vunpack.c.l.b16 %v141
    %v213 = vunpack.c.l.b16 %v142
    %v214 = vunpack.c.l.b16 %v143
    %v215 = vunpack.c.l.b16 %v144
    %v216 = vunpack.c.l.b16 %v145
    %v217 = vunpack.c.l.b16 %v146
    %v218 = vunpack.c.l.b16 %v147
    %v219 = vunpack.c.l.b16 %v148
    %v220 = vunpack.c.l.b16 %v149
    %v221 = vunpack.c.l.b16 %v150
    %v222 = vunpack.c.l.b16 %v151
    %v223 = vunpack.c.l.b16 %v152
    %v224 = vunpack.c.l.b16 %v153
    %v225 = vunpack.c.l.b16 %v154
    %v226 = vunpack.c.l.b16 %v155
    %v227 = vunpack.c.l.b16 %v156
    %v228 = vunpack.c.l.b16 %v157
    %v229 = vunpack.c.l.b16 %v158
    %v230 = vunpack.c.l.b16 %v159
    %v231 = vunpack.c.l.b16 %v160
    %v232 = vunpack.c.l.b16 %v161
    %v233 = vunpack.c.l.b16 %v162
    %v234 = vunpack.c.l.b16 %v163
    %v235 = vunpack.c.l.b16 %v164
    %v236 = vunpack.c.l.b16 %v165
    %v237 = vpack.c.b16 %v206, %v205
    %v238 = vpack.c.b16 %v208, %v207
    %v239 = vpack.c.b16 %v210, %v209
    %v240 = vpack.c.b16 %v212, %v211
    %v241 = vpack.c.b16 %v214, %v213
    %v242 = vpack.c.b16 %v216, %v215
    %v243 = vpack.c.b16 %v218, %v217
    %v244 = vpack.c.b16 %v220, %v219
    %v245 = vpack.c.b16 %v222, %v221
    %v246 = vpack.c.b16 %v224, %v223
    %v247 = vpack.c.b16 %v226, %v225
    %v248 = vpack.c.b16 %v228, %v227
    %v249 = vpack.c.b16 %v230, %v229
    %v250 = vpack.c.b16 %v232, %v231
    %v251 = vpack.c.b16 %v234, %v233
    %v252 = vpack.c.b16 %v236, %v235
    %269 = vmatprep.subr.bf16.mxu0 0
    %270 = vmatpush1.bf16.msra.mxu0 %v237
    %271 = vmatprep.subr.bf16.mxu0 0
    %272 = vmatpush1.bf16.msra.mxu0 %v238
    %273 = vmatprep.subr.bf16.mxu0 0
    %274 = vmatpush1.bf16.msra.mxu0 %v239
    %275 = vmatprep.subr.bf16.mxu0 0
    %276 = vmatpush1.bf16.msra.mxu0 %v240
    %277 = vmatprep.subr.bf16.mxu0 0
    %278 = vmatpush1.bf16.msra.mxu0 %v241
    %279 = vmatprep.subr.bf16.mxu0 0
    %280 = vmatpush1.bf16.msra.mxu0 %v242
    %281 = vmatprep.subr.bf16.mxu0 0
    %282 = vmatpush1.bf16.msra.mxu0 %v243
    %283 = vmatprep.subr.bf16.mxu0 0
    %284 = vmatpush1.bf16.msra.mxu0 %v244
    %285 = vmatprep.subr.bf16.mxu0 0
    %286 = vmatpush1.bf16.msra.mxu0 %v245
    %287 = vmatprep.subr.bf16.mxu0 0
    %288 = vmatpush1.bf16.msra.mxu0 %v246
    %289 = vmatprep.subr.bf16.mxu0 0
    %290 = vmatpush1.bf16.msra.mxu0 %v247
    %291 = vmatprep.subr.bf16.mxu0 0
    %292 = vmatpush1.bf16.msra.mxu0 %v248
    %293 = vmatprep.subr.bf16.mxu0 0
    %294 = vmatpush1.bf16.msra.mxu0 %v249
    %295 = vmatprep.subr.bf16.mxu0 0
    %296 = vmatpush1.bf16.msra.mxu0 %v250
    %297 = vmatprep.subr.bf16.mxu0 0
    %298 = vmatpush1.bf16.msra.mxu0 %v251
    %299 = vmatprep.subr.bf16.mxu0 0
    %300 = vmatpush1.bf16.msra.mxu0 %v252
    %301 = vmatprep.mubr.bf16.mxu0 %v170
    %302 = vmatmul.mubr.bf16.gmra.mrb[0].mxu0 %v169
    %v303 = vpop.f32.mrb[0].mxu0
    %v304 = vadd.f32 0.0, %v303
    %v305 = vpop.f32.mrb[0].mxu0
    %v306 = vpop.f32.mrb[0].mxu0
    %v307 = vpop.f32.mrb[0].mxu0
    %308 = vdwg.mxu0
    %v309 = vadd.f32 %v132, %v304
    %310 = vst [vmem:[#allocation16] sm:$0xff] %v309
    // Predicated region
    $region78: #{groupface_forward.6} parent=1 // pred_check
      %p311 = pneg %p127
    $region79: #{groupface_forward.6} parent=1 // pred_check_branch
      %313 = sbr.rel (%p311) target = $region81
    $region80: #{groupface_forward.6} parent=1 // pred_region
      %v314 = vld [vmem:[#allocation16] sm:$0xff]
      %v315 = vld [vmem:[#allocation7] sm:$0x1]
      %v317 = vlaneseq
      %v318 = vshrl.u32 %v317, 7
      %v319 = vsub.s32 0, %v318
      %v320 = vrot.slane %v315, %v319
      %v322 = vadd.f32 %v314, %v320
      %v323 = vld [vmem:[#allocation9] sm:$0x1]
      %v324 = vld [vmem:[#allocation10] sm:$0x1]
      %s325 = sld [smem:[#allocation2]]
      %v326 = vrot.slane %v322, 4
      %v327 = vadd.f32 %v322, %v326
      %v328 = vrot.slane %v327, 2
      %v329 = vadd.f32 %v327, %v328
      %v330 = vrot.slane %v329, 1
      %v331 = vadd.f32 %v329, %v330
      %v332 = vrcp.pop 8.0
      %v333 = vmul.f32 %v331, %v332
      %v334 = vsub.f32 %v322, %v333
      %v335 = vmul.f32 %v334, %v334
      %v336 = vrot.slane %v335, 4
      %v337 = vadd.f32 %v335, %v336
      %v338 = vrot.slane %v337, 2
      %v339 = vadd.f32 %v337, %v338
      %v340 = vrot.slane %v339, 1
      %v341 = vadd.f32 %v339, %v340
      %v342 = vmul.f32 %v341, %v332
      %v343 = vadd.f32 %v342, 1e-05
      %v344 = vrsqrt.pop %v343
      %v345 = vmul.f32 %v334, %v344
      %v347 = vlaneseq
      %v348 = vshrl.u32 %v347, 7
      %v349 = vsub.s32 0, %v348
      %v350 = vrot.slane %v323, %v349
      %v352 = vmul.f32 %v345, %v350
      %v354 = vlaneseq
      %v355 = vshrl.u32 %v354, 7
      %v356 = vsub.s32 0, %v355
      %v357 = vrot.slane %v324, %v356
      %v359 = vadd.f32 %v352, %v357
      %vm360 = vcmp.ge.f32.partialorder %v359, 0.0
      %v361 = vstv %s325
      %v362 = vmul.f32 %v361, %v359
      %v363 = vsel %vm360, %v359, %v362
      %364 = vst [vmem:[#allocation16] sm:$0xff] %v363
      %v365 = vpack.c.bf16 %v363, %v363
      %v366 = vld [vmem:[%s5] sm:$0xf]
      %v367 = vld [vmem:[%s5 + $0x4] sm:$0xf]
      %v368 = vld [vmem:[%s5 + $0x8] sm:$0xf]
      %v369 = vld [vmem:[%s5 + $0xc] sm:$0xf]
      %v370 = vld [vmem:[%s5 + $0x10] sm:$0xf]
      %v371 = vld [vmem:[%s5 + $0x14] sm:$0xf]
      %v372 = vld [vmem:[%s5 + $0x18] sm:$0xf]
      %v373 = vld [vmem:[%s5 + $0x1c] sm:$0xf]
      %v374 = vld [vmem:[%s5 + $0x20] sm:$0xf]
      %v375 = vld [vmem:[%s5 + $0x24] sm:$0xf]
      %v376 = vld [vmem:[%s5 + $0x28] sm:$0xf]
      %v377 = vld [vmem:[%s5 + $0x2c] sm:$0xf]
      %v378 = vld [vmem:[%s5 + $0x30] sm:$0xf]
      %v379 = vld [vmem:[%s5 + $0x34] sm:$0xf]
      %v380 = vld [vmem:[%s5 + $0x38] sm:$0xf]
      %v381 = vld [vmem:[%s5 + $0x3c] sm:$0xf]
      %v382 = vld [vmem:[#allocation12] sm:$0x1]
      %v384 = vlaneseq
      %v385 = vshrl.u32 %v384, 7
      %v386 = vsub.s32 0, %v385
      %v387 = vrot.slane %v382, %v386
      %v405 = vunpack.c.l.b16 %v366
      %v406 = vunpack.c.l.b16 %v367
      %v407 = vunpack.c.l.b16 %v368
      %v408 = vunpack.c.l.b16 %v369
      %v409 = vunpack.c.l.b16 %v370
      %v410 = vunpack.c.l.b16 %v371
      %v411 = vunpack.c.l.b16 %v372
      %v412 = vunpack.c.l.b16 %v373
      %v413 = vunpack.c.l.b16 %v374
      %v414 = vunpack.c.l.b16 %v375
      %v415 = vunpack.c.l.b16 %v376
      %v416 = vunpack.c.l.b16 %v377
      %v417 = vunpack.c.l.b16 %v378
      %v418 = vunpack.c.l.b16 %v379
      %v419 = vunpack.c.l.b16 %v380
      %v420 = vunpack.c.l.b16 %v381
      %v421 = vpack.c.b16 %v406, %v405
      %v422 = vpack.c.b16 %v408, %v407
      %v423 = vpack.c.b16 %v410, %v409
      %v424 = vpack.c.b16 %v412, %v411
      %v425 = vpack.c.b16 %v414, %v413
      %v426 = vpack.c.b16 %v416, %v415
      %v427 = vpack.c.b16 %v418, %v417
      %v428 = vpack.c.b16 %v420, %v419
      %437 = vmatprep.subr.bf16.mxu0 0
      %438 = vmatpush1.bf16.msra.mxu0 %v421
      %439 = vmatprep.subr.bf16.mxu0 0
      %440 = vmatpush1.bf16.msra.mxu0 %v422
      %441 = vmatprep.subr.bf16.mxu0 0
      %442 = vmatpush1.bf16.msra.mxu0 %v423
      %443 = vmatprep.subr.bf16.mxu0 0
      %444 = vmatpush1.bf16.msra.mxu0 %v424
      %445 = vmatprep.subr.bf16.mxu0 0
      %446 = vmatpush1.bf16.msra.mxu0 %v425
      %447 = vmatprep.subr.bf16.mxu0 0
      %448 = vmatpush1.bf16.msra.mxu0 %v426
      %449 = vmatprep.subr.bf16.mxu0 0
      %450 = vmatpush1.bf16.msra.mxu0 %v427
      %451 = vmatprep.subr.bf16.mxu0 0
      %452 = vmatpush1.bf16.msra.mxu0 %v428
      %453 = vmatprep.subr.bf16.mxu0 0
      %454 = vmatpush1.bf16.msra.mxu0 0
      %455 = vmatprep.subr.bf16.mxu0 0
      %456 = vmatpush1.bf16.msra.mxu0 0
      %457 = vmatprep.subr.bf16.mxu0 0
      %458 = vmatpush1.bf16.msra.mxu0 0
      %459 = vmatprep.subr.bf16.mxu0 0
      %460 = vmatpush1.bf16.msra.mxu0 0
      %461 = vmatprep.subr.bf16.mxu0 0
      %462 = vmatpush1.bf16.msra.mxu0 0
      %463 = vmatprep.subr.bf16.mxu0 0
      %464 = vmatpush1.bf16.msra.mxu0 0
      %465 = vmatprep.subr.bf16.mxu0 0
      %466 = vmatpush1.bf16.msra.mxu0 0
      %467 = vmatprep.subr.bf16.mxu0 0
      %468 = vmatpush1.bf16.msra.mxu0 0
      %469 = vmatprep.mubr.bf16.mxu0 0
      %470 = vmatmul.mubr.bf16.gmra.mrb[0].mxu0 %v365
      %v471 = vpop.f32.mrb[0].mxu0
      %v472 = vadd.f32 %v387, %v471
      %v473 = vpop.f32.mrb[0].mxu0
      %v474 = vpop.f32.mrb[0].mxu0
      %v475 = vpop.f32.mrb[0].mxu0
      %476 = vdwg.mxu0
      %v477 = vld [vmem:[#allocation13] sm:$0x1]
      %v478 = vld [vmem:[#allocation15] sm:$0x1]
      %s479 = sld [smem:[#allocation3]]
      %vm480 = vcmask 31744
      %v481 = vsel %vm480, %v472, 0.0
      %v482 = vrot.slane %v481, 4
      %v483 = vadd.f32 %v481, %v482
      %v484 = vrot.slane %v483, 2
      %v485 = vadd.f32 %v483, %v484
      %v486 = vrot.slane %v485, 1
      %v487 = vadd.f32 %v485, %v486
      %v488 = vmul.f32 %v487, %v332
      %v489 = vsub.f32 %v472, %v488
      %v490 = vmul.f32 %v489, %v489
      %v491 = vsel %vm480, %v490, 0.0
      %v492 = vrot.slane %v491, 4
      %v493 = vadd.f32 %v491, %v492
      %v494 = vrot.slane %v493, 2
      %v495 = vadd.f32 %v493, %v494
      %v496 = vrot.slane %v495, 1
      %v497 = vadd.f32 %v495, %v496
      %v498 = vmul.f32 %v497, %v332
      %v499 = vadd.f32 %v498, 1e-05
      %v500 = vrsqrt.pop %v499
      %v501 = vmul.f32 %v489, %v500
      %v503 = vlaneseq
      %v504 = vshrl.u32 %v503, 7
      %v505 = vsub.s32 0, %v504
      %v506 = vrot.slane %v477, %v505
      %v508 = vmul.f32 %v501, %v506
      %v510 = vlaneseq
      %v511 = vshrl.u32 %v510, 7
      %v512 = vsub.s32 0, %v511
      %v513 = vrot.slane %v478, %v512
      %v515 = vadd.f32 %v508, %v513
      %vm516 = vcmp.ge.f32.partialorder %v515, 0.0
      %v517 = vstv %s479
      %v518 = vmul.f32 %v517, %v515
      %v519 = vsel %vm516, %v515, %v518
      %v520 = vsel %vm480, %v519, -inf
      %521 = vmax.xlane.f32.xlu0 %v520
      %v522 = vpop.xlane.xlu0 %521
      %v523 = vsub.f32 %v519, %v522
      %v524 = vmul.f32 %v523, 1.442695
      %v525 = vpow.pop %v524
      %v526 = vsel %vm480, %v525, 0.0
      %527 = vadd.xlane.f32.xlu0 %v526
      %v528 = vpop.xlane.xlu0 %527
      %v529 = vrcp.pop %v528
      %v530 = vmul.f32 %v525, %v529
      %531 = vst.msk [vmem:[%s12] sm:$0xff] %vm480, %v530
    $region81: #{groupface_forward.6} parent=1 // pred_fallthru
      _
    // Predicated region
    $region82: #{groupface_forward.6} parent=1 // pred_check
      _
    $region83: #{groupface_forward.6} parent=1 // pred_check_branch
      %533 = sbr.rel (0) target = $region85
    $region84: #{groupface_forward.6} parent=1 // pred_region
      %s535 = ssub.s32 128, 128
      %536 = vsyncadd [#allocation6], %s535
      %s538 = sshll.u32 [#allocation16], 4
      %s539 = int_to_ptr.vmem [resolvable:$true] %s538
      %541 = dma.vmem_to_hbm [thread:$0]  %s539, 128, %s11, [#allocation6]
    $region85: #{groupface_forward.6} parent=1 // pred_fallthru
      _
    // Predicated region
    $region86: #{groupface_forward.6} parent=1 // pred_check
      _
    $region87: #{groupface_forward.6} parent=1 // pred_check_branch
      %543 = sbr.rel (0) target = $region89
    $region88: #{groupface_forward.6} parent=1 // pred_region
      _
    $region89: #{groupface_forward.6} parent=1 // pred_fallthru
      _
    // Predicated region
    $region90: #{groupface_forward.6} parent=1 // pred_check
      _
    $region91: #{groupface_forward.6} parent=1 // pred_check_branch
      %545 = sbr.rel (0) target = $region93
    $region92: #{groupface_forward.6} parent=1 // pred_region
      %546 = dma.done [#allocation6], 128
    $region93: #{groupface_forward.6} parent=1 // pred_fallthru
      _
    // Predicated region
    $region94: #{groupface_forward.6} parent=1 // pred_check
      _
    $region95: #{groupface_forward.6} parent=1 // pred_check_branch
      %548 = sbr.rel (0) target = $region97
    $region96: #{groupface_forward.6} parent=1 // pred_region
      _
    $region97: #{groupface_forward.6} parent=1 // pred_fallthru
      _
    %549 = vsyncpa [#allocation5], 1
    %550 = vsyncpa [#allocation8], 1
    %551 = vsyncpa [#allocation11], 1
    %552 = vsyncpa [#allocation14], 1
    %553 = vsyncpa [#allocation6], 1

// kernel: groupface_forward.5
$region0: #{groupface_forward.5}
  #allocation0 [shape = 'u32[]', space=smem, size = 0x4, offset = 0x4, fixed_abs, tag = 'smem constant byte address 0x4 - core index']
  #allocation1 [shape = 'u32[144,128]{1,0:T(1,128)}', space=vmem, size = 0x12000, scoped, tag = 'internal scratch']
  #allocation2 [shape = 'f32[1]{0:T(128)S(6)}', space=smem, size = 0x200, scoped, tag = 'scoped memory for groupface_forward.5']
  %s0 = inlined_call_operand.hbm [shape: bf16[8,1024], index: 0, kind: input, shape index: {}]
  %s1 = inlined_call_operand.hbm [shape: bf16[1024,256], index: 1, kind: input, shape index: {}]
  %s2 = inlined_call_operand.hbm [shape: f32[1,256], index: 2, kind: input, shape index: {}]
  %s3 = inlined_call_operand.hbm [shape: f32[1,256], index: 3, kind: input, shape index: {}]
  %s4 = inlined_call_operand.hbm [shape: f32[1,256], index: 4, kind: input, shape index: {}]
  %s5 = inlined_call_operand.<no memory space> [shape: f32[1], index: 5, kind: input, shape index: {}]
  %s6 = inlined_call_operand.vmem [shape: f32[8,256], index: 6, kind: output, shape index: {0}]
  %s7 = inlined_call_operand.vmem [shape: bf16[8,256], index: 7, kind: output, shape index: {1}]
  %8 = xla_tuple %s6, %s7
  %s9 = sld [smem:[#allocation0]]
  $region93: #{groupface_forward.5} parent=0
    _
  %s11 = ssub.s32 1, %s9
  %s12 = scalar_select 0, %s11, %s9
  %13 = sst [smem:[#allocation2]] %s5
  $region1: #{groupface_forward.5} parent=0
    #allocation3 [shape = 'u8[16384]{0}', space=vmem, size = 0x4000, scoped, tag = 'input window, operand 0, single buffered']
    #allocation4 [shape = 's32[2]{0}', space=sflag, size = 0x8, scoped, tag = 'scoped memory for groupface_forward.5']
    #allocation5 [shape = 'u8[524288]{0}', space=vmem, size = 0x80000, scoped, tag = 'input window, operand 1']
    #allocation6 [shape = 's32[2]{0}', space=sflag, size = 0x8, scoped, tag = 'scoped memory for groupface_forward.5']
    #allocation7 [shape = 'u8[1024]{0}', space=vmem, size = 0x400, scoped, tag = 'input window, operand 2']
    #allocation8 [shape = 'u8[1024]{0}', space=vmem, size = 0x400, scoped, tag = 'input window, operand 3']
    #allocation9 [shape = 's32[2]{0}', space=sflag, size = 0x8, scoped, tag = 'scoped memory for groupface_forward.5']
    #allocation10 [shape = 'u8[1024]{0}', space=vmem, size = 0x400, scoped, tag = 'input window, operand 4']
    %14 = vsyncpa [#allocation4], 0
    %15 = vsyncpa [#allocation6], 0
    %s16 = scalar_lea.sflag [#allocation6], 1
    %17 = vsyncpa %s16, 0
    %18 = vsyncpa [#allocation9], 0
    %s19 = scalar_lea.sflag [#allocation9], 1
    %20 = vsyncpa %s19, 0
    loop: start=0, step=1, limit=4
    $region2: #{groupface_forward.5} parent=1 // loop_pre_header
      _
    $region3: #{groupface_forward.5} parent=1 // loop_header
      %s22 = sphi 0, %s26
      %p23 = scmp.ge.s32.totalorder %s22, 4
      %s29 = sphi 0, %s41
      %s30 = sphi 0, %s37
      %s31 = sphi 0, %s29
      %s32 = sphi 0, %s30
      %s33 = sphi 0, %s31
      %s34 = sphi 0, %s32
      %s44 = sphi 0, %s46
      %s47 = sphi 0, %s44
      %s48 = sphi 0, %s47
      %s64 = sphi 0, %s48
      %s72 = sphi 0, %s74
      %s75 = sphi 0, %s72
      %s76 = sphi 0, %s75
      %s92 = sphi 0, %s76
      %s98 = sphi 0, %s100
      %s101 = sphi 0, %s98
      %s102 = sphi 0, %s101
      %s118 = sphi 0, %s102
      %s124 = sphi 0, %s126
      %s127 = sphi 0, %s124
      %s128 = sphi 0, %s127
      %s144 = sphi 0, %s128
      %s150 = sphi 0, %s152
      %s153 = sphi 0, %s150
      %s154 = sphi 0, %s153
      %s170 = sphi 0, %s154
      %s174 = sphi 0, %s174
      %s176 = sphi 0, %s174
      %s177 = sphi 0, %s176
      %s191 = sphi 0, %s177
      %s197 = sphi 0, %s199
      %s200 = sphi 0, %s197
      %s201 = sphi 0, %s200
      %s217 = sphi 0, %s201
      %s223 = sphi 0, %s225
      %s226 = sphi 0, %s223
      %s227 = sphi 0, %s226
      %s243 = sphi 0, %s227
    $region4: #{groupface_forward.5} parent=1 // loop_header_branch
      %25 = sbr.rel (%p23) target = $region8
    $region5: #{groupface_forward.5} parent=1 // loop_body
      %s27 = ssub.s32 %s22, 1
      %s28 = ssub.s32 %s22, 2
      %s35 = sadd.s32 1, %s30
      %p36 = scmp.ge.s32.totalorder %s35, 1
      %s37 = scalar_select %p36, 0, %s35
      %s38 = sadd.s32 1, %s29
      %s39 = scalar_select %p36, %s38, %s29
      %p40 = scmp.ge.s32.totalorder %s39, 2
      %s41 = scalar_select %p40, 0, %s39
      %s42 = ssub.s32 %s30, %s37
      %p43 = scmp.eq.s32.totalorder %s42, 0
      %s45 = sadd.s32 %s44, 1
      %s46 = scalar_select %p43, %s44, %s45
      %p49 = pneg %p43
      %p50 = scmp.eq.s32.totalorder %s22, 1
      %p51 = por %p49, %p50
      %p52 = scmp.ne.s32.totalorder %s44, %s47
      %p53 = scmp.eq.s32.totalorder %s22, 0
      %p54 = por %p52, %p53
      %p55 = scmp.ne.s32.totalorder %s44, %s47
      %p56 = scmp.eq.s32.totalorder %s27, 1
      %p57 = por %p55, %p56
      %p58 = scmp.ne.s32.totalorder %s47, %s48
      %p59 = scmp.eq.s32.totalorder %s27, 0
      %p60 = por %p58, %p59
      %p61 = scmp.ne.s32.totalorder %s47, %s48
      %p62 = scmp.eq.s32.totalorder %s28, 1
      %p63 = por %p61, %p62
      %p65 = scmp.ne.s32.totalorder %s48, %s64
      %p66 = scmp.eq.s32.totalorder %s28, 0
      %p67 = por %p65, %p66
      %s68 = ssub.s32 %s30, %s37
      %s69 = ssub.s32 %s29, %s41
      %s70 = sor.u32 %s68, %s69
      %p71 = scmp.eq.s32.totalorder %s70, 0
      %s73 = sadd.s32 %s72, 1
      %s74 = scalar_select %p71, %s72, %s73
      %p77 = pneg %p71
      %p78 = scmp.eq.s32.totalorder %s22, 1
      %p79 = por %p77, %p78
      %p80 = scmp.ne.s32.totalorder %s72, %s75
      %p81 = scmp.eq.s32.totalorder %s22, 0
      %p82 = por %p80, %p81
      %p83 = scmp.ne.s32.totalorder %s72, %s75
      %p84 = scmp.eq.s32.totalorder %s27, 1
      %p85 = por %p83, %p84
      %p86 = scmp.ne.s32.totalorder %s75, %s76
      %p87 = scmp.eq.s32.totalorder %s27, 0
      %p88 = por %p86, %p87
      %p89 = scmp.ne.s32.totalorder %s75, %s76
      %p90 = scmp.eq.s32.totalorder %s28, 1
      %p91 = por %p89, %p90
      %p93 = scmp.ne.s32.totalorder %s76, %s92
      %p94 = scmp.eq.s32.totalorder %s28, 0
      %p95 = por %p93, %p94
      %s96 = ssub.s32 %s29, %s41
      %p97 = scmp.eq.s32.totalorder %s96, 0
      %s99 = sadd.s32 %s98, 1
      %s100 = scalar_select %p97, %s98, %s99
      %p103 = pneg %p97
      %p104 = scmp.eq.s32.totalorder %s22, 1
      %p105 = por %p103, %p104
      %p106 = scmp.ne.s32.totalorder %s98, %s101
      %p107 = scmp.eq.s32.totalorder %s22, 0
      %p108 = por %p106, %p107
      %p109 = scmp.ne.s32.totalorder %s98, %s101
      %p110 = scmp.eq.s32.totalorder %s27, 1
      %p111 = por %p109, %p110
      %p112 = scmp.ne.s32.totalorder %s101, %s102
      %p113 = scmp.eq.s32.totalorder %s27, 0
      %p114 = por %p112, %p113
      %p115 = scmp.ne.s32.totalorder %s101, %s102
      %p116 = scmp.eq.s32.totalorder %s28, 1
      %p117 = por %p115, %p116
      %p119 = scmp.ne.s32.totalorder %s102, %s118
      %p120 = scmp.eq.s32.totalorder %s28, 0
      %p121 = por %p119, %p120
      %s122 = ssub.s32 %s29, %s41
      %p123 = scmp.eq.s32.totalorder %s122, 0
      %s125 = sadd.s32 %s124, 1
      %s126 = scalar_select %p123, %s124, %s125
      %p129 = pneg %p123
      %p130 = scmp.eq.s32.totalorder %s22, 1
      %p131 = por %p129, %p130
      %p132 = scmp.ne.s32.totalorder %s124, %s127
      %p133 = scmp.eq.s32.totalorder %s22, 0
      %p134 = por %p132, %p133
      %p135 = scmp.ne.s32.totalorder %s124, %s127
      %p136 = scmp.eq.s32.totalorder %s27, 1
      %p137 = por %p135, %p136
      %p138 = scmp.ne.s32.totalorder %s127, %s128
      %p139 = scmp.eq.s32.totalorder %s27, 0
      %p140 = por %p138, %p139
      %p141 = scmp.ne.s32.totalorder %s127, %s128
      %p142 = scmp.eq.s32.totalorder %s28, 1
      %p143 = por %p141, %p142
      %p145 = scmp.ne.s32.totalorder %s128, %s144
      %p146 = scmp.eq.s32.totalorder %s28, 0
      %p147 = por %p145, %p146
      %s148 = ssub.s32 %s29, %s41
      %p149 = scmp.eq.s32.totalorder %s148, 0
      %s151 = sadd.s32 %s150, 1
      %s152 = scalar_select %p149, %s150, %s151
      %p155 = pneg %p149
      %p156 = scmp.eq.s32.totalorder %s22, 1
      %p157 = por %p155, %p156
      %p158 = scmp.ne.s32.totalorder %s150, %s153
      %p159 = scmp.eq.s32.totalorder %s22, 0
      %p160 = por %p158, %p159
      %p161 = scmp.ne.s32.totalorder %s150, %s153
      %p162 = scmp.eq.s32.totalorder %s27, 1
      %p163 = por %p161, %p162
      %p164 = scmp.ne.s32.totalorder %s153, %s154
      %p165 = scmp.eq.s32.totalorder %s27, 0
      %p166 = por %p164, %p165
      %p167 = scmp.ne.s32.totalorder %s153, %s154
      %p168 = scmp.eq.s32.totalorder %s28, 1
      %p169 = por %p167, %p168
      %p171 = scmp.ne.s32.totalorder %s154, %s170
      %p172 = scmp.eq.s32.totalorder %s28, 0
      %p173 = por %p171, %p172
      %s175 = sadd.s32 %s174, 1
      %p178 = scmp.eq.s32.totalorder %s22, 1
      %p179 = scmp.ne.s32.totalorder %s174, %s176
      %p180 = scmp.eq.s32.totalorder %s22, 0
      %p181 = por %p179, %p180
      %p182 = scmp.ne.s32.totalorder %s174, %s176
      %p183 = scmp.eq.s32.totalorder %s27, 1
      %p184 = por %p182, %p183
      %p185 = scmp.ne.s32.totalorder %s176, %s177
      %p186 = scmp.eq.s32.totalorder %s27, 0
      %p187 = por %p185, %p186
      %p188 = scmp.ne.s32.totalorder %s176, %s177
      %p189 = scmp.eq.s32.totalorder %s28, 1
      %p190 = por %p188, %p189
      %p192 = scmp.ne.s32.totalorder %s177, %s191
      %p193 = scmp.eq.s32.totalorder %s28, 0
      %p194 = por %p192, %p193
      %s195 = ssub.s32 %s29, %s41
      %p196 = scmp.eq.s32.totalorder %s195, 0
      %s198 = sadd.s32 %s197, 1
      %s199 = scalar_select %p196, %s197, %s198
      %p202 = pneg %p196
      %p203 = scmp.eq.s32.totalorder %s22, 1
      %p204 = por %p202, %p203
      %p205 = scmp.ne.s32.totalorder %s197, %s200
      %p206 = scmp.eq.s32.totalorder %s22, 0
      %p207 = por %p205, %p206
      %p208 = scmp.ne.s32.totalorder %s197, %s200
      %p209 = scmp.eq.s32.totalorder %s27, 1
      %p210 = por %p208, %p209
      %p211 = scmp.ne.s32.totalorder %s200, %s201
      %p212 = scmp.eq.s32.totalorder %s27, 0
      %p213 = por %p211, %p212
      %p214 = scmp.ne.s32.totalorder %s200, %s201
      %p215 = scmp.eq.s32.totalorder %s28, 1
      %p216 = por %p214, %p215
      %p218 = scmp.ne.s32.totalorder %s201, %s217
      %p219 = scmp.eq.s32.totalorder %s28, 0
      %p220 = por %p218, %p219
      %s221 = ssub.s32 %s29, %s41
      %p222 = scmp.eq.s32.totalorder %s221, 0
      %s224 = sadd.s32 %s223, 1
      %s225 = scalar_select %p222, %s223, %s224
      %p228 = pneg %p222
      %p229 = scmp.eq.s32.totalorder %s22, 1
      %p230 = por %p228, %p229
      %p231 = scmp.ne.s32.totalorder %s223, %s226
      %p232 = scmp.eq.s32.totalorder %s22, 0
      %p233 = por %p231, %p232
      %p234 = scmp.ne.s32.totalorder %s223, %s226
      %p235 = scmp.eq.s32.totalorder %s27, 1
      %p236 = por %p234, %p235
      %p237 = scmp.ne.s32.totalorder %s226, %s227
      %p238 = scmp.eq.s32.totalorder %s27, 0
      %p239 = por %p237, %p238
      %p240 = scmp.ne.s32.totalorder %s226, %s227
      %p241 = scmp.eq.s32.totalorder %s28, 1
      %p242 = por %p240, %p241
      %p244 = scmp.ne.s32.totalorder %s227, %s243
      %p245 = scmp.eq.s32.totalorder %s28, 0
      %p246 = por %p244, %p245
      %p247 = scmp.le.s32.totalorder 1, %s22
      %p248 = scmp.lt.s32.totalorder %s22, 3
      %p249 = pnand %p247, %p248
      %p250 = pneg %p249
      // Predicated region
      $region9: #{groupface_forward.5} parent=5 // pred_check
        _
      $region10: #{groupface_forward.5} parent=5 // pred_check_branch
        %252 = sbr.rel (%p249) target = $region12
      $region11: #{groupface_forward.5} parent=5 // pred_region
        %s253 = ssub.s32 %s22, 1
        // Predicated region
        $region13: #{groupface_forward.5} parent=11 // pred_check
          %p254 = pneg %p60
        $region14: #{groupface_forward.5} parent=11 // pred_check_branch
          %256 = sbr.rel (%p254) target = $region16
        $region15: #{groupface_forward.5} parent=11 // pred_region
          %s257 = smul.u32 8, %s32
          %s259 = ssub.s32 512, 512
          %260 = vsyncadd [#allocation4], %s259
          %s261 = smul.addr %s257, 64
          %s262 = scalar_lea.hbm %s0, %s261
          %s264 = sshll.u32 [#allocation3], 4
          %s265 = int_to_ptr.vmem [resolvable:$true] %s264
          %267 = dma.hbm_to_vmem [thread:$0]  %s262, 512, %s265, [#allocation4]
        $region16: #{groupface_forward.5} parent=11 // pred_fallthru
          _
        // Predicated region
        $region17: #{groupface_forward.5} parent=11 // pred_check
          %p268 = pneg %p187
        $region18: #{groupface_forward.5} parent=11 // pred_check_branch
          %270 = sbr.rel (%p268) target = $region20
        $region19: #{groupface_forward.5} parent=11 // pred_region
          _
        $region20: #{groupface_forward.5} parent=11 // pred_fallthru
          _
      $region12: #{groupface_forward.5} parent=5 // pred_fallthru
        _
      %p271 = scmp.lt.s32.totalorder %s22, 2
      // Predicated region
      $region21: #{groupface_forward.5} parent=5 // pred_check
        %p272 = pneg %p271
      $region22: #{groupface_forward.5} parent=5 // pred_check_branch
        %274 = sbr.rel (%p272) target = $region24
      $region23: #{groupface_forward.5} parent=5 // pred_region
        // Predicated region
        $region25: #{groupface_forward.5} parent=23 // pred_check
          %p275 = pneg %p82
        $region26: #{groupface_forward.5} parent=23 // pred_check_branch
          %277 = sbr.rel (%p275) target = $region28
        $region27: #{groupface_forward.5} parent=23 // pred_region
          %s278 = sand.u32 %s22, 1
          %s279 = scalar_lea.sflag [#allocation6], %s278
          %s280 = sand.u32 %s72, 1
          %s281 = smul.addr %s280, 512
          %s282 = scalar_lea.vmem [#allocation5], %s281
          %s283 = smul.u32 128, %s30
          %s285 = ssub.s32 8192, 8192
          %286 = vsyncadd %s279, %s285
          %s287 = smul.addr %s283, 2
          %s288 = sadd.s32 %s29, %s287
          %s289 = smul.addr %s288, 64
          %s290 = scalar_lea.hbm %s1, %s289
          %s291 = sshll.u32 %s282, 4
          %s292 = int_to_ptr.vmem [resolvable:$true] %s291
          %297 = dma.hbm_to_vmem [thread:$0]  %s290, 8192, %s292, %s279, 128, 64, 4
        $region28: #{groupface_forward.5} parent=23 // pred_fallthru
          _
        // Predicated region
        $region29: #{groupface_forward.5} parent=23 // pred_check
          %p298 = pneg %p108
        $region30: #{groupface_forward.5} parent=23 // pred_check_branch
          %300 = sbr.rel (%p298) target = $region32
        $region31: #{groupface_forward.5} parent=23 // pred_region
          %s301 = sand.u32 %s22, 1
          %s302 = scalar_lea.sflag [#allocation6], %s301
          %s303 = sand.u32 %s98, 1
          %s304 = scalar_lea.vmem [#allocation7], %s303
          %s306 = ssub.s32 16, 16
          %307 = vsyncadd %s302, %s306
          %s308 = smul.addr %s29, 16
          %s309 = scalar_lea.hbm %s2, %s308
          %s311 = sshll.u32 %s304, 4
          %s312 = int_to_ptr.vmem [resolvable:$true] %s311
          %314 = dma.hbm_to_vmem [thread:$0]  %s309, 16, %s312, %s302
        $region32: #{groupface_forward.5} parent=23 // pred_fallthru
          _
        // Predicated region
        $region33: #{groupface_forward.5} parent=23 // pred_check
          %p315 = pneg %p134
        $region34: #{groupface_forward.5} parent=23 // pred_check_branch
          %317 = sbr.rel (%p315) target = $region36
        $region35: #{groupface_forward.5} parent=23 // pred_region
          %s318 = sand.u32 %s22, 1
          %s319 = scalar_lea.sflag [#allocation9], %s318
          %s320 = sand.u32 %s124, 1
          %s321 = scalar_lea.vmem [#allocation8], %s320
          %s323 = ssub.s32 16, 16
          %324 = vsyncadd %s319, %s323
          %s325 = smul.addr %s29, 16
          %s326 = scalar_lea.hbm %s3, %s325
          %s328 = sshll.u32 %s321, 4
          %s329 = int_to_ptr.vmem [resolvable:$true] %s328
          %331 = dma.hbm_to_vmem [thread:$0]  %s326, 16, %s329, %s319
        $region36: #{groupface_forward.5} parent=23 // pred_fallthru
          _
        // Predicated region
        $region37: #{groupface_forward.5} parent=23 // pred_check
          %p332 = pneg %p160
        $region38: #{groupface_forward.5} parent=23 // pred_check_branch
          %334 = sbr.rel (%p332) target = $region40
        $region39: #{groupface_forward.5} parent=23 // pred_region
          %s335 = sand.u32 %s22, 1
          %s336 = scalar_lea.sflag [#allocation9], %s335
          %s337 = sand.u32 %s150, 1
          %s338 = scalar_lea.vmem [#allocation10], %s337
          %s340 = ssub.s32 16, 16
          %341 = vsyncadd %s336, %s340
          %s342 = smul.addr %s29, 16
          %s343 = scalar_lea.hbm %s4, %s342
          %s345 = sshll.u32 %s338, 4
          %s346 = int_to_ptr.vmem [resolvable:$true] %s345
          %348 = dma.hbm_to_vmem [thread:$0]  %s343, 16, %s346, %s336
        $region40: #{groupface_forward.5} parent=23 // pred_fallthru
          _
      $region24: #{groupface_forward.5} parent=5 // pred_fallthru
        _
      %p349 = scmp.le.s32.totalorder 1, %s22
      %p350 = scmp.lt.s32.totalorder %s22, 3
      %p351 = pnand %p349, %p350
      %p352 = pneg %p351
      // Predicated region
      $region41: #{groupface_forward.5} parent=5 // pred_check
        _
      $region42: #{groupface_forward.5} parent=5 // pred_check_branch
        %354 = sbr.rel (%p351) target = $region44
      $region43: #{groupface_forward.5} parent=5 // pred_region
        %s355 = ssub.s32 %s22, 1
        // Predicated region
        $region45: #{groupface_forward.5} parent=43 // pred_check
          %p356 = pneg %p60
        $region46: #{groupface_forward.5} parent=43 // pred_check_branch
          %358 = sbr.rel (%p356) target = $region48
        $region47: #{groupface_forward.5} parent=43 // pred_region
          %359 = dma.done [#allocation4], 512
        $region48: #{groupface_forward.5} parent=43 // pred_fallthru
          _
        %s360 = sand.u32 %s27, 1
        %s361 = scalar_lea.sflag [#allocation6], %s360
        %s362 = sand.u32 %s75, 1
        %s363 = smul.addr %s362, 512
        %s364 = scalar_lea.vmem [#allocation5], %s363
        // Predicated region
        $region49: #{groupface_forward.5} parent=43 // pred_check
          %p365 = pneg %p88
        $region50: #{groupface_forward.5} parent=43 // pred_check_branch
          %367 = sbr.rel (%p365) target = $region52
        $region51: #{groupface_forward.5} parent=43 // pred_region
          %368 = dma.done %s361, 8192
        $region52: #{groupface_forward.5} parent=43 // pred_fallthru
          _
        %s369 = sand.u32 %s27, 1
        %s370 = scalar_lea.sflag [#allocation6], %s369
        %s371 = sand.u32 %s101, 1
        %s372 = scalar_lea.vmem [#allocation7], %s371
        // Predicated region
        $region53: #{groupface_forward.5} parent=43 // pred_check
          %p373 = pneg %p114
        $region54: #{groupface_forward.5} parent=43 // pred_check_branch
          %375 = sbr.rel (%p373) target = $region56
        $region55: #{groupface_forward.5} parent=43 // pred_region
          %376 = dma.done %s370, 16
        $region56: #{groupface_forward.5} parent=43 // pred_fallthru
          _
        %s377 = sand.u32 %s27, 1
        %s378 = scalar_lea.sflag [#allocation9], %s377
        %s379 = sand.u32 %s127, 1
        %s380 = scalar_lea.vmem [#allocation8], %s379
        // Predicated region
        $region57: #{groupface_forward.5} parent=43 // pred_check
          %p381 = pneg %p140
        $region58: #{groupface_forward.5} parent=43 // pred_check_branch
          %383 = sbr.rel (%p381) target = $region60
        $region59: #{groupface_forward.5} parent=43 // pred_region
          %384 = dma.done %s378, 16
        $region60: #{groupface_forward.5} parent=43 // pred_fallthru
          _
        %s385 = sand.u32 %s27, 1
        %s386 = scalar_lea.sflag [#allocation9], %s385
        %s387 = sand.u32 %s153, 1
        %s388 = scalar_lea.vmem [#allocation10], %s387
        // Predicated region
        $region61: #{groupface_forward.5} parent=43 // pred_check
          %p389 = pneg %p166
        $region62: #{groupface_forward.5} parent=43 // pred_check_branch
          %391 = sbr.rel (%p389) target = $region64
        $region63: #{groupface_forward.5} parent=43 // pred_region
          %392 = dma.done %s386, 16
        $region64: #{groupface_forward.5} parent=43 // pred_fallthru
          _
        %p393 = pneg %p60
        %p394 = pneg %p57
        %s395 = sand.u32 %s27, 1
        %s396 = scalar_lea.sflag [#allocation6], %s395
        %s397 = sand.u32 %s75, 1
        %s398 = smul.addr %s397, 512
        %s399 = scalar_lea.vmem [#allocation5], %s398
        %p400 = pneg %p88
        %p401 = pneg %p85
        %s402 = sand.u32 %s27, 1
        %s403 = scalar_lea.sflag [#allocation6], %s402
        %s404 = sand.u32 %s101, 1
        %s405 = scalar_lea.vmem [#allocation7], %s404
        %p406 = pneg %p114
        %p407 = pneg %p111
        %s408 = sand.u32 %s27, 1
        %s409 = scalar_lea.sflag [#allocation9], %s408
        %s410 = sand.u32 %s127, 1
        %s411 = scalar_lea.vmem [#allocation8], %s410
        %p412 = pneg %p140
        %p413 = pneg %p137
        %s414 = sand.u32 %s27, 1
        %s415 = scalar_lea.sflag [#allocation9], %s414
        %s416 = sand.u32 %s153, 1
        %s417 = scalar_lea.vmem [#allocation10], %s416
        %p418 = pneg %p166
        %p419 = pneg %p163
        %p420 = pneg %p187
        %p421 = pneg %p184
        %p422 = pneg %p213
        %p423 = pneg %p210
        %p424 = scmp.lt.s32.totalorder %s31, 1
        %s425 = scalar_select %p424, %s31, 1
        %s426 = smul.addr %s425, 8
        %s427 = scalar_lea.vmem %s6, %s426
        %p428 = pneg %p239
        %p429 = pneg %p236
        %p430 = scmp.lt.s32.totalorder %s31, 1
        %s431 = scalar_select %p430, %s31, 1
        %s432 = smul.addr %s431, 4
        %s433 = scalar_lea.vmem %s7, %s432
        %s434 = smul.u32 8, %s32
        %s435 = smul.u32 128, %s32
        %p436 = scmp.lt.s32.totalorder %s31, 1
        %s437 = scalar_select %p436, %s31, 1
        %s438 = smul.addr %s437, 8
        %s439 = scalar_lea.vmem %s6, %s438
        %p440 = scmp.lt.s32.totalorder %s31, 1
        %s441 = scalar_select %p440, %s31, 1
        %s442 = smul.addr %s441, 4
        %s443 = scalar_lea.vmem %s7, %s442
        %p445 = scmp.eq.s32.totalorder %s32, 0
        // Predicated region
        $region65: #{groupface_forward.5} parent=43 // pred_check
          %p446 = pneg %p445
        $region66: #{groupface_forward.5} parent=43 // pred_check_branch
          %448 = sbr.rel (%p446) target = $region68
        $region67: #{groupface_forward.5} parent=43 // pred_region
          %449 = vst [vmem:[%s439] sm:$0xff] 0.0
        $region68: #{groupface_forward.5} parent=43 // pred_fallthru
          _
        %v450 = vld [vmem:[%s439] sm:$0xff]
        %v451 = vld [vmem:[#allocation3] sm:$0xff]
        %v452 = vld [vmem:[#allocation3 + $0x8] sm:$0xff]
        %v453 = vld [vmem:[#allocation3 + $0x10] sm:$0xff]
        %v454 = vld [vmem:[#allocation3 + $0x18] sm:$0xff]
        %v455 = vld [vmem:[%s364] sm:$0xf]
        %v456 = vld [vmem:[%s364 + $0x4] sm:$0xf]
        %v457 = vld [vmem:[%s364 + $0x8] sm:$0xf]
        %v458 = vld [vmem:[%s364 + $0xc] sm:$0xf]
        %v459 = vld [vmem:[%s364 + $0x10] sm:$0xf]
        %v460 = vld [vmem:[%s364 + $0x14] sm:$0xf]
        %v461 = vld [vmem:[%s364 + $0x18] sm:$0xf]
        %v462 = vld [vmem:[%s364 + $0x1c] sm:$0xf]
        %v463 = vld [vmem:[%s364 + $0x20] sm:$0xf]
        %v464 = vld [vmem:[%s364 + $0x24] sm:$0xf]
        %v465 = vld [vmem:[%s364 + $0x28] sm:$0xf]
        %v466 = vld [vmem:[%s364 + $0x2c] sm:$0xf]
        %v467 = vld [vmem:[%s364 + $0x30] sm:$0xf]
        %v468 = vld [vmem:[%s364 + $0x34] sm:$0xf]
        %v469 = vld [vmem:[%s364 + $0x38] sm:$0xf]
        %v470 = vld [vmem:[%s364 + $0x3c] sm:$0xf]
        %v471 = vld [vmem:[%s364 + $0x40] sm:$0xf]
        %v472 = vld [vmem:[%s364 + $0x44] sm:$0xf]
        %v473 = vld [vmem:[%s364 + $0x48] sm:$0xf]
        %v474 = vld [vmem:[%s364 + $0x4c] sm:$0xf]
        %v475 = vld [vmem:[%s364 + $0x50] sm:$0xf]
        %v476 = vld [vmem:[%s364 + $0x54] sm:$0xf]
        %v477 = vld [vmem:[%s364 + $0x58] sm:$0xf]
        %v478 = vld [vmem:[%s364 + $0x5c] sm:$0xf]
        %v479 = vld [vmem:[%s364 + $0x60] sm:$0xf]
        %v480 = vld [vmem:[%s364 + $0x64] sm:$0xf]
        %v481 = vld [vmem:[%s364 + $0x68] sm:$0xf]
        %v482 = vld [vmem:[%s364 + $0x6c] sm:$0xf]
        %v483 = vld [vmem:[%s364 + $0x70] sm:$0xf]
        %v484 = vld [vmem:[%s364 + $0x74] sm:$0xf]
        %v485 = vld [vmem:[%s364 + $0x78] sm:$0xf]
        %v486 = vld [vmem:[%s364 + $0x7c] sm:$0xf]
        %v487 = vld [vmem:[%s364 + $0x80] sm:$0xf]
        %v488 = vld [vmem:[%s364 + $0x84] sm:$0xf]
        %v489 = vld [vmem:[%s364 + $0x88] sm:$0xf]
        %v490 = vld [vmem:[%s364 + $0x8c] sm:$0xf]
        %v491 = vld [vmem:[%s364 + $0x90] sm:$0xf]
        %v492 = vld [vmem:[%s364 + $0x94] sm:$0xf]
        %v493 = vld [vmem:[%s364 + $0x98] sm:$0xf]
        %v494 = vld [vmem:[%s364 + $0x9c] sm:$0xf]
        %v495 = vld [vmem:[%s364 + $0xa0] sm:$0xf]
        %v496 = vld [vmem:[%s364 + $0xa4] sm:$0xf]
        %v497 = vld [vmem:[%s364 + $0xa8] sm:$0xf]
        %v498 = vld [vmem:[%s364 + $0xac] sm:$0xf]
        %v499 = vld [vmem:[%s364 + $0xb0] sm:$0xf]
        %v500 = vld [vmem:[%s364 + $0xb4] sm:$0xf]
        %v501 = vld [vmem:[%s364 + $0xb8] sm:$0xf]
        %v502 = vld [vmem:[%s364 + $0xbc] sm:$0xf]
        %v503 = vld [vmem:[%s364 + $0xc0] sm:$0xf]
        %v504 = vld [vmem:[%s364 + $0xc4] sm:$0xf]
        %v505 = vld [vmem:[%s364 + $0xc8] sm:$0xf]
        %v506 = vld [vmem:[%s364 + $0xcc] sm:$0xf]
        %v507 = vld [vmem:[%s364 + $0xd0] sm:$0xf]
        %v508 = vld [vmem:[%s364 + $0xd4] sm:$0xf]
        %v509 = vld [vmem:[%s364 + $0xd8] sm:$0xf]
        %v510 = vld [vmem:[%s364 + $0xdc] sm:$0xf]
        %v511 = vld [vmem:[%s364 + $0xe0] sm:$0xf]
        %v512 = vld [vmem:[%s364 + $0xe4] sm:$0xf]
        %v513 = vld [vmem:[%s364 + $0xe8] sm:$0xf]
        %v514 = vld [vmem:[%s364 + $0xec] sm:$0xf]
        %v515 = vld [vmem:[%s364 + $0xf0] sm:$0xf]
        %v516 = vld [vmem:[%s364 + $0xf4] sm:$0xf]
        %v517 = vld [vmem:[%s364 + $0xf8] sm:$0xf]
        %v518 = vld [vmem:[%s364 + $0xfc] sm:$0xf]
        %v519 = vld [vmem:[%s364 + $0x100] sm:$0xf]
        %v520 = vld [vmem:[%s364 + $0x104] sm:$0xf]
        %v521 = vld [vmem:[%s364 + $0x108] sm:$0xf]
        %v522 = vld [vmem:[%s364 + $0x10c] sm:$0xf]
        %v523 = vld [vmem:[%s364 + $0x110] sm:$0xf]
        %v524 = vld [vmem:[%s364 + $0x114] sm:$0xf]
        %v525 = vld [vmem:[%s364 + $0x118] sm:$0xf]
        %v526 = vld [vmem:[%s364 + $0x11c] sm:$0xf]
        %v527 = vld [vmem:[%s364 + $0x120] sm:$0xf]
        %v528 = vld [vmem:[%s364 + $0x124] sm:$0xf]
        %v529 = vld [vmem:[%s364 + $0x128] sm:$0xf]
        %v530 = vld [vmem:[%s364 + $0x12c] sm:$0xf]
        %v531 = vld [vmem:[%s364 + $0x130] sm:$0xf]
        %v532 = vld [vmem:[%s364 + $0x134] sm:$0xf]
        %v533 = vld [vmem:[%s364 + $0x138] sm:$0xf]
        %v534 = vld [vmem:[%s364 + $0x13c] sm:$0xf]
        %v535 = vld [vmem:[%s364 + $0x140] sm:$0xf]
        %v536 = vld [vmem:[%s364 + $0x144] sm:$0xf]
        %v537 = vld [vmem:[%s364 + $0x148] sm:$0xf]
        %v538 = vld [vmem:[%s364 + $0x14c] sm:$0xf]
        %v539 = vld [vmem:[%s364 + $0x150] sm:$0xf]
        %v540 = vld [vmem:[%s364 + $0x154] sm:$0xf]
        %v541 = vld [vmem:[%s364 + $0x158] sm:$0xf]
        %v542 = vld [vmem:[%s364 + $0x15c] sm:$0xf]
        %v543 = vld [vmem:[%s364 + $0x160] sm:$0xf]
        %v544 = vld [vmem:[%s364 + $0x164] sm:$0xf]
        %v545 = vld [vmem:[%s364 + $0x168] sm:$0xf]
        %v546 = vld [vmem:[%s364 + $0x16c] sm:$0xf]
        %v547 = vld [vmem:[%s364 + $0x170] sm:$0xf]
        %v548 = vld [vmem:[%s364 + $0x174] sm:$0xf]
        %v549 = vld [vmem:[%s364 + $0x178] sm:$0xf]
        %v550 = vld [vmem:[%s364 + $0x17c] sm:$0xf]
        %v551 = vld [vmem:[%s364 + $0x180] sm:$0xf]
        %v552 = vld [vmem:[%s364 + $0x184] sm:$0xf]
        %v553 = vld [vmem:[%s364 + $0x188] sm:$0xf]
        %v554 = vld [vmem:[%s364 + $0x18c] sm:$0xf]
        %v555 = vld [vmem:[%s364 + $0x190] sm:$0xf]
        %v556 = vld [vmem:[%s364 + $0x194] sm:$0xf]
        %v557 = vld [vmem:[%s364 + $0x198] sm:$0xf]
        %v558 = vld [vmem:[%s364 + $0x19c] sm:$0xf]
        %v559 = vld [vmem:[%s364 + $0x1a0] sm:$0xf]
        %v560 = vld [vmem:[%s364 + $0x1a4] sm:$0xf]
        %v561 = vld [vmem:[%s364 + $0x1a8] sm:$0xf]
        %v562 = vld [vmem:[%s364 + $0x1ac] sm:$0xf]
        %v563 = vld [vmem:[%s364 + $0x1b0] sm:$0xf]
        %v564 = vld [vmem:[%s364 + $0x1b4] sm:$0xf]
        %v565 = vld [vmem:[%s364 + $0x1b8] sm:$0xf]
        %v566 = vld [vmem:[%s364 + $0x1bc] sm:$0xf]
        %v567 = vld [vmem:[%s364 + $0x1c0] sm:$0xf]
        %v568 = vld [vmem:[%s364 + $0x1c4] sm:$0xf]
        %v569 = vld [vmem:[%s364 + $0x1c8] sm:$0xf]
        %v570 = vld [vmem:[%s364 + $0x1cc] sm:$0xf]
        %v571 = vld [vmem:[%s364 + $0x1d0] sm:$0xf]
        %v572 = vld [vmem:[%s364 + $0x1d4] sm:$0xf]
        %v573 = vld [vmem:[%s364 + $0x1d8] sm:$0xf]
        %v574 = vld [vmem:[%s364 + $0x1dc] sm:$0xf]
        %v575 = vld [vmem:[%s364 + $0x1e0] sm:$0xf]
        %v576 = vld [vmem:[%s364 + $0x1e4] sm:$0xf]
        %v577 = vld [vmem:[%s364 + $0x1e8] sm:$0xf]
        %v578 = vld [vmem:[%s364 + $0x1ec] sm:$0xf]
        %v579 = vld [vmem:[%s364 + $0x1f0] sm:$0xf]
        %v580 = vld [vmem:[%s364 + $0x1f4] sm:$0xf]
        %v581 = vld [vmem:[%s364 + $0x1f8] sm:$0xf]
        %v582 = vld [vmem:[%s364 + $0x1fc] sm:$0xf]
        %v587 = vunpack.c.l.b16 %v451
        %v588 = vunpack.c.h.b16 %v451
        %v589 = vunpack.c.l.b16 %v452
        %v590 = vunpack.c.h.b16 %v452
        %v591 = vunpack.c.l.b16 %v453
        %v592 = vunpack.c.h.b16 %v453
        %v593 = vunpack.c.l.b16 %v454
        %v594 = vunpack.c.h.b16 %v454
        %v595 = vpack.c.b16 %v587, %v587
        %v596 = vpack.c.b16 %v588, %v588
        %v597 = vpack.c.b16 %v589, %v589
        %v598 = vpack.c.b16 %v590, %v590
        %v599 = vpack.c.b16 %v591, %v591
        %v600 = vpack.c.b16 %v592, %v592
        %v601 = vpack.c.b16 %v593, %v593
        %v602 = vpack.c.b16 %v594, %v594
        %v739 = vunpack.c.l.b16 %v455
        %v740 = vunpack.c.l.b16 %v456
        %v741 = vunpack.c.l.b16 %v457
        %v742 = vunpack.c.l.b16 %v458
        %v743 = vunpack.c.l.b16 %v459
        %v744 = vunpack.c.l.b16 %v460
        %v745 = vunpack.c.l.b16 %v461
        %v746 = vunpack.c.l.b16 %v462
        %v747 = vunpack.c.l.b16 %v463
        %v748 = vunpack.c.l.b16 %v464
        %v749 = vunpack.c.l.b16 %v465
        %v750 = vunpack.c.l.b16 %v466
        %v751 = vunpack.c.l.b16 %v467
        %v752 = vunpack.c.l.b16 %v468
        %v753 = vunpack.c.l.b16 %v469
        %v754 = vunpack.c.l.b16 %v470
        %v755 = vunpack.c.l.b16 %v471
        %v756 = vunpack.c.l.b16 %v472
        %v757 = vunpack.c.l.b16 %v473
        %v758 = vunpack.c.l.b16 %v474
        %v759 = vunpack.c.l.b16 %v475
        %v760 = vunpack.c.l.b16 %v476
        %v761 = vunpack.c.l.b16 %v477
        %v762 = vunpack.c.l.b16 %v478
        %v763 = vunpack.c.l.b16 %v479
        %v764 = vunpack.c.l.b16 %v480
        %v765 = vunpack.c.l.b16 %v481
        %v766 = vunpack.c.l.b16 %v482
        %v767 = vunpack.c.l.b16 %v483
        %v768 = vunpack.c.l.b16 %v484
        %v769 = vunpack.c.l.b16 %v485
        %v770 = vunpack.c.l.b16 %v486
        %v771 = vunpack.c.l.b16 %v487
        %v772 = vunpack.c.l.b16 %v488
        %v773 = vunpack.c.l.b16 %v489
        %v774 = vunpack.c.l.b16 %v490
        %v775 = vunpack.c.l.b16 %v491
        %v776 = vunpack.c.l.b16 %v492
        %v777 = vunpack.c.l.b16 %v493
        %v778 = vunpack.c.l.b16 %v494
        %v779 = vunpack.c.l.b16 %v495
        %v780 = vunpack.c.l.b16 %v496
        %v781 = vunpack.c.l.b16 %v497
        %v782 = vunpack.c.l.b16 %v498
        %v783 = vunpack.c.l.b16 %v499
        %v784 = vunpack.c.l.b16 %v500
        %v785 = vunpack.c.l.b16 %v501
        %v786 = vunpack.c.l.b16 %v502
        %v787 = vunpack.c.l.b16 %v503
        %v788 = vunpack.c.l.b16 %v504
        %v789 = vunpack.c.l.b16 %v505
        %v790 = vunpack.c.l.b16 %v506
        %v791 = vunpack.c.l.b16 %v507
        %v792 = vunpack.c.l.b16 %v508
        %v793 = vunpack.c.l.b16 %v509
        %v794 = vunpack.c.l.b16 %v510
        %v795 = vunpack.c.l.b16 %v511
        %v796 = vunpack.c.l.b16 %v512
        %v797 = vunpack.c.l.b16 %v513
        %v798 = vunpack.c.l.b16 %v514
        %v799 = vunpack.c.l.b16 %v515
        %v800 = vunpack.c.l.b16 %v516
        %v801 = vunpack.c.l.b16 %v517
        %v802 = vunpack.c.l.b16 %v518
        %v803 = vunpack.c.l.b16 %v519
        %v804 = vunpack.c.l.b16 %v520
        %v805 = vunpack.c.l.b16 %v521
        %v806 = vunpack.c.l.b16 %v522
        %v807 = vunpack.c.l.b16 %v523
        %v808 = vunpack.c.l.b16 %v524
        %v809 = vunpack.c.l.b16 %v525
        %v810 = vunpack.c.l.b16 %v526
        %v811 = vunpack.c.l.b16 %v527
        %v812 = vunpack.c.l.b16 %v528
        %v813 = vunpack.c.l.b16 %v529
        %v814 = vunpack.c.l.b16 %v530
        %v815 = vunpack.c.l.b16 %v531
        %v816 = vunpack.c.l.b16 %v532
        %v817 = vunpack.c.l.b16 %v533
        %v818 = vunpack.c.l.b16 %v534
        %v819 = vunpack.c.l.b16 %v535
        %v820 = vunpack.c.l.b16 %v536
        %v821 = vunpack.c.l.b16 %v537
        %v822 = vunpack.c.l.b16 %v538
        %v823 = vunpack.c.l.b16 %v539
        %v824 = vunpack.c.l.b16 %v540
        %v825 = vunpack.c.l.b16 %v541
        %v826 = vunpack.c.l.b16 %v542
        %v827 = vunpack.c.l.b16 %v543
        %v828 = vunpack.c.l.b16 %v544
        %v829 = vunpack.c.l.b16 %v545
        %v830 = vunpack.c.l.b16 %v546
        %v831 = vunpack.c.l.b16 %v547
        %v832 = vunpack.c.l.b16 %v548
        %v833 = vunpack.c.l.b16 %v549
        %v834 = vunpack.c.l.b16 %v550
        %v835 = vunpack.c.l.b16 %v551
        %v836 = vunpack.c.l.b16 %v552
        %v837 = vunpack.c.l.b16 %v553
        %v838 = vunpack.c.l.b16 %v554
        %v839 = vunpack.c.l.b16 %v555
        %v840 = vunpack.c.l.b16 %v556
        %v841 = vunpack.c.l.b16 %v557
        %v842 = vunpack.c.l.b16 %v558
        %v843 = vunpack.c.l.b16 %v559
        %v844 = vunpack.c.l.b16 %v560
        %v845 = vunpack.c.l.b16 %v561
        %v846 = vunpack.c.l.b16 %v562
        %v847 = vunpack.c.l.b16 %v563
        %v848 = vunpack.c.l.b16 %v564
        %v849 = vunpack.c.l.b16 %v565
        %v850 = vunpack.c.l.b16 %v566
        %v851 = vunpack.c.l.b16 %v567
        %v852 = vunpack.c.l.b16 %v568
        %v853 = vunpack.c.l.b16 %v569
        %v854 = vunpack.c.l.b16 %v570
        %v855 = vunpack.c.l.b16 %v571
        %v856 = vunpack.c.l.b16 %v572
        %v857 = vunpack.c.l.b16 %v573
        %v858 = vunpack.c.l.b16 %v574
        %v859 = vunpack.c.l.b16 %v575
        %v860 = vunpack.c.l.b16 %v576
        %v861 = vunpack.c.l.b16 %v577
        %v862 = vunpack.c.l.b16 %v578
        %v863 = vunpack.c.l.b16 %v579
        %v864 = vunpack.c.l.b16 %v580
        %v865 = vunpack.c.l.b16 %v581
        %v866 = vunpack.c.l.b16 %v582
        %v867 = vpack.c.b16 %v740, %v739
        %v868 = vpack.c.b16 %v742, %v741
        %v869 = vpack.c.b16 %v744, %v743
        %v870 = vpack.c.b16 %v746, %v745
        %v871 = vpack.c.b16 %v748, %v747
        %v872 = vpack.c.b16 %v750, %v749
        %v873 = vpack.c.b16 %v752, %v751
        %v874 = vpack.c.b16 %v754, %v753
        %v875 = vpack.c.b16 %v756, %v755
        %v876 = vpack.c.b16 %v758, %v757
        %v877 = vpack.c.b16 %v760, %v759
        %v878 = vpack.c.b16 %v762, %v761
        %v879 = vpack.c.b16 %v764, %v763
        %v880 = vpack.c.b16 %v766, %v765
        %v881 = vpack.c.b16 %v768, %v767
        %v882 = vpack.c.b16 %v770, %v769
        %v883 = vpack.c.b16 %v772, %v771
        %v884 = vpack.c.b16 %v774, %v773
        %v885 = vpack.c.b16 %v776, %v775
        %v886 = vpack.c.b16 %v778, %v777
        %v887 = vpack.c.b16 %v780, %v779
        %v888 = vpack.c.b16 %v782, %v781
        %v889 = vpack.c.b16 %v784, %v783
        %v890 = vpack.c.b16 %v786, %v785
        %v891 = vpack.c.b16 %v788, %v787
        %v892 = vpack.c.b16 %v790, %v789
        %v893 = vpack.c.b16 %v792, %v791
        %v894 = vpack.c.b16 %v794, %v793
        %v895 = vpack.c.b16 %v796, %v795
        %v896 = vpack.c.b16 %v798, %v797
        %v897 = vpack.c.b16 %v800, %v799
        %v898 = vpack.c.b16 %v802, %v801
        %v899 = vpack.c.b16 %v804, %v803
        %v900 = vpack.c.b16 %v806, %v805
        %v901 = vpack.c.b16 %v808, %v807
        %v902 = vpack.c.b16 %v810, %v809
        %v903 = vpack.c.b16 %v812, %v811
        %v904 = vpack.c.b16 %v814, %v813
        %v905 = vpack.c.b16 %v816, %v815
        %v906 = vpack.c.b16 %v818, %v817
        %v907 = vpack.c.b16 %v820, %v819
        %v908 = vpack.c.b16 %v822, %v821
        %v909 = vpack.c.b16 %v824, %v823
        %v910 = vpack.c.b16 %v826, %v825
        %v911 = vpack.c.b16 %v828, %v827
        %v912 = vpack.c.b16 %v830, %v829
        %v913 = vpack.c.b16 %v832, %v831
        %v914 = vpack.c.b16 %v834, %v833
        %v915 = vpack.c.b16 %v836, %v835
        %v916 = vpack.c.b16 %v838, %v837
        %v917 = vpack.c.b16 %v840, %v839
        %v918 = vpack.c.b16 %v842, %v841
        %v919 = vpack.c.b16 %v844, %v843
        %v920 = vpack.c.b16 %v846, %v845
        %v921 = vpack.c.b16 %v848, %v847
        %v922 = vpack.c.b16 %v850, %v849
        %v923 = vpack.c.b16 %v852, %v851
        %v924 = vpack.c.b16 %v854, %v853
        %v925 = vpack.c.b16 %v856, %v855
        %v926 = vpack.c.b16 %v858, %v857
        %v927 = vpack.c.b16 %v860, %v859
        %v928 = vpack.c.b16 %v862, %v861
        %v929 = vpack.c.b16 %v864, %v863
        %v930 = vpack.c.b16 %v866, %v865
        %995 = vmatprep.subr.bf16.mxu0 0
        %996 = vmatpush1.bf16.msra.mxu0 %v867
        %997 = vmatprep.subr.bf16.mxu0 0
        %998 = vmatpush1.bf16.msra.mxu0 %v868
        %999 = vmatprep.subr.bf16.mxu0 0
        %1000 = vmatpush1.bf16.msra.mxu0 %v869
        %1001 = vmatprep.subr.bf16.mxu0 0
        %1002 = vmatpush1.bf16.msra.mxu0 %v870
        %1003 = vmatprep.subr.bf16.mxu0 0
        %1004 = vmatpush1.bf16.msra.mxu0 %v871
        %1005 = vmatprep.subr.bf16.mxu0 0
        %1006 = vmatpush1.bf16.msra.mxu0 %v872
        %1007 = vmatprep.subr.bf16.mxu0 0
        %1008 = vmatpush1.bf16.msra.mxu0 %v873
        %1009 = vmatprep.subr.bf16.mxu0 0
        %1010 = vmatpush1.bf16.msra.mxu0 %v874
        %1011 = vmatprep.subr.bf16.mxu0 0
        %1012 = vmatpush1.bf16.msra.mxu0 %v875
        %1013 = vmatprep.subr.bf16.mxu0 0
        %1014 = vmatpush1.bf16.msra.mxu0 %v876
        %1015 = vmatprep.subr.bf16.mxu0 0
        %1016 = vmatpush1.bf16.msra.mxu0 %v877
        %1017 = vmatprep.subr.bf16.mxu0 0
        %1018 = vmatpush1.bf16.msra.mxu0 %v878
        %1019 = vmatprep.subr.bf16.mxu0 0
        %1020 = vmatpush1.bf16.msra.mxu0 %v879
        %1021 = vmatprep.subr.bf16.mxu0 0
        %1022 = vmatpush1.bf16.msra.mxu0 %v880
        %1023 = vmatprep.subr.bf16.mxu0 0
        %1024 = vmatpush1.bf16.msra.mxu0 %v881
        %1025 = vmatprep.subr.bf16.mxu0 0
        %1026 = vmatpush1.bf16.msra.mxu0 %v882
        %1027 = vmatprep.mubr.bf16.mxu0 %v596
        %1028 = vmatmul.mubr.bf16.gmra.mrb[0].mxu0 %v595
        %v1029 = vpop.f32.mrb[0].mxu0
        %v1030 = vadd.f32 0.0, %v1029
        %v1031 = vpop.f32.mrb[0].mxu0
        %v1032 = vpop.f32.mrb[0].mxu0
        %v1033 = vpop.f32.mrb[0].mxu0
        %1034 = vdwg.mxu0
        %1035 = vmatprep.subr.bf16.mxu0 0
        %1036 = vmatpush1.bf16.msra.mxu0 %v883
        %1037 = vmatprep.subr.bf16.mxu0 0
        %1038 = vmatpush1.bf16.msra.mxu0 %v884
        %1039 = vmatprep.subr.bf16.mxu0 0
        %1040 = vmatpush1.bf16.msra.mxu0 %v885
        %1041 = vmatprep.subr.bf16.mxu0 0
        %1042 = vmatpush1.bf16.msra.mxu0 %v886
        %1043 = vmatprep.subr.bf16.mxu0 0
        %1044 = vmatpush1.bf16.msra.mxu0 %v887
        %1045 = vmatprep.subr.bf16.mxu0 0
        %1046 = vmatpush1.bf16.msra.mxu0 %v888
        %1047 = vmatprep.subr.bf16.mxu0 0
        %1048 = vmatpush1.bf16.msra.mxu0 %v889
        %1049 = vmatprep.subr.bf16.mxu0 0
        %1050 = vmatpush1.bf16.msra.mxu0 %v890
        %1051 = vmatprep.subr.bf16.mxu0 0
        %1052 = vmatpush1.bf16.msra.mxu0 %v891
        %1053 = vmatprep.subr.bf16.mxu0 0
        %1054 = vmatpush1.bf16.msra.mxu0 %v892
        %1055 = vmatprep.subr.bf16.mxu0 0
        %1056 = vmatpush1.bf16.msra.mxu0 %v893
        %1057 = vmatprep.subr.bf16.mxu0 0
        %1058 = vmatpush1.bf16.msra.mxu0 %v894
        %1059 = vmatprep.subr.bf16.mxu0 0
        %1060 = vmatpush1.bf16.msra.mxu0 %v895
        %1061 = vmatprep.subr.bf16.mxu0 0
        %1062 = vmatpush1.bf16.msra.mxu0 %v896
        %1063 = vmatprep.subr.bf16.mxu0 0
        %1064 = vmatpush1.bf16.msra.mxu0 %v897
        %1065 = vmatprep.subr.bf16.mxu0 0
        %1066 = vmatpush1.bf16.msra.mxu0 %v898
        %1067 = vmatprep.mubr.bf16.mxu0 %v598
        %1068 = vmatmul.mubr.bf16.gmra.mrb[0].mxu0 %v597
        %v1069 = vpop.f32.mrb[0].mxu0
        %v1070 = vadd.f32 %v1030, %v1069
        %v1071 = vpop.f32.mrb[0].mxu0
        %v1072 = vpop.f32.mrb[0].mxu0
        %v1073 = vpop.f32.mrb[0].mxu0
        %1074 = vdwg.mxu0
        %1075 = vmatprep.subr.bf16.mxu0 0
        %1076 = vmatpush1.bf16.msra.mxu0 %v899
        %1077 = vmatprep.subr.bf16.mxu0 0
        %1078 = vmatpush1.bf16.msra.mxu0 %v900
        %1079 = vmatprep.subr.bf16.mxu0 0
        %1080 = vmatpush1.bf16.msra.mxu0 %v901
        %1081 = vmatprep.subr.bf16.mxu0 0
        %1082 = vmatpush1.bf16.msra.mxu0 %v902
        %1083 = vmatprep.subr.bf16.mxu0 0
        %1084 = vmatpush1.bf16.msra.mxu0 %v903
        %1085 = vmatprep.subr.bf16.mxu0 0
        %1086 = vmatpush1.bf16.msra.mxu0 %v904
        %1087 = vmatprep.subr.bf16.mxu0 0
        %1088 = vmatpush1.bf16.msra.mxu0 %v905
        %1089 = vmatprep.subr.bf16.mxu0 0
        %1090 = vmatpush1.bf16.msra.mxu0 %v906
        %1091 = vmatprep.subr.bf16.mxu0 0
        %1092 = vmatpush1.bf16.msra.mxu0 %v907
        %1093 = vmatprep.subr.bf16.mxu0 0
        %1094 = vmatpush1.bf16.msra.mxu0 %v908
        %1095 = vmatprep.subr.bf16.mxu0 0
        %1096 = vmatpush1.bf16.msra.mxu0 %v909
        %1097 = vmatprep.subr.bf16.mxu0 0
        %1098 = vmatpush1.bf16.msra.mxu0 %v910
        %1099 = vmatprep.subr.bf16.mxu0 0
        %1100 = vmatpush1.bf16.msra.mxu0 %v911
        %1101 = vmatprep.subr.bf16.mxu0 0
        %1102 = vmatpush1.bf16.msra.mxu0 %v912
        %1103 = vmatprep.subr.bf16.mxu0 0
        %1104 = vmatpush1.bf16.msra.mxu0 %v913
        %1105 = vmatprep.subr.bf16.mxu0 0
        %1106 = vmatpush1.bf16.msra.mxu0 %v914
        %1107 = vmatprep.mubr.bf16.mxu0 %v600
        %1108 = vmatmul.mubr.bf16.gmra.mrb[0].mxu0 %v599
        %v1109 = vpop.f32.mrb[0].mxu0
        %v1110 = vadd.f32 %v1070, %v1109
        %v1111 = vpop.f32.mrb[0].mxu0
        %v1112 = vpop.f32.mrb[0].mxu0
        %v1113 = vpop.f32.mrb[0].mxu0
        %1114 = vdwg.mxu0
        %1115 = vmatprep.subr.bf16.mxu0 0
        %1116 = vmatpush1.bf16.msra.mxu0 %v915
        %1117 = vmatprep.subr.bf16.mxu0 0
        %1118 = vmatpush1.bf16.msra.mxu0 %v916
        %1119 = vmatprep.subr.bf16.mxu0 0
        %1120 = vmatpush1.bf16.msra.mxu0 %v917
        %1121 = vmatprep.subr.bf16.mxu0 0
        %1122 = vmatpush1.bf16.msra.mxu0 %v918
        %1123 = vmatprep.subr.bf16.mxu0 0
        %1124 = vmatpush1.bf16.msra.mxu0 %v919
        %1125 = vmatprep.subr.bf16.mxu0 0
        %1126 = vmatpush1.bf16.msra.mxu0 %v920
        %1127 = vmatprep.subr.bf16.mxu0 0
        %1128 = vmatpush1.bf16.msra.mxu0 %v921
        %1129 = vmatprep.subr.bf16.mxu0 0
        %1130 = vmatpush1.bf16.msra.mxu0 %v922
        %1131 = vmatprep.subr.bf16.mxu0 0
        %1132 = vmatpush1.bf16.msra.mxu0 %v923
        %1133 = vmatprep.subr.bf16.mxu0 0
        %1134 = vmatpush1.bf16.msra.mxu0 %v924
        %1135 = vmatprep.subr.bf16.mxu0 0
        %1136 = vmatpush1.bf16.msra.mxu0 %v925
        %1137 = vmatprep.subr.bf16.mxu0 0
        %1138 = vmatpush1.bf16.msra.mxu0 %v926
        %1139 = vmatprep.subr.bf16.mxu0 0
        %1140 = vmatpush1.bf16.msra.mxu0 %v927
        %1141 = vmatprep.subr.bf16.mxu0 0
        %1142 = vmatpush1.bf16.msra.mxu0 %v928
        %1143 = vmatprep.subr.bf16.mxu0 0
        %1144 = vmatpush1.bf16.msra.mxu0 %v929
        %1145 = vmatprep.subr.bf16.mxu0 0
        %1146 = vmatpush1.bf16.msra.mxu0 %v930
        %1147 = vmatprep.mubr.bf16.mxu0 %v602
        %1148 = vmatmul.mubr.bf16.gmra.mrb[0].mxu0 %v601
        %v1149 = vpop.f32.mrb[0].mxu0
        %v1150 = vadd.f32 %v1110, %v1149
        %v1151 = vpop.f32.mrb[0].mxu0
        %v1152 = vpop.f32.mrb[0].mxu0
        %v1153 = vpop.f32.mrb[0].mxu0
        %1154 = vdwg.mxu0
        %v1155 = vadd.f32 %v450, %v1150
        %1156 = vst [vmem:[%s439] sm:$0xff] %v1155
        // Predicated region
        $region69: #{groupface_forward.5} parent=43 // pred_check
          %p1157 = pneg %p445
        $region70: #{groupface_forward.5} parent=43 // pred_check_branch
          %1159 = sbr.rel (%p1157) target = $region72
        $region71: #{groupface_forward.5} parent=43 // pred_region
          %v1160 = vld [vmem:[%s439] sm:$0xff]
          %v1161 = vld [vmem:[%s372] sm:$0x1]
          %v1163 = vlaneseq
          %v1164 = vshrl.u32 %v1163, 7
          %v1165 = vsub.s32 0, %v1164
          %v1166 = vrot.slane %v1161, %v1165
          %v1168 = vadd.f32 %v1160, %v1166
          %v1169 = vld [vmem:[%s380] sm:$0x1]
          %v1170 = vld [vmem:[%s388] sm:$0x1]
          %s1171 = sld [smem:[#allocation2]]
          %v1172 = vrot.slane %v1168, 4
          %v1173 = vadd.f32 %v1168, %v1172
          %v1174 = vrot.slane %v1173, 2
          %v1175 = vadd.f32 %v1173, %v1174
          %v1176 = vrot.slane %v1175, 1
          %v1177 = vadd.f32 %v1175, %v1176
          %v1178 = vrcp.pop 8.0
          %v1179 = vmul.f32 %v1177, %v1178
          %v1180 = vsub.f32 %v1168, %v1179
          %v1181 = vmul.f32 %v1180, %v1180
          %v1182 = vrot.slane %v1181, 4
          %v1183 = vadd.f32 %v1181, %v1182
          %v1184 = vrot.slane %v1183, 2
          %v1185 = vadd.f32 %v1183, %v1184
          %v1186 = vrot.slane %v1185, 1
          %v1187 = vadd.f32 %v1185, %v1186
          %v1188 = vmul.f32 %v1187, %v1178
          %v1189 = vadd.f32 %v1188, 1e-05
          %v1190 = vrsqrt.pop %v1189
          %v1191 = vmul.f32 %v1180, %v1190
          %v1193 = vlaneseq
          %v1194 = vshrl.u32 %v1193, 7
          %v1195 = vsub.s32 0, %v1194
          %v1196 = vrot.slane %v1169, %v1195
          %v1198 = vmul.f32 %v1191, %v1196
          %v1200 = vlaneseq
          %v1201 = vshrl.u32 %v1200, 7
          %v1202 = vsub.s32 0, %v1201
          %v1203 = vrot.slane %v1170, %v1202
          %v1205 = vadd.f32 %v1198, %v1203
          %vm1206 = vcmp.ge.f32.partialorder %v1205, 0.0
          %v1207 = vstv %s1171
          %v1208 = vmul.f32 %v1207, %v1205
          %v1209 = vsel %vm1206, %v1205, %v1208
          %1210 = vst [vmem:[%s439] sm:$0xff] %v1209
          %v1211 = vpack.c.bf16 %v1209, %v1209
          %1212 = vst [vmem:[%s443] sm:$0xf] %v1211
        $region72: #{groupface_forward.5} parent=43 // pred_fallthru
          _
        %p1213 = scmp.lt.s32.totalorder %s31, 1
        %s1214 = scalar_select %p1213, %s31, 1
        %s1215 = smul.addr %s1214, 8
        %s1216 = scalar_lea.vmem %s6, %s1215
        %p1217 = scmp.lt.s32.totalorder %s31, 1
        %s1218 = scalar_select %p1217, %s31, 1
        %s1219 = smul.addr %s1218, 4
        %s1220 = scalar_lea.vmem %s7, %s1219
        // Predicated region
        $region73: #{groupface_forward.5} parent=43 // pred_check
          %p1221 = pneg %p210
        $region74: #{groupface_forward.5} parent=43 // pred_check_branch
          %1223 = sbr.rel (%p1221) target = $region76
        $region75: #{groupface_forward.5} parent=43 // pred_region
          _
        $region76: #{groupface_forward.5} parent=43 // pred_fallthru
          _
        // Predicated region
        $region77: #{groupface_forward.5} parent=43 // pred_check
          %p1224 = pneg %p236
        $region78: #{groupface_forward.5} parent=43 // pred_check_branch
          %1226 = sbr.rel (%p1224) target = $region80
        $region79: #{groupface_forward.5} parent=43 // pred_region
          _
        $region80: #{groupface_forward.5} parent=43 // pred_fallthru
          _
      $region44: #{groupface_forward.5} parent=5 // pred_fallthru
        _
      %p1227 = scmp.le.s32.totalorder 2, %s22
      // Predicated region
      $region81: #{groupface_forward.5} parent=5 // pred_check
        %p1228 = pneg %p1227
      $region82: #{groupface_forward.5} parent=5 // pred_check_branch
        %1230 = sbr.rel (%p1228) target = $region84
      $region83: #{groupface_forward.5} parent=5 // pred_region
        %s1231 = ssub.s32 %s22, 2
        // Predicated region
        $region85: #{groupface_forward.5} parent=83 // pred_check
          %p1232 = pneg %p216
        $region86: #{groupface_forward.5} parent=83 // pred_check_branch
          %1234 = sbr.rel (%p1232) target = $region88
        $region87: #{groupface_forward.5} parent=83 // pred_region
          %p1235 = scmp.lt.s32.totalorder %s33, 1
          %s1236 = scalar_select %p1235, %s33, 1
          %s1237 = smul.addr %s1236, 8
          %s1238 = scalar_lea.vmem %s6, %s1237
        $region88: #{groupface_forward.5} parent=83 // pred_fallthru
          _
        // Predicated region
        $region89: #{groupface_forward.5} parent=83 // pred_check
          %p1239 = pneg %p242
        $region90: #{groupface_forward.5} parent=83 // pred_check_branch
          %1241 = sbr.rel (%p1239) target = $region92
        $region91: #{groupface_forward.5} parent=83 // pred_region
          %p1242 = scmp.lt.s32.totalorder %s33, 1
          %s1243 = scalar_select %p1242, %s33, 1
          %s1244 = smul.addr %s1243, 4
          %s1245 = scalar_lea.vmem %s7, %s1244
        $region92: #{groupface_forward.5} parent=83 // pred_fallthru
          _
      $region84: #{groupface_forward.5} parent=5 // pred_fallthru
        _
    $region6: #{groupface_forward.5} parent=1 // loop_footer
      %s26 = sadd.s32 1, %s22
    $region7: #{groupface_forward.5} parent=1 // loop_footer_branch
      %21 = sbr.rel target = $region3
    $region8: #{groupface_forward.5} parent=1 // loop_exit
      _
    %1246 = vsyncpa [#allocation4], 1
    %s1247 = scalar_lea.sflag [#allocation4], 1
    %1248 = vsyncpa %s1247, 1
    %1249 = vsyncpa [#allocation6], 1
    %s1250 = scalar_lea.sflag [#allocation6], 1
    %1251 = vsyncpa %s1250, 1
    %1252 = vsyncpa [#allocation9], 1
    %s1253 = scalar_lea.sflag [#allocation9], 1
    %1254 = vsyncpa %s1253, 1

// kernel: groupface_forward.4
$region0: #{groupface_forward.4}
  #allocation0 [shape = 'u32[]', space=smem, size = 0x4, offset = 0x4, fixed_abs, tag = 'smem constant byte address 0x4 - core index']
  #allocation1 [shape = 'u32[144,128]{1,0:T(1,128)}', space=vmem, size = 0x12000, scoped, tag = 'internal scratch']
  %s0 = inlined_call_operand.hbm [shape: bf16[8,1024], index: 0, kind: input, shape index: {}]
  %s1 = inlined_call_operand.hbm [shape: bf16[4,1024,256], index: 1, kind: input, shape index: {}]
  %s2 = inlined_call_operand.hbm [shape: f32[4,1,256], index: 2, kind: input, shape index: {}]
  %s3 = inlined_call_operand.hbm [shape: f32[4,1,256], index: 3, kind: input, shape index: {}]
  %s4 = inlined_call_operand.hbm [shape: f32[4,1,256], index: 4, kind: input, shape index: {}]
  %s5 = inlined_call_operand.hbm [shape: f32[4], index: 5, kind: input, shape index: {}]
  %s6 = inlined_call_operand.vmem [shape: f32[4,8,256], index: 6, kind: output, shape index: {}]
  %s7 = sld [smem:[#allocation0]]
  $region89: #{groupface_forward.4} parent=0
    _
  %s9 = ssub.s32 1, %s7
  %s10 = scalar_select 0, %s9, %s7
  $region1: #{groupface_forward.4} parent=0
    #allocation2 [shape = 'u8[16384]{0}', space=vmem, size = 0x4000, scoped, tag = 'input window, operand 0, single buffered']
    #allocation3 [shape = 's32[2]{0}', space=sflag, size = 0x8, scoped, tag = 'scoped memory for groupface_forward.4']
    #allocation4 [shape = 's32[2]{0}', space=sflag, size = 0x8, scoped, tag = 'scoped memory for groupface_forward.4']
    #allocation5 [shape = 'u8[524288]{0}', space=vmem, size = 0x80000, scoped, tag = 'input window, operand 1']
    #allocation6 [shape = 's32[2]{0}', space=sflag, size = 0x8, scoped, tag = 'scoped memory for groupface_forward.4']
    #allocation7 [shape = 'u8[1024]{0}', space=vmem, size = 0x400, scoped, tag = 'input window, operand 2']
    #allocation8 [shape = 'u8[1024]{0}', space=vmem, size = 0x400, scoped, tag = 'input window, operand 3']
    #allocation9 [shape = 's32[2]{0}', space=sflag, size = 0x8, scoped, tag = 'scoped memory for groupface_forward.4']
    #allocation10 [shape = 'u8[1024]{0}', space=vmem, size = 0x400, scoped, tag = 'input window, operand 4']
    #allocation11 [shape = 'u8[512]{0}', space=smem, size = 0x200, scoped, tag = 'input window, operand 5, single buffered']
    %11 = vsyncpa [#allocation3], 0
    %12 = vsyncpa [#allocation6], 0
    %s13 = scalar_lea.sflag [#allocation6], 1
    %14 = vsyncpa %s13, 0
    %15 = vsyncpa [#allocation9], 0
    %s16 = scalar_lea.sflag [#allocation9], 1
    %17 = vsyncpa %s16, 0
    %18 = vsyncpa [#allocation4], 0
    loop: start=0, step=1, limit=10
    $region2: #{groupface_forward.4} parent=1 // loop_pre_header
      _
    $region3: #{groupface_forward.4} parent=1 // loop_header
      %s20 = sphi 0, %s24
      %p21 = scmp.ge.s32.totalorder %s20, 10
      %s27 = sphi 0, %s46
      %s28 = sphi 0, %s42
      %s29 = sphi 0, %s38
      %s30 = sphi 0, %s27
      %s31 = sphi 0, %s28
      %s32 = sphi 0, %s29
      %s33 = sphi 0, %s30
      %s34 = sphi 0, %s31
      %s35 = sphi 0, %s32
      %s49 = sphi 0, %s51
      %s52 = sphi 0, %s49
      %s53 = sphi 0, %s52
      %s69 = sphi 0, %s53
      %s79 = sphi 0, %s81
      %s82 = sphi 0, %s79
      %s83 = sphi 0, %s82
      %s99 = sphi 0, %s83
      %s107 = sphi 0, %s109
      %s110 = sphi 0, %s107
      %s111 = sphi 0, %s110
      %s127 = sphi 0, %s111
      %s135 = sphi 0, %s137
      %s138 = sphi 0, %s135
      %s139 = sphi 0, %s138
      %s155 = sphi 0, %s139
      %s163 = sphi 0, %s165
      %s166 = sphi 0, %s163
      %s167 = sphi 0, %s166
      %s183 = sphi 0, %s167
      %s187 = sphi 0, %s187
      %s189 = sphi 0, %s187
      %s190 = sphi 0, %s189
      %s204 = sphi 0, %s190
      %s212 = sphi 0, %s214
      %s215 = sphi 0, %s212
      %s216 = sphi 0, %s215
      %s232 = sphi 0, %s216
    $region4: #{groupface_forward.4} parent=1 // loop_header_branch
      %23 = sbr.rel (%p21) target = $region8
    $region5: #{groupface_forward.4} parent=1 // loop_body
      %s25 = ssub.s32 %s20, 1
      %s26 = ssub.s32 %s20, 2
      %s36 = sadd.s32 1, %s29
      %p37 = scmp.ge.s32.totalorder %s36, 1
      %s38 = scalar_select %p37, 0, %s36
      %s39 = sadd.s32 1, %s28
      %s40 = scalar_select %p37, %s39, %s28
      %p41 = scmp.ge.s32.totalorder %s40, 2
      %s42 = scalar_select %p41, 0, %s40
      %s43 = sadd.s32 1, %s27
      %s44 = scalar_select %p41, %s43, %s27
      %p45 = scmp.ge.s32.totalorder %s44, 4
      %s46 = scalar_select %p45, 0, %s44
      %s47 = ssub.s32 %s29, %s38
      %p48 = scmp.eq.s32.totalorder %s47, 0
      %s50 = sadd.s32 %s49, 1
      %s51 = scalar_select %p48, %s49, %s50
      %p54 = pneg %p48
      %p55 = scmp.eq.s32.totalorder %s20, 7
      %p56 = por %p54, %p55
      %p57 = scmp.ne.s32.totalorder %s49, %s52
      %p58 = scmp.eq.s32.totalorder %s20, 0
      %p59 = por %p57, %p58
      %p60 = scmp.ne.s32.totalorder %s49, %s52
      %p61 = scmp.eq.s32.totalorder %s25, 7
      %p62 = por %p60, %p61
      %p63 = scmp.ne.s32.totalorder %s52, %s53
      %p64 = scmp.eq.s32.totalorder %s25, 0
      %p65 = por %p63, %p64
      %p66 = scmp.ne.s32.totalorder %s52, %s53
      %p67 = scmp.eq.s32.totalorder %s26, 7
      %p68 = por %p66, %p67
      %p70 = scmp.ne.s32.totalorder %s53, %s69
      %p71 = scmp.eq.s32.totalorder %s26, 0
      %p72 = por %p70, %p71
      %s73 = ssub.s32 %s27, %s46
      %s74 = ssub.s32 %s29, %s38
      %s75 = sor.u32 %s73, %s74
      %s76 = ssub.s32 %s28, %s42
      %s77 = sor.u32 %s75, %s76
      %p78 = scmp.eq.s32.totalorder %s77, 0
      %s80 = sadd.s32 %s79, 1
      %s81 = scalar_select %p78, %s79, %s80
      %p84 = pneg %p78
      %p85 = scmp.eq.s32.totalorder %s20, 7
      %p86 = por %p84, %p85
      %p87 = scmp.ne.s32.totalorder %s79, %s82
      %p88 = scmp.eq.s32.totalorder %s20, 0
      %p89 = por %p87, %p88
      %p90 = scmp.ne.s32.totalorder %s79, %s82
      %p91 = scmp.eq.s32.totalorder %s25, 7
      %p92 = por %p90, %p91
      %p93 = scmp.ne.s32.totalorder %s82, %s83
      %p94 = scmp.eq.s32.totalorder %s25, 0
      %p95 = por %p93, %p94
      %p96 = scmp.ne.s32.totalorder %s82, %s83
      %p97 = scmp.eq.s32.totalorder %s26, 7
      %p98 = por %p96, %p97
      %p100 = scmp.ne.s32.totalorder %s83, %s99
      %p101 = scmp.eq.s32.totalorder %s26, 0
      %p102 = por %p100, %p101
      %s103 = ssub.s32 %s27, %s46
      %s104 = ssub.s32 %s28, %s42
      %s105 = sor.u32 %s103, %s104
      %p106 = scmp.eq.s32.totalorder %s105, 0
      %s108 = sadd.s32 %s107, 1
      %s109 = scalar_select %p106, %s107, %s108
      %p112 = pneg %p106
      %p113 = scmp.eq.s32.totalorder %s20, 7
      %p114 = por %p112, %p113
      %p115 = scmp.ne.s32.totalorder %s107, %s110
      %p116 = scmp.eq.s32.totalorder %s20, 0
      %p117 = por %p115, %p116
      %p118 = scmp.ne.s32.totalorder %s107, %s110
      %p119 = scmp.eq.s32.totalorder %s25, 7
      %p120 = por %p118, %p119
      %p121 = scmp.ne.s32.totalorder %s110, %s111
      %p122 = scmp.eq.s32.totalorder %s25, 0
      %p123 = por %p121, %p122
      %p124 = scmp.ne.s32.totalorder %s110, %s111
      %p125 = scmp.eq.s32.totalorder %s26, 7
      %p126 = por %p124, %p125
      %p128 = scmp.ne.s32.totalorder %s111, %s127
      %p129 = scmp.eq.s32.totalorder %s26, 0
      %p130 = por %p128, %p129
      %s131 = ssub.s32 %s27, %s46
      %s132 = ssub.s32 %s28, %s42
      %s133 = sor.u32 %s131, %s132
      %p134 = scmp.eq.s32.totalorder %s133, 0
      %s136 = sadd.s32 %s135, 1
      %s137 = scalar_select %p134, %s135, %s136
      %p140 = pneg %p134
      %p141 = scmp.eq.s32.totalorder %s20, 7
      %p142 = por %p140, %p141
      %p143 = scmp.ne.s32.totalorder %s135, %s138
      %p144 = scmp.eq.s32.totalorder %s20, 0
      %p145 = por %p143, %p144
      %p146 = scmp.ne.s32.totalorder %s135, %s138
      %p147 = scmp.eq.s32.totalorder %s25, 7
      %p148 = por %p146, %p147
      %p149 = scmp.ne.s32.totalorder %s138, %s139
      %p150 = scmp.eq.s32.totalorder %s25, 0
      %p151 = por %p149, %p150
      %p152 = scmp.ne.s32.totalorder %s138, %s139
      %p153 = scmp.eq.s32.totalorder %s26, 7
      %p154 = por %p152, %p153
      %p156 = scmp.ne.s32.totalorder %s139, %s155
      %p157 = scmp.eq.s32.totalorder %s26, 0
      %p158 = por %p156, %p157
      %s159 = ssub.s32 %s27, %s46
      %s160 = ssub.s32 %s28, %s42
      %s161 = sor.u32 %s159, %s160
      %p162 = scmp.eq.s32.totalorder %s161, 0
      %s164 = sadd.s32 %s163, 1
      %s165 = scalar_select %p162, %s163, %s164
      %p168 = pneg %p162
      %p169 = scmp.eq.s32.totalorder %s20, 7
      %p170 = por %p168, %p169
      %p171 = scmp.ne.s32.totalorder %s163, %s166
      %p172 = scmp.eq.s32.totalorder %s20, 0
      %p173 = por %p171, %p172
      %p174 = scmp.ne.s32.totalorder %s163, %s166
      %p175 = scmp.eq.s32.totalorder %s25, 7
      %p176 = por %p174, %p175
      %p177 = scmp.ne.s32.totalorder %s166, %s167
      %p178 = scmp.eq.s32.totalorder %s25, 0
      %p179 = por %p177, %p178
      %p180 = scmp.ne.s32.totalorder %s166, %s167
      %p181 = scmp.eq.s32.totalorder %s26, 7
      %p182 = por %p180, %p181
      %p184 = scmp.ne.s32.totalorder %s167, %s183
      %p185 = scmp.eq.s32.totalorder %s26, 0
      %p186 = por %p184, %p185
      %s188 = sadd.s32 %s187, 1
      %p191 = scmp.eq.s32.totalorder %s20, 7
      %p192 = scmp.ne.s32.totalorder %s187, %s189
      %p193 = scmp.eq.s32.totalorder %s20, 0
      %p194 = por %p192, %p193
      %p195 = scmp.ne.s32.totalorder %s187, %s189
      %p196 = scmp.eq.s32.totalorder %s25, 7
      %p197 = por %p195, %p196
      %p198 = scmp.ne.s32.totalorder %s189, %s190
      %p199 = scmp.eq.s32.totalorder %s25, 0
      %p200 = por %p198, %p199
      %p201 = scmp.ne.s32.totalorder %s189, %s190
      %p202 = scmp.eq.s32.totalorder %s26, 7
      %p203 = por %p201, %p202
      %p205 = scmp.ne.s32.totalorder %s190, %s204
      %p206 = scmp.eq.s32.totalorder %s26, 0
      %p207 = por %p205, %p206
      %s208 = ssub.s32 %s27, %s46
      %s209 = ssub.s32 %s28, %s42
      %s210 = sor.u32 %s208, %s209
      %p211 = scmp.eq.s32.totalorder %s210, 0
      %s213 = sadd.s32 %s212, 1
      %s214 = scalar_select %p211, %s212, %s213
      %p217 = pneg %p211
      %p218 = scmp.eq.s32.totalorder %s20, 7
      %p219 = por %p217, %p218
      %p220 = scmp.ne.s32.totalorder %s212, %s215
      %p221 = scmp.eq.s32.totalorder %s20, 0
      %p222 = por %p220, %p221
      %p223 = scmp.ne.s32.totalorder %s212, %s215
      %p224 = scmp.eq.s32.totalorder %s25, 7
      %p225 = por %p223, %p224
      %p226 = scmp.ne.s32.totalorder %s215, %s216
      %p227 = scmp.eq.s32.totalorder %s25, 0
      %p228 = por %p226, %p227
      %p229 = scmp.ne.s32.totalorder %s215, %s216
      %p230 = scmp.eq.s32.totalorder %s26, 7
      %p231 = por %p229, %p230
      %p233 = scmp.ne.s32.totalorder %s216, %s232
      %p234 = scmp.eq.s32.totalorder %s26, 0
      %p235 = por %p233, %p234
      %p236 = scmp.le.s32.totalorder 1, %s20
      %p237 = scmp.lt.s32.totalorder %s20, 9
      %p238 = pnand %p236, %p237
      %p239 = pneg %p238
      // Predicated region
      $region9: #{groupface_forward.4} parent=5 // pred_check
        _
      $region10: #{groupface_forward.4} parent=5 // pred_check_branch
        %241 = sbr.rel (%p238) target = $region12
      $region11: #{groupface_forward.4} parent=5 // pred_region
        %s242 = ssub.s32 %s20, 1
        // Predicated region
        $region13: #{groupface_forward.4} parent=11 // pred_check
          %p243 = pneg %p65
        $region14: #{groupface_forward.4} parent=11 // pred_check_branch
          %245 = sbr.rel (%p243) target = $region16
        $region15: #{groupface_forward.4} parent=11 // pred_region
          %s246 = smul.u32 8, %s32
          %s248 = ssub.s32 512, 512
          %249 = vsyncadd [#allocation3], %s248
          %s250 = smul.addr %s246, 64
          %s251 = scalar_lea.hbm %s0, %s250
          %s253 = sshll.u32 [#allocation2], 4
          %s254 = int_to_ptr.vmem [resolvable:$true] %s253
          %256 = dma.hbm_to_vmem [thread:$0]  %s251, 512, %s254, [#allocation3]
        $region16: #{groupface_forward.4} parent=11 // pred_fallthru
          _
        // Predicated region
        $region17: #{groupface_forward.4} parent=11 // pred_check
          %p257 = pneg %p200
        $region18: #{groupface_forward.4} parent=11 // pred_check_branch
          %259 = sbr.rel (%p257) target = $region20
        $region19: #{groupface_forward.4} parent=11 // pred_region
          %s261 = ssub.s32 16, 16
          %262 = vsyncadd [#allocation4], %s261
          %265 = dma.hbm_to_smem %s5, 16, [#allocation11], [#allocation4]
        $region20: #{groupface_forward.4} parent=11 // pred_fallthru
          _
      $region12: #{groupface_forward.4} parent=5 // pred_fallthru
        _
      %p266 = scmp.lt.s32.totalorder %s20, 8
      // Predicated region
      $region21: #{groupface_forward.4} parent=5 // pred_check
        %p267 = pneg %p266
      $region22: #{groupface_forward.4} parent=5 // pred_check_branch
        %269 = sbr.rel (%p267) target = $region24
      $region23: #{groupface_forward.4} parent=5 // pred_region
        // Predicated region
        $region25: #{groupface_forward.4} parent=23 // pred_check
          %p270 = pneg %p89
        $region26: #{groupface_forward.4} parent=23 // pred_check_branch
          %272 = sbr.rel (%p270) target = $region28
        $region27: #{groupface_forward.4} parent=23 // pred_region
          %s273 = sand.u32 %s20, 1
          %s274 = scalar_lea.sflag [#allocation6], %s273
          %s275 = sand.u32 %s79, 1
          %s276 = smul.addr %s275, 512
          %s277 = scalar_lea.vmem [#allocation5], %s276
          %s278 = smul.u32 128, %s29
          %s280 = ssub.s32 8192, 8192
          %281 = vsyncadd %s274, %s280
          %s282 = smul.addr %s278, 2
          %s283 = sadd.s32 %s28, %s282
          %s284 = smul.addr %s27, 256
          %s285 = sadd.s32 %s283, %s284
          %s286 = smul.addr %s285, 64
          %s287 = scalar_lea.hbm %s1, %s286
          %s288 = sshll.u32 %s277, 4
          %s289 = int_to_ptr.vmem [resolvable:$true] %s288
          %294 = dma.hbm_to_vmem [thread:$0]  %s287, 8192, %s289, %s274, 128, 64, 4
        $region28: #{groupface_forward.4} parent=23 // pred_fallthru
          _
        // Predicated region
        $region29: #{groupface_forward.4} parent=23 // pred_check
          %p295 = pneg %p117
        $region30: #{groupface_forward.4} parent=23 // pred_check_branch
          %297 = sbr.rel (%p295) target = $region32
        $region31: #{groupface_forward.4} parent=23 // pred_region
          %s298 = sand.u32 %s20, 1
          %s299 = scalar_lea.sflag [#allocation6], %s298
          %s300 = sand.u32 %s107, 1
          %s301 = scalar_lea.vmem [#allocation7], %s300
          %s303 = ssub.s32 16, 16
          %304 = vsyncadd %s299, %s303
          %s305 = smul.addr %s27, 2
          %s306 = sadd.s32 %s28, %s305
          %s307 = smul.addr %s306, 16
          %s308 = scalar_lea.hbm %s2, %s307
          %s310 = sshll.u32 %s301, 4
          %s311 = int_to_ptr.vmem [resolvable:$true] %s310
          %313 = dma.hbm_to_vmem [thread:$0]  %s308, 16, %s311, %s299
        $region32: #{groupface_forward.4} parent=23 // pred_fallthru
          _
        // Predicated region
        $region33: #{groupface_forward.4} parent=23 // pred_check
          %p314 = pneg %p145
        $region34: #{groupface_forward.4} parent=23 // pred_check_branch
          %316 = sbr.rel (%p314) target = $region36
        $region35: #{groupface_forward.4} parent=23 // pred_region
          %s317 = sand.u32 %s20, 1
          %s318 = scalar_lea.sflag [#allocation9], %s317
          %s319 = sand.u32 %s135, 1
          %s320 = scalar_lea.vmem [#allocation8], %s319
          %s322 = ssub.s32 16, 16
          %323 = vsyncadd %s318, %s322
          %s324 = smul.addr %s27, 2
          %s325 = sadd.s32 %s28, %s324
          %s326 = smul.addr %s325, 16
          %s327 = scalar_lea.hbm %s3, %s326
          %s329 = sshll.u32 %s320, 4
          %s330 = int_to_ptr.vmem [resolvable:$true] %s329
          %332 = dma.hbm_to_vmem [thread:$0]  %s327, 16, %s330, %s318
        $region36: #{groupface_forward.4} parent=23 // pred_fallthru
          _
        // Predicated region
        $region37: #{groupface_forward.4} parent=23 // pred_check
          %p333 = pneg %p173
        $region38: #{groupface_forward.4} parent=23 // pred_check_branch
          %335 = sbr.rel (%p333) target = $region40
        $region39: #{groupface_forward.4} parent=23 // pred_region
          %s336 = sand.u32 %s20, 1
          %s337 = scalar_lea.sflag [#allocation9], %s336
          %s338 = sand.u32 %s163, 1
          %s339 = scalar_lea.vmem [#allocation10], %s338
          %s341 = ssub.s32 16, 16
          %342 = vsyncadd %s337, %s341
          %s343 = smul.addr %s27, 2
          %s344 = sadd.s32 %s28, %s343
          %s345 = smul.addr %s344, 16
          %s346 = scalar_lea.hbm %s4, %s345
          %s348 = sshll.u32 %s339, 4
          %s349 = int_to_ptr.vmem [resolvable:$true] %s348
          %351 = dma.hbm_to_vmem [thread:$0]  %s346, 16, %s349, %s337
        $region40: #{groupface_forward.4} parent=23 // pred_fallthru
          _
      $region24: #{groupface_forward.4} parent=5 // pred_fallthru
        _
      %p352 = scmp.le.s32.totalorder 1, %s20
      %p353 = scmp.lt.s32.totalorder %s20, 9
      %p354 = pnand %p352, %p353
      %p355 = pneg %p354
      // Predicated region
      $region41: #{groupface_forward.4} parent=5 // pred_check
        _
      $region42: #{groupface_forward.4} parent=5 // pred_check_branch
        %357 = sbr.rel (%p354) target = $region44
      $region43: #{groupface_forward.4} parent=5 // pred_region
        %s358 = ssub.s32 %s20, 1
        // Predicated region
        $region45: #{groupface_forward.4} parent=43 // pred_check
          %p359 = pneg %p65
        $region46: #{groupface_forward.4} parent=43 // pred_check_branch
          %361 = sbr.rel (%p359) target = $region48
        $region47: #{groupface_forward.4} parent=43 // pred_region
          %362 = dma.done [#allocation3], 512
        $region48: #{groupface_forward.4} parent=43 // pred_fallthru
          _
        %s363 = sand.u32 %s25, 1
        %s364 = scalar_lea.sflag [#allocation6], %s363
        %s365 = sand.u32 %s82, 1
        %s366 = smul.addr %s365, 512
        %s367 = scalar_lea.vmem [#allocation5], %s366
        // Predicated region
        $region49: #{groupface_forward.4} parent=43 // pred_check
          %p368 = pneg %p95
        $region50: #{groupface_forward.4} parent=43 // pred_check_branch
          %370 = sbr.rel (%p368) target = $region52
        $region51: #{groupface_forward.4} parent=43 // pred_region
          %371 = dma.done %s364, 8192
        $region52: #{groupface_forward.4} parent=43 // pred_fallthru
          _
        %s372 = sand.u32 %s25, 1
        %s373 = scalar_lea.sflag [#allocation6], %s372
        %s374 = sand.u32 %s110, 1
        %s375 = scalar_lea.vmem [#allocation7], %s374
        // Predicated region
        $region53: #{groupface_forward.4} parent=43 // pred_check
          %p376 = pneg %p123
        $region54: #{groupface_forward.4} parent=43 // pred_check_branch
          %378 = sbr.rel (%p376) target = $region56
        $region55: #{groupface_forward.4} parent=43 // pred_region
          %379 = dma.done %s373, 16
        $region56: #{groupface_forward.4} parent=43 // pred_fallthru
          _
        %s380 = sand.u32 %s25, 1
        %s381 = scalar_lea.sflag [#allocation9], %s380
        %s382 = sand.u32 %s138, 1
        %s383 = scalar_lea.vmem [#allocation8], %s382
        // Predicated region
        $region57: #{groupface_forward.4} parent=43 // pred_check
          %p384 = pneg %p151
        $region58: #{groupface_forward.4} parent=43 // pred_check_branch
          %386 = sbr.rel (%p384) target = $region60
        $region59: #{groupface_forward.4} parent=43 // pred_region
          %387 = dma.done %s381, 16
        $region60: #{groupface_forward.4} parent=43 // pred_fallthru
          _
        %s388 = sand.u32 %s25, 1
        %s389 = scalar_lea.sflag [#allocation9], %s388
        %s390 = sand.u32 %s166, 1
        %s391 = scalar_lea.vmem [#allocation10], %s390
        // Predicated region
        $region61: #{groupface_forward.4} parent=43 // pred_check
          %p392 = pneg %p179
        $region62: #{groupface_forward.4} parent=43 // pred_check_branch
          %394 = sbr.rel (%p392) target = $region64
        $region63: #{groupface_forward.4} parent=43 // pred_region
          %395 = dma.done %s389, 16
        $region64: #{groupface_forward.4} parent=43 // pred_fallthru
          _
        // Predicated region
        $region65: #{groupface_forward.4} parent=43 // pred_check
          %p396 = pneg %p200
        $region66: #{groupface_forward.4} parent=43 // pred_check_branch
          %398 = sbr.rel (%p396) target = $region68
        $region67: #{groupface_forward.4} parent=43 // pred_region
          %399 = dma.done [#allocation4], 16
        $region68: #{groupface_forward.4} parent=43 // pred_fallthru
          _
        %400 = sfence
        %p401 = pneg %p65
        %p402 = pneg %p62
        %s403 = sand.u32 %s25, 1
        %s404 = scalar_lea.sflag [#allocation6], %s403
        %s405 = sand.u32 %s82, 1
        %s406 = smul.addr %s405, 512
        %s407 = scalar_lea.vmem [#allocation5], %s406
        %p408 = pneg %p95
        %p409 = pneg %p92
        %s410 = sand.u32 %s25, 1
        %s411 = scalar_lea.sflag [#allocation6], %s410
        %s412 = sand.u32 %s110, 1
        %s413 = scalar_lea.vmem [#allocation7], %s412
        %p414 = pneg %p123
        %p415 = pneg %p120
        %s416 = sand.u32 %s25, 1
        %s417 = scalar_lea.sflag [#allocation9], %s416
        %s418 = sand.u32 %s138, 1
        %s419 = scalar_lea.vmem [#allocation8], %s418
        %p420 = pneg %p151
        %p421 = pneg %p148
        %s422 = sand.u32 %s25, 1
        %s423 = scalar_lea.sflag [#allocation9], %s422
        %s424 = sand.u32 %s166, 1
        %s425 = scalar_lea.vmem [#allocation10], %s424
        %p426 = pneg %p179
        %p427 = pneg %p176
        %p428 = pneg %p200
        %p429 = pneg %p197
        %p430 = pneg %p228
        %p431 = pneg %p225
        %p432 = scmp.lt.s32.totalorder %s30, 3
        %s433 = scalar_select %p432, %s30, 3
        %p434 = scmp.lt.s32.totalorder %s31, 1
        %s435 = scalar_select %p434, %s31, 1
        %s436 = smul.addr %s433, 2
        %s437 = sadd.s32 %s435, %s436
        %s438 = smul.addr %s437, 8
        %s439 = scalar_lea.vmem %s6, %s438
        %s440 = smul.u32 8, %s32
        %s441 = smul.u32 128, %s32
        %p442 = scmp.lt.s32.totalorder %s30, 3
        %s443 = scalar_select %p442, %s30, 3
        %p444 = scmp.lt.s32.totalorder %s31, 1
        %s445 = scalar_select %p444, %s31, 1
        %s446 = smul.addr %s443, 2
        %s447 = sadd.s32 %s445, %s446
        %s448 = smul.addr %s447, 8
        %s449 = scalar_lea.vmem %s6, %s448
        %p451 = scmp.eq.s32.totalorder %s32, 0
        // Predicated region
        $region69: #{groupface_forward.4} parent=43 // pred_check
          %p452 = pneg %p451
        $region70: #{groupface_forward.4} parent=43 // pred_check_branch
          %454 = sbr.rel (%p452) target = $region72
        $region71: #{groupface_forward.4} parent=43 // pred_region
          %455 = vst [vmem:[%s449] sm:$0xff] 0.0
        $region72: #{groupface_forward.4} parent=43 // pred_fallthru
          _
        %v456 = vld [vmem:[%s449] sm:$0xff]
        %v457 = vld [vmem:[#allocation2] sm:$0xff]
        %v458 = vld [vmem:[#allocation2 + $0x8] sm:$0xff]
        %v459 = vld [vmem:[#allocation2 + $0x10] sm:$0xff]
        %v460 = vld [vmem:[#allocation2 + $0x18] sm:$0xff]
        %v461 = vld [vmem:[%s367] sm:$0xf]
        %v462 = vld [vmem:[%s367 + $0x4] sm:$0xf]
        %v463 = vld [vmem:[%s367 + $0x8] sm:$0xf]
        %v464 = vld [vmem:[%s367 + $0xc] sm:$0xf]
        %v465 = vld [vmem:[%s367 + $0x10] sm:$0xf]
        %v466 = vld [vmem:[%s367 + $0x14] sm:$0xf]
        %v467 = vld [vmem:[%s367 + $0x18] sm:$0xf]
        %v468 = vld [vmem:[%s367 + $0x1c] sm:$0xf]
        %v469 = vld [vmem:[%s367 + $0x20] sm:$0xf]
        %v470 = vld [vmem:[%s367 + $0x24] sm:$0xf]
        %v471 = vld [vmem:[%s367 + $0x28] sm:$0xf]
        %v472 = vld [vmem:[%s367 + $0x2c] sm:$0xf]
        %v473 = vld [vmem:[%s367 + $0x30] sm:$0xf]
        %v474 = vld [vmem:[%s367 + $0x34] sm:$0xf]
        %v475 = vld [vmem:[%s367 + $0x38] sm:$0xf]
        %v476 = vld [vmem:[%s367 + $0x3c] sm:$0xf]
        %v477 = vld [vmem:[%s367 + $0x40] sm:$0xf]
        %v478 = vld [vmem:[%s367 + $0x44] sm:$0xf]
        %v479 = vld [vmem:[%s367 + $0x48] sm:$0xf]
        %v480 = vld [vmem:[%s367 + $0x4c] sm:$0xf]
        %v481 = vld [vmem:[%s367 + $0x50] sm:$0xf]
        %v482 = vld [vmem:[%s367 + $0x54] sm:$0xf]
        %v483 = vld [vmem:[%s367 + $0x58] sm:$0xf]
        %v484 = vld [vmem:[%s367 + $0x5c] sm:$0xf]
        %v485 = vld [vmem:[%s367 + $0x60] sm:$0xf]
        %v486 = vld [vmem:[%s367 + $0x64] sm:$0xf]
        %v487 = vld [vmem:[%s367 + $0x68] sm:$0xf]
        %v488 = vld [vmem:[%s367 + $0x6c] sm:$0xf]
        %v489 = vld [vmem:[%s367 + $0x70] sm:$0xf]
        %v490 = vld [vmem:[%s367 + $0x74] sm:$0xf]
        %v491 = vld [vmem:[%s367 + $0x78] sm:$0xf]
        %v492 = vld [vmem:[%s367 + $0x7c] sm:$0xf]
        %v493 = vld [vmem:[%s367 + $0x80] sm:$0xf]
        %v494 = vld [vmem:[%s367 + $0x84] sm:$0xf]
        %v495 = vld [vmem:[%s367 + $0x88] sm:$0xf]
        %v496 = vld [vmem:[%s367 + $0x8c] sm:$0xf]
        %v497 = vld [vmem:[%s367 + $0x90] sm:$0xf]
        %v498 = vld [vmem:[%s367 + $0x94] sm:$0xf]
        %v499 = vld [vmem:[%s367 + $0x98] sm:$0xf]
        %v500 = vld [vmem:[%s367 + $0x9c] sm:$0xf]
        %v501 = vld [vmem:[%s367 + $0xa0] sm:$0xf]
        %v502 = vld [vmem:[%s367 + $0xa4] sm:$0xf]
        %v503 = vld [vmem:[%s367 + $0xa8] sm:$0xf]
        %v504 = vld [vmem:[%s367 + $0xac] sm:$0xf]
        %v505 = vld [vmem:[%s367 + $0xb0] sm:$0xf]
        %v506 = vld [vmem:[%s367 + $0xb4] sm:$0xf]
        %v507 = vld [vmem:[%s367 + $0xb8] sm:$0xf]
        %v508 = vld [vmem:[%s367 + $0xbc] sm:$0xf]
        %v509 = vld [vmem:[%s367 + $0xc0] sm:$0xf]
        %v510 = vld [vmem:[%s367 + $0xc4] sm:$0xf]
        %v511 = vld [vmem:[%s367 + $0xc8] sm:$0xf]
        %v512 = vld [vmem:[%s367 + $0xcc] sm:$0xf]
        %v513 = vld [vmem:[%s367 + $0xd0] sm:$0xf]
        %v514 = vld [vmem:[%s367 + $0xd4] sm:$0xf]
        %v515 = vld [vmem:[%s367 + $0xd8] sm:$0xf]
        %v516 = vld [vmem:[%s367 + $0xdc] sm:$0xf]
        %v517 = vld [vmem:[%s367 + $0xe0] sm:$0xf]
        %v518 = vld [vmem:[%s367 + $0xe4] sm:$0xf]
        %v519 = vld [vmem:[%s367 + $0xe8] sm:$0xf]
        %v520 = vld [vmem:[%s367 + $0xec] sm:$0xf]
        %v521 = vld [vmem:[%s367 + $0xf0] sm:$0xf]
        %v522 = vld [vmem:[%s367 + $0xf4] sm:$0xf]
        %v523 = vld [vmem:[%s367 + $0xf8] sm:$0xf]
        %v524 = vld [vmem:[%s367 + $0xfc] sm:$0xf]
        %v525 = vld [vmem:[%s367 + $0x100] sm:$0xf]
        %v526 = vld [vmem:[%s367 + $0x104] sm:$0xf]
        %v527 = vld [vmem:[%s367 + $0x108] sm:$0xf]
        %v528 = vld [vmem:[%s367 + $0x10c] sm:$0xf]
        %v529 = vld [vmem:[%s367 + $0x110] sm:$0xf]
        %v530 = vld [vmem:[%s367 + $0x114] sm:$0xf]
        %v531 = vld [vmem:[%s367 + $0x118] sm:$0xf]
        %v532 = vld [vmem:[%s367 + $0x11c] sm:$0xf]
        %v533 = vld [vmem:[%s367 + $0x120] sm:$0xf]
        %v534 = vld [vmem:[%s367 + $0x124] sm:$0xf]
        %v535 = vld [vmem:[%s367 + $0x128] sm:$0xf]
        %v536 = vld [vmem:[%s367 + $0x12c] sm:$0xf]
        %v537 = vld [vmem:[%s367 + $0x130] sm:$0xf]
        %v538 = vld [vmem:[%s367 + $0x134] sm:$0xf]
        %v539 = vld [vmem:[%s367 + $0x138] sm:$0xf]
        %v540 = vld [vmem:[%s367 + $0x13c] sm:$0xf]
        %v541 = vld [vmem:[%s367 + $0x140] sm:$0xf]
        %v542 = vld [vmem:[%s367 + $0x144] sm:$0xf]
        %v543 = vld [vmem:[%s367 + $0x148] sm:$0xf]
        %v544 = vld [vmem:[%s367 + $0x14c] sm:$0xf]
        %v545 = vld [vmem:[%s367 + $0x150] sm:$0xf]
        %v546 = vld [vmem:[%s367 + $0x154] sm:$0xf]
        %v547 = vld [vmem:[%s367 + $0x158] sm:$0xf]
        %v548 = vld [vmem:[%s367 + $0x15c] sm:$0xf]
        %v549 = vld [vmem:[%s367 + $0x160] sm:$0xf]
        %v550 = vld [vmem:[%s367 + $0x164] sm:$0xf]
        %v551 = vld [vmem:[%s367 + $0x168] sm:$0xf]
        %v552 = vld [vmem:[%s367 + $0x16c] sm:$0xf]
        %v553 = vld [vmem:[%s367 + $0x170] sm:$0xf]
        %v554 = vld [vmem:[%s367 + $0x174] sm:$0xf]
        %v555 = vld [vmem:[%s367 + $0x178] sm:$0xf]
        %v556 = vld [vmem:[%s367 + $0x17c] sm:$0xf]
        %v557 = vld [vmem:[%s367 + $0x180] sm:$0xf]
        %v558 = vld [vmem:[%s367 + $0x184] sm:$0xf]
        %v559 = vld [vmem:[%s367 + $0x188] sm:$0xf]
        %v560 = vld [vmem:[%s367 + $0x18c] sm:$0xf]
        %v561 = vld [vmem:[%s367 + $0x190] sm:$0xf]
        %v562 = vld [vmem:[%s367 + $0x194] sm:$0xf]
        %v563 = vld [vmem:[%s367 + $0x198] sm:$0xf]
        %v564 = vld [vmem:[%s367 + $0x19c] sm:$0xf]
        %v565 = vld [vmem:[%s367 + $0x1a0] sm:$0xf]
        %v566 = vld [vmem:[%s367 + $0x1a4] sm:$0xf]
        %v567 = vld [vmem:[%s367 + $0x1a8] sm:$0xf]
        %v568 = vld [vmem:[%s367 + $0x1ac] sm:$0xf]
        %v569 = vld [vmem:[%s367 + $0x1b0] sm:$0xf]
        %v570 = vld [vmem:[%s367 + $0x1b4] sm:$0xf]
        %v571 = vld [vmem:[%s367 + $0x1b8] sm:$0xf]
        %v572 = vld [vmem:[%s367 + $0x1bc] sm:$0xf]
        %v573 = vld [vmem:[%s367 + $0x1c0] sm:$0xf]
        %v574 = vld [vmem:[%s367 + $0x1c4] sm:$0xf]
        %v575 = vld [vmem:[%s367 + $0x1c8] sm:$0xf]
        %v576 = vld [vmem:[%s367 + $0x1cc] sm:$0xf]
        %v577 = vld [vmem:[%s367 + $0x1d0] sm:$0xf]
        %v578 = vld [vmem:[%s367 + $0x1d4] sm:$0xf]
        %v579 = vld [vmem:[%s367 + $0x1d8] sm:$0xf]
        %v580 = vld [vmem:[%s367 + $0x1dc] sm:$0xf]
        %v581 = vld [vmem:[%s367 + $0x1e0] sm:$0xf]
        %v582 = vld [vmem:[%s367 + $0x1e4] sm:$0xf]
        %v583 = vld [vmem:[%s367 + $0x1e8] sm:$0xf]
        %v584 = vld [vmem:[%s367 + $0x1ec] sm:$0xf]
        %v585 = vld [vmem:[%s367 + $0x1f0] sm:$0xf]
        %v586 = vld [vmem:[%s367 + $0x1f4] sm:$0xf]
        %v587 = vld [vmem:[%s367 + $0x1f8] sm:$0xf]
        %v588 = vld [vmem:[%s367 + $0x1fc] sm:$0xf]
        %v593 = vunpack.c.l.b16 %v457
        %v594 = vunpack.c.h.b16 %v457
        %v595 = vunpack.c.l.b16 %v458
        %v596 = vunpack.c.h.b16 %v458
        %v597 = vunpack.c.l.b16 %v459
        %v598 = vunpack.c.h.b16 %v459
        %v599 = vunpack.c.l.b16 %v460
        %v600 = vunpack.c.h.b16 %v460
        %v601 = vpack.c.b16 %v593, %v593
        %v602 = vpack.c.b16 %v594, %v594
        %v603 = vpack.c.b16 %v595, %v595
        %v604 = vpack.c.b16 %v596, %v596
        %v605 = vpack.c.b16 %v597, %v597
        %v606 = vpack.c.b16 %v598, %v598
        %v607 = vpack.c.b16 %v599, %v599
        %v608 = vpack.c.b16 %v600, %v600
        %v745 = vunpack.c.l.b16 %v461
        %v746 = vunpack.c.l.b16 %v462
        %v747 = vunpack.c.l.b16 %v463
        %v748 = vunpack.c.l.b16 %v464
        %v749 = vunpack.c.l.b16 %v465
        %v750 = vunpack.c.l.b16 %v466
        %v751 = vunpack.c.l.b16 %v467
        %v752 = vunpack.c.l.b16 %v468
        %v753 = vunpack.c.l.b16 %v469
        %v754 = vunpack.c.l.b16 %v470
        %v755 = vunpack.c.l.b16 %v471
        %v756 = vunpack.c.l.b16 %v472
        %v757 = vunpack.c.l.b16 %v473
        %v758 = vunpack.c.l.b16 %v474
        %v759 = vunpack.c.l.b16 %v475
        %v760 = vunpack.c.l.b16 %v476
        %v761 = vunpack.c.l.b16 %v477
        %v762 = vunpack.c.l.b16 %v478
        %v763 = vunpack.c.l.b16 %v479
        %v764 = vunpack.c.l.b16 %v480
        %v765 = vunpack.c.l.b16 %v481
        %v766 = vunpack.c.l.b16 %v482
        %v767 = vunpack.c.l.b16 %v483
        %v768 = vunpack.c.l.b16 %v484
        %v769 = vunpack.c.l.b16 %v485
        %v770 = vunpack.c.l.b16 %v486
        %v771 = vunpack.c.l.b16 %v487
        %v772 = vunpack.c.l.b16 %v488
        %v773 = vunpack.c.l.b16 %v489
        %v774 = vunpack.c.l.b16 %v490
        %v775 = vunpack.c.l.b16 %v491
        %v776 = vunpack.c.l.b16 %v492
        %v777 = vunpack.c.l.b16 %v493
        %v778 = vunpack.c.l.b16 %v494
        %v779 = vunpack.c.l.b16 %v495
        %v780 = vunpack.c.l.b16 %v496
        %v781 = vunpack.c.l.b16 %v497
        %v782 = vunpack.c.l.b16 %v498
        %v783 = vunpack.c.l.b16 %v499
        %v784 = vunpack.c.l.b16 %v500
        %v785 = vunpack.c.l.b16 %v501
        %v786 = vunpack.c.l.b16 %v502
        %v787 = vunpack.c.l.b16 %v503
        %v788 = vunpack.c.l.b16 %v504
        %v789 = vunpack.c.l.b16 %v505
        %v790 = vunpack.c.l.b16 %v506
        %v791 = vunpack.c.l.b16 %v507
        %v792 = vunpack.c.l.b16 %v508
        %v793 = vunpack.c.l.b16 %v509
        %v794 = vunpack.c.l.b16 %v510
        %v795 = vunpack.c.l.b16 %v511
        %v796 = vunpack.c.l.b16 %v512
        %v797 = vunpack.c.l.b16 %v513
        %v798 = vunpack.c.l.b16 %v514
        %v799 = vunpack.c.l.b16 %v515
        %v800 = vunpack.c.l.b16 %v516
        %v801 = vunpack.c.l.b16 %v517
        %v802 = vunpack.c.l.b16 %v518
        %v803 = vunpack.c.l.b16 %v519
        %v804 = vunpack.c.l.b16 %v520
        %v805 = vunpack.c.l.b16 %v521
        %v806 = vunpack.c.l.b16 %v522
        %v807 = vunpack.c.l.b16 %v523
        %v808 = vunpack.c.l.b16 %v524
        %v809 = vunpack.c.l.b16 %v525
        %v810 = vunpack.c.l.b16 %v526
        %v811 = vunpack.c.l.b16 %v527
        %v812 = vunpack.c.l.b16 %v528
        %v813 = vunpack.c.l.b16 %v529
        %v814 = vunpack.c.l.b16 %v530
        %v815 = vunpack.c.l.b16 %v531
        %v816 = vunpack.c.l.b16 %v532
        %v817 = vunpack.c.l.b16 %v533
        %v818 = vunpack.c.l.b16 %v534
        %v819 = vunpack.c.l.b16 %v535
        %v820 = vunpack.c.l.b16 %v536
        %v821 = vunpack.c.l.b16 %v537
        %v822 = vunpack.c.l.b16 %v538
        %v823 = vunpack.c.l.b16 %v539
        %v824 = vunpack.c.l.b16 %v540
        %v825 = vunpack.c.l.b16 %v541
        %v826 = vunpack.c.l.b16 %v542
        %v827 = vunpack.c.l.b16 %v543
        %v828 = vunpack.c.l.b16 %v544
        %v829 = vunpack.c.l.b16 %v545
        %v830 = vunpack.c.l.b16 %v546
        %v831 = vunpack.c.l.b16 %v547
        %v832 = vunpack.c.l.b16 %v548
        %v833 = vunpack.c.l.b16 %v549
        %v834 = vunpack.c.l.b16 %v550
        %v835 = vunpack.c.l.b16 %v551
        %v836 = vunpack.c.l.b16 %v552
        %v837 = vunpack.c.l.b16 %v553
        %v838 = vunpack.c.l.b16 %v554
        %v839 = vunpack.c.l.b16 %v555
        %v840 = vunpack.c.l.b16 %v556
        %v841 = vunpack.c.l.b16 %v557
        %v842 = vunpack.c.l.b16 %v558
        %v843 = vunpack.c.l.b16 %v559
        %v844 = vunpack.c.l.b16 %v560
        %v845 = vunpack.c.l.b16 %v561
        %v846 = vunpack.c.l.b16 %v562
        %v847 = vunpack.c.l.b16 %v563
        %v848 = vunpack.c.l.b16 %v564
        %v849 = vunpack.c.l.b16 %v565
        %v850 = vunpack.c.l.b16 %v566
        %v851 = vunpack.c.l.b16 %v567
        %v852 = vunpack.c.l.b16 %v568
        %v853 = vunpack.c.l.b16 %v569
        %v854 = vunpack.c.l.b16 %v570
        %v855 = vunpack.c.l.b16 %v571
        %v856 = vunpack.c.l.b16 %v572
        %v857 = vunpack.c.l.b16 %v573
        %v858 = vunpack.c.l.b16 %v574
        %v859 = vunpack.c.l.b16 %v575
        %v860 = vunpack.c.l.b16 %v576
        %v861 = vunpack.c.l.b16 %v577
        %v862 = vunpack.c.l.b16 %v578
        %v863 = vunpack.c.l.b16 %v579
        %v864 = vunpack.c.l.b16 %v580
        %v865 = vunpack.c.l.b16 %v581
        %v866 = vunpack.c.l.b16 %v582
        %v867 = vunpack.c.l.b16 %v583
        %v868 = vunpack.c.l.b16 %v584
        %v869 = vunpack.c.l.b16 %v585
        %v870 = vunpack.c.l.b16 %v586
        %v871 = vunpack.c.l.b16 %v587
        %v872 = vunpack.c.l.b16 %v588
        %v873 = vpack.c.b16 %v746, %v745
        %v874 = vpack.c.b16 %v748, %v747
        %v875 = vpack.c.b16 %v750, %v749
        %v876 = vpack.c.b16 %v752, %v751
        %v877 = vpack.c.b16 %v754, %v753
        %v878 = vpack.c.b16 %v756, %v755
        %v879 = vpack.c.b16 %v758, %v757
        %v880 = vpack.c.b16 %v760, %v759
        %v881 = vpack.c.b16 %v762, %v761
        %v882 = vpack.c.b16 %v764, %v763
        %v883 = vpack.c.b16 %v766, %v765
        %v884 = vpack.c.b16 %v768, %v767
        %v885 = vpack.c.b16 %v770, %v769
        %v886 = vpack.c.b16 %v772, %v771
        %v887 = vpack.c.b16 %v774, %v773
        %v888 = vpack.c.b16 %v776, %v775
        %v889 = vpack.c.b16 %v778, %v777
        %v890 = vpack.c.b16 %v780, %v779
        %v891 = vpack.c.b16 %v782, %v781
        %v892 = vpack.c.b16 %v784, %v783
        %v893 = vpack.c.b16 %v786, %v785
        %v894 = vpack.c.b16 %v788, %v787
        %v895 = vpack.c.b16 %v790, %v789
        %v896 = vpack.c.b16 %v792, %v791
        %v897 = vpack.c.b16 %v794, %v793
        %v898 = vpack.c.b16 %v796, %v795
        %v899 = vpack.c.b16 %v798, %v797
        %v900 = vpack.c.b16 %v800, %v799
        %v901 = vpack.c.b16 %v802, %v801
        %v902 = vpack.c.b16 %v804, %v803
        %v903 = vpack.c.b16 %v806, %v805
        %v904 = vpack.c.b16 %v808, %v807
        %v905 = vpack.c.b16 %v810, %v809
        %v906 = vpack.c.b16 %v812, %v811
        %v907 = vpack.c.b16 %v814, %v813
        %v908 = vpack.c.b16 %v816, %v815
        %v909 = vpack.c.b16 %v818, %v817
        %v910 = vpack.c.b16 %v820, %v819
        %v911 = vpack.c.b16 %v822, %v821
        %v912 = vpack.c.b16 %v824, %v823
        %v913 = vpack.c.b16 %v826, %v825
        %v914 = vpack.c.b16 %v828, %v827
        %v915 = vpack.c.b16 %v830, %v829
        %v916 = vpack.c.b16 %v832, %v831
        %v917 = vpack.c.b16 %v834, %v833
        %v918 = vpack.c.b16 %v836, %v835
        %v919 = vpack.c.b16 %v838, %v837
        %v920 = vpack.c.b16 %v840, %v839
        %v921 = vpack.c.b16 %v842, %v841
        %v922 = vpack.c.b16 %v844, %v843
        %v923 = vpack.c.b16 %v846, %v845
        %v924 = vpack.c.b16 %v848, %v847
        %v925 = vpack.c.b16 %v850, %v849
        %v926 = vpack.c.b16 %v852, %v851
        %v927 = vpack.c.b16 %v854, %v853
        %v928 = vpack.c.b16 %v856, %v855
        %v929 = vpack.c.b16 %v858, %v857
        %v930 = vpack.c.b16 %v860, %v859
        %v931 = vpack.c.b16 %v862, %v861
        %v932 = vpack.c.b16 %v864, %v863
        %v933 = vpack.c.b16 %v866, %v865
        %v934 = vpack.c.b16 %v868, %v867
        %v935 = vpack.c.b16 %v870, %v869
        %v936 = vpack.c.b16 %v872, %v871
        %1001 = vmatprep.subr.bf16.mxu0 0
        %1002 = vmatpush1.bf16.msra.mxu0 %v873
        %1003 = vmatprep.subr.bf16.mxu0 0
        %1004 = vmatpush1.bf16.msra.mxu0 %v874
        %1005 = vmatprep.subr.bf16.mxu0 0
        %1006 = vmatpush1.bf16.msra.mxu0 %v875
        %1007 = vmatprep.subr.bf16.mxu0 0
        %1008 = vmatpush1.bf16.msra.mxu0 %v876
        %1009 = vmatprep.subr.bf16.mxu0 0
        %1010 = vmatpush1.bf16.msra.mxu0 %v877
        %1011 = vmatprep.subr.bf16.mxu0 0
        %1012 = vmatpush1.bf16.msra.mxu0 %v878
        %1013 = vmatprep.subr.bf16.mxu0 0
        %1014 = vmatpush1.bf16.msra.mxu0 %v879
        %1015 = vmatprep.subr.bf16.mxu0 0
        %1016 = vmatpush1.bf16.msra.mxu0 %v880
        %1017 = vmatprep.subr.bf16.mxu0 0
        %1018 = vmatpush1.bf16.msra.mxu0 %v881
        %1019 = vmatprep.subr.bf16.mxu0 0
        %1020 = vmatpush1.bf16.msra.mxu0 %v882
        %1021 = vmatprep.subr.bf16.mxu0 0
        %1022 = vmatpush1.bf16.msra.mxu0 %v883
        %1023 = vmatprep.subr.bf16.mxu0 0
        %1024 = vmatpush1.bf16.msra.mxu0 %v884
        %1025 = vmatprep.subr.bf16.mxu0 0
        %1026 = vmatpush1.bf16.msra.mxu0 %v885
        %1027 = vmatprep.subr.bf16.mxu0 0
        %1028 = vmatpush1.bf16.msra.mxu0 %v886
        %1029 = vmatprep.subr.bf16.mxu0 0
        %1030 = vmatpush1.bf16.msra.mxu0 %v887
        %1031 = vmatprep.subr.bf16.mxu0 0
        %1032 = vmatpush1.bf16.msra.mxu0 %v888
        %1033 = vmatprep.mubr.bf16.mxu0 %v602
        %1034 = vmatmul.mubr.bf16.gmra.mrb[0].mxu0 %v601
        %v1035 = vpop.f32.mrb[0].mxu0
        %v1036 = vadd.f32 0.0, %v1035
        %v1037 = vpop.f32.mrb[0].mxu0
        %v1038 = vpop.f32.mrb[0].mxu0
        %v1039 = vpop.f32.mrb[0].mxu0
        %1040 = vdwg.mxu0
        %1041 = vmatprep.subr.bf16.mxu0 0
        %1042 = vmatpush1.bf16.msra.mxu0 %v889
        %1043 = vmatprep.subr.bf16.mxu0 0
        %1044 = vmatpush1.bf16.msra.mxu0 %v890
        %1045 = vmatprep.subr.bf16.mxu0 0
        %1046 = vmatpush1.bf16.msra.mxu0 %v891
        %1047 = vmatprep.subr.bf16.mxu0 0
        %1048 = vmatpush1.bf16.msra.mxu0 %v892
        %1049 = vmatprep.subr.bf16.mxu0 0
        %1050 = vmatpush1.bf16.msra.mxu0 %v893
        %1051 = vmatprep.subr.bf16.mxu0 0
        %1052 = vmatpush1.bf16.msra.mxu0 %v894
        %1053 = vmatprep.subr.bf16.mxu0 0
        %1054 = vmatpush1.bf16.msra.mxu0 %v895
        %1055 = vmatprep.subr.bf16.mxu0 0
        %1056 = vmatpush1.bf16.msra.mxu0 %v896
        %1057 = vmatprep.subr.bf16.mxu0 0
        %1058 = vmatpush1.bf16.msra.mxu0 %v897
        %1059 = vmatprep.subr.bf16.mxu0 0
        %1060 = vmatpush1.bf16.msra.mxu0 %v898
        %1061 = vmatprep.subr.bf16.mxu0 0
        %1062 = vmatpush1.bf16.msra.mxu0 %v899
        %1063 = vmatprep.subr.bf16.mxu0 0
        %1064 = vmatpush1.bf16.msra.mxu0 %v900
        %1065 = vmatprep.subr.bf16.mxu0 0
        %1066 = vmatpush1.bf16.msra.mxu0 %v901
        %1067 = vmatprep.subr.bf16.mxu0 0
        %1068 = vmatpush1.bf16.msra.mxu0 %v902
        %1069 = vmatprep.subr.bf16.mxu0 0
        %1070 = vmatpush1.bf16.msra.mxu0 %v903
        %1071 = vmatprep.subr.bf16.mxu0 0
        %1072 = vmatpush1.bf16.msra.mxu0 %v904
        %1073 = vmatprep.mubr.bf16.mxu0 %v604
        %1074 = vmatmul.mubr.bf16.gmra.mrb[0].mxu0 %v603
        %v1075 = vpop.f32.mrb[0].mxu0
        %v1076 = vadd.f32 %v1036, %v1075
        %v1077 = vpop.f32.mrb[0].mxu0
        %v1078 = vpop.f32.mrb[0].mxu0
        %v1079 = vpop.f32.mrb[0].mxu0
        %1080 = vdwg.mxu0
        %1081 = vmatprep.subr.bf16.mxu0 0
        %1082 = vmatpush1.bf16.msra.mxu0 %v905
        %1083 = vmatprep.subr.bf16.mxu0 0
        %1084 = vmatpush1.bf16.msra.mxu0 %v906
        %1085 = vmatprep.subr.bf16.mxu0 0
        %1086 = vmatpush1.bf16.msra.mxu0 %v907
        %1087 = vmatprep.subr.bf16.mxu0 0
        %1088 = vmatpush1.bf16.msra.mxu0 %v908
        %1089 = vmatprep.subr.bf16.mxu0 0
        %1090 = vmatpush1.bf16.msra.mxu0 %v909
        %1091 = vmatprep.subr.bf16.mxu0 0
        %1092 = vmatpush1.bf16.msra.mxu0 %v910
        %1093 = vmatprep.subr.bf16.mxu0 0
        %1094 = vmatpush1.bf16.msra.mxu0 %v911
        %1095 = vmatprep.subr.bf16.mxu0 0
        %1096 = vmatpush1.bf16.msra.mxu0 %v912
        %1097 = vmatprep.subr.bf16.mxu0 0
        %1098 = vmatpush1.bf16.msra.mxu0 %v913
        %1099 = vmatprep.subr.bf16.mxu0 0
        %1100 = vmatpush1.bf16.msra.mxu0 %v914
        %1101 = vmatprep.subr.bf16.mxu0 0
        %1102 = vmatpush1.bf16.msra.mxu0 %v915
        %1103 = vmatprep.subr.bf16.mxu0 0
        %1104 = vmatpush1.bf16.msra.mxu0 %v916
        %1105 = vmatprep.subr.bf16.mxu0 0
        %1106 = vmatpush1.bf16.msra.mxu0 %v917
        %1107 = vmatprep.subr.bf16.mxu0 0
        %1108 = vmatpush1.bf16.msra.mxu0 %v918
        %1109 = vmatprep.subr.bf16.mxu0 0
        %1110 = vmatpush1.bf16.msra.mxu0 %v919
        %1111 = vmatprep.subr.bf16.mxu0 0
        %1112 = vmatpush1.bf16.msra.mxu0 %v920
        %1113 = vmatprep.mubr.bf16.mxu0 %v606
        %1114 = vmatmul.mubr.bf16.gmra.mrb[0].mxu0 %v605
        %v1115 = vpop.f32.mrb[0].mxu0
        %v1116 = vadd.f32 %v1076, %v1115
        %v1117 = vpop.f32.mrb[0].mxu0
        %v1118 = vpop.f32.mrb[0].mxu0
        %v1119 = vpop.f32.mrb[0].mxu0
        %1120 = vdwg.mxu0
        %1121 = vmatprep.subr.bf16.mxu0 0
        %1122 = vmatpush1.bf16.msra.mxu0 %v921
        %1123 = vmatprep.subr.bf16.mxu0 0
        %1124 = vmatpush1.bf16.msra.mxu0 %v922
        %1125 = vmatprep.subr.bf16.mxu0 0
        %1126 = vmatpush1.bf16.msra.mxu0 %v923
        %1127 = vmatprep.subr.bf16.mxu0 0
        %1128 = vmatpush1.bf16.msra.mxu0 %v924
        %1129 = vmatprep.subr.bf16.mxu0 0
        %1130 = vmatpush1.bf16.msra.mxu0 %v925
        %1131 = vmatprep.subr.bf16.mxu0 0
        %1132 = vmatpush1.bf16.msra.mxu0 %v926
        %1133 = vmatprep.subr.bf16.mxu0 0
        %1134 = vmatpush1.bf16.msra.mxu0 %v927
        %1135 = vmatprep.subr.bf16.mxu0 0
        %1136 = vmatpush1.bf16.msra.mxu0 %v928
        %1137 = vmatprep.subr.bf16.mxu0 0
        %1138 = vmatpush1.bf16.msra.mxu0 %v929
        %1139 = vmatprep.subr.bf16.mxu0 0
        %1140 = vmatpush1.bf16.msra.mxu0 %v930
        %1141 = vmatprep.subr.bf16.mxu0 0
        %1142 = vmatpush1.bf16.msra.mxu0 %v931
        %1143 = vmatprep.subr.bf16.mxu0 0
        %1144 = vmatpush1.bf16.msra.mxu0 %v932
        %1145 = vmatprep.subr.bf16.mxu0 0
        %1146 = vmatpush1.bf16.msra.mxu0 %v933
        %1147 = vmatprep.subr.bf16.mxu0 0
        %1148 = vmatpush1.bf16.msra.mxu0 %v934
        %1149 = vmatprep.subr.bf16.mxu0 0
        %1150 = vmatpush1.bf16.msra.mxu0 %v935
        %1151 = vmatprep.subr.bf16.mxu0 0
        %1152 = vmatpush1.bf16.msra.mxu0 %v936
        %1153 = vmatprep.mubr.bf16.mxu0 %v608
        %1154 = vmatmul.mubr.bf16.gmra.mrb[0].mxu0 %v607
        %v1155 = vpop.f32.mrb[0].mxu0
        %v1156 = vadd.f32 %v1116, %v1155
        %v1157 = vpop.f32.mrb[0].mxu0
        %v1158 = vpop.f32.mrb[0].mxu0
        %v1159 = vpop.f32.mrb[0].mxu0
        %1160 = vdwg.mxu0
        %v1161 = vadd.f32 %v456, %v1156
        %1162 = vst [vmem:[%s449] sm:$0xff] %v1161
        // Predicated region
        $region73: #{groupface_forward.4} parent=43 // pred_check
          %p1163 = pneg %p451
        $region74: #{groupface_forward.4} parent=43 // pred_check_branch
          %1165 = sbr.rel (%p1163) target = $region76
        $region75: #{groupface_forward.4} parent=43 // pred_region
          %v1166 = vld [vmem:[%s449] sm:$0xff]
          %v1167 = vld [vmem:[%s375] sm:$0x1]
          %v1169 = vlaneseq
          %v1170 = vshrl.u32 %v1169, 7
          %v1171 = vsub.s32 0, %v1170
          %v1172 = vrot.slane %v1167, %v1171
          %v1174 = vadd.f32 %v1166, %v1172
          %v1175 = vld [vmem:[%s383] sm:$0x1]
          %v1176 = vld [vmem:[%s391] sm:$0x1]
          %s1177 = sld [smem:[#allocation11 + %s30]]
          %v1178 = vrot.slane %v1174, 4
          %v1179 = vadd.f32 %v1174, %v1178
          %v1180 = vrot.slane %v1179, 2
          %v1181 = vadd.f32 %v1179, %v1180
          %v1182 = vrot.slane %v1181, 1
          %v1183 = vadd.f32 %v1181, %v1182
          %v1184 = vrcp.pop 8.0
          %v1185 = vmul.f32 %v1183, %v1184
          %v1186 = vsub.f32 %v1174, %v1185
          %v1187 = vmul.f32 %v1186, %v1186
          %v1188 = vrot.slane %v1187, 4
          %v1189 = vadd.f32 %v1187, %v1188
          %v1190 = vrot.slane %v1189, 2
          %v1191 = vadd.f32 %v1189, %v1190
          %v1192 = vrot.slane %v1191, 1
          %v1193 = vadd.f32 %v1191, %v1192
          %v1194 = vmul.f32 %v1193, %v1184
          %v1195 = vadd.f32 %v1194, 1e-05
          %v1196 = vrsqrt.pop %v1195
          %v1197 = vmul.f32 %v1186, %v1196
          %v1199 = vlaneseq
          %v1200 = vshrl.u32 %v1199, 7
          %v1201 = vsub.s32 0, %v1200
          %v1202 = vrot.slane %v1175, %v1201
          %v1204 = vmul.f32 %v1197, %v1202
          %v1206 = vlaneseq
          %v1207 = vshrl.u32 %v1206, 7
          %v1208 = vsub.s32 0, %v1207
          %v1209 = vrot.slane %v1176, %v1208
          %v1211 = vadd.f32 %v1204, %v1209
          %vm1212 = vcmp.ge.f32.partialorder %v1211, 0.0
          %v1213 = vstv %s1177
          %v1214 = vmul.f32 %v1213, %v1211
          %v1215 = vsel %vm1212, %v1211, %v1214
          %1216 = vst [vmem:[%s449] sm:$0xff] %v1215
        $region76: #{groupface_forward.4} parent=43 // pred_fallthru
          _
        %p1217 = scmp.lt.s32.totalorder %s30, 3
        %s1218 = scalar_select %p1217, %s30, 3
        %p1219 = scmp.lt.s32.totalorder %s31, 1
        %s1220 = scalar_select %p1219, %s31, 1
        %s1221 = smul.addr %s1218, 2
        %s1222 = sadd.s32 %s1220, %s1221
        %s1223 = smul.addr %s1222, 8
        %s1224 = scalar_lea.vmem %s6, %s1223
        // Predicated region
        $region77: #{groupface_forward.4} parent=43 // pred_check
          %p1225 = pneg %p225
        $region78: #{groupface_forward.4} parent=43 // pred_check_branch
          %1227 = sbr.rel (%p1225) target = $region80
        $region79: #{groupface_forward.4} parent=43 // pred_region
          _
        $region80: #{groupface_forward.4} parent=43 // pred_fallthru
          _
      $region44: #{groupface_forward.4} parent=5 // pred_fallthru
        _
      %p1228 = scmp.le.s32.totalorder 2, %s20
      // Predicated region
      $region81: #{groupface_forward.4} parent=5 // pred_check
        %p1229 = pneg %p1228
      $region82: #{groupface_forward.4} parent=5 // pred_check_branch
        %1231 = sbr.rel (%p1229) target = $region84
      $region83: #{groupface_forward.4} parent=5 // pred_region
        %s1232 = ssub.s32 %s20, 2
        // Predicated region
        $region85: #{groupface_forward.4} parent=83 // pred_check
          %p1233 = pneg %p231
        $region86: #{groupface_forward.4} parent=83 // pred_check_branch
          %1235 = sbr.rel (%p1233) target = $region88
        $region87: #{groupface_forward.4} parent=83 // pred_region
          %p1236 = scmp.lt.s32.totalorder %s33, 3
          %s1237 = scalar_select %p1236, %s33, 3
          %p1238 = scmp.lt.s32.totalorder %s34, 1
          %s1239 = scalar_select %p1238, %s34, 1
          %s1240 = smul.addr %s1237, 2
          %s1241 = sadd.s32 %s1239, %s1240
          %s1242 = smul.addr %s1241, 8
          %s1243 = scalar_lea.vmem %s6, %s1242
        $region88: #{groupface_forward.4} parent=83 // pred_fallthru
          _
      $region84: #{groupface_forward.4} parent=5 // pred_fallthru
        _
    $region6: #{groupface_forward.4} parent=1 // loop_footer
      %s24 = sadd.s32 1, %s20
    $region7: #{groupface_forward.4} parent=1 // loop_footer_branch
      %19 = sbr.rel target = $region3
    $region8: #{groupface_forward.4} parent=1 // loop_exit
      _
    %1244 = vsyncpa [#allocation3], 1
    %s1245 = scalar_lea.sflag [#allocation3], 1
    %1246 = vsyncpa %s1245, 1
    %1247 = vsyncpa [#allocation6], 1
    %s1248 = scalar_lea.sflag [#allocation6], 1
    %1249 = vsyncpa %s1248, 1
    %1250 = vsyncpa [#allocation9], 1
    %s1251 = scalar_lea.sflag [#allocation9], 1
    %1252 = vsyncpa %s1251, 1
    %1253 = vsyncpa [#allocation4], 1
    %s1254 = scalar_lea.sflag [#allocation4], 1
    %1255 = vsyncpa %s1254, 1

</llo_original>
